<compile_context>
chip_gen: v5e
topology: v5e:2x2
jax: 0.10.0
libtpu: 0.0.40
codegen_flags: <defaults>
</compile_context>

<pallas_src>
import functools

import numpy as np
import jax
import jax.numpy as jnp
from jax import lax
from jax.experimental import pallas as pl
from jax.experimental.pallas import tpu as pltpu


# ----------------------------------------------------------------------------
# Static helpers — run once at parameter-construction time, never per forward.
# ----------------------------------------------------------------------------
def _conv_out(n, k, s, p, d=1):
    return (n + 2 * p - d * (k - 1) - 1) // s + 1


def _round_up(x, m):
    return ((x + m - 1) // m) * m


def _build_gather(in_dims, kernel, stride, padding, dilation):
    """0/1 gather matrices: G[tap, o, i] == 1 iff output spatial index o reads
    input spatial index i for kernel tap `tap` (zero rows encode zero padding).
    Spatial indices are flattened row-major over (D, H, W) — identical to the
    NCDHW memory order used by PyTorch."""
    D, H, W = in_dims
    kd, kh, kw = kernel
    sd, sh, sw = stride
    pd, ph, pw = padding
    dd, dh, dw = dilation
    Do = _conv_out(D, kd, sd, pd, dd)
    Ho = _conv_out(H, kh, sh, ph, dh)
    Wo = _conv_out(W, kw, sw, pw, dw)
    G = np.zeros((kd * kh * kw, Do * Ho * Wo, D * H * W), np.float32)
    t = 0
    for dz in range(kd):
        for dy in range(kh):
            for dx in range(kw):
                for do in range(Do):
                    di = do * sd + dz * dd - pd
                    if not (0 <= di < D):
                        continue
                    for ho in range(Ho):
                        hi = ho * sh + dy * dh - ph
                        if not (0 <= hi < H):
                            continue
                        for wo in range(Wo):
                            wi = wo * sw + dx * dw - pw
                            if not (0 <= wi < W):
                                continue
                            o = (do * Ho + ho) * Wo + wo
                            i = (di * H + hi) * W + wi
                            G[t, o, i] = 1.0
                t += 1
    return G, (Do, Ho, Wo)


def _kaiming(key, shape, fan_in):
    return jax.random.normal(key, shape, dtype=jnp.float32) * jnp.sqrt(2.0 / fan_in)


def make_params(input_channels, n_classes, patch_size=5, dilation=1, seed=0):
    """Builds the per-layer FOLDED dense matrices (gather + per-tap weights collapsed
    into one bf16 matrix per layer), f32 bias rows, and the raw f32 weights
    (PyTorch layout) for a pure-XLA reference."""
    key = jax.random.PRNGKey(seed)
    keys = jax.random.split(key, 7)
    dil = (dilation, 1, 1)
    conv1_pad = (1, 1, 1) if patch_size == 3 else (0, 0, 0)

    conv_cfg = [
        # (cin, cout, kernel,    stride,     padding,   relu)
        (1,  20, (3, 3, 3), (1, 1, 1), conv1_pad, True),   # conv1
        (20, 20, (3, 1, 1), (2, 1, 1), (1, 0, 0), False),  # pool1
        (20, 35, (3, 3, 3), (1, 1, 1), (1, 0, 0), True),   # conv2
        (35, 35, (3, 1, 1), (2, 1, 1), (1, 0, 0), False),  # pool2
        (35, 35, (3, 1, 1), (1, 1, 1), (1, 0, 0), True),   # conv3
        (35, 35, (2, 1, 1), (2, 1, 1), (1, 0, 0), True),   # conv4
    ]

    params = {}
    ref_convs = []
    relus = []
    dims = (input_channels, patch_size, patch_size)
    s_in0 = int(np.prod(dims))
    flops = 0
    for li, (cin, cout, kern, stride, pad, relu) in enumerate(conv_cfg):
        kd, kh, kw = kern
        ntaps = kd * kh * kw
        fan_in = cin * ntaps
        w = _kaiming(keys[li], (cout, cin, kd, kh, kw), fan_in)   # PyTorch OIDHW layout
        b = jnp.zeros((cout,), jnp.float32)
        ref_convs.append((w, b, stride, pad, relu))

        # Per-tap weight stack (f32): W_taps[t] = weight[:, :, dz, dy, dx].T -> (cin, cout)
        w_taps = np.transpose(np.asarray(w), (2, 3, 4, 1, 0)).reshape(ntaps, cin, cout)
        G, dims = _build_gather(dims, kern, stride, pad, dil)
        s_out, s_in = G.shape[1], G.shape[2]
        # Fold gather + weights into one dense matrix (exact in f32: each (i,o) pair
        # is touched by at most one tap).  Layout: rows (i,ci), cols (o,co).
        folded = np.einsum("toi,tcn->icon", G, w_taps).reshape(s_in * cin, s_out * cout)
        bias_row = np.tile(np.asarray(b), s_out).reshape(1, s_out * cout)
        params[f"w{li}"] = jnp.asarray(folded, jnp.bfloat16)
        params[f"b{li}"] = jnp.asarray(bias_row, jnp.float32)
        relus.append(relu)
        flops += 2 * (s_in * cin) * (s_out * cout)

    # Fully-connected layer, folded into the same uniform matmul chain.
    # Conv output layout in-kernel is spatial-major: index = s * C_fin + c.
    # PyTorch's .view(-1, features) flattens NCDHW channel-major: feature = c*S_fin + s.
    s_fin = int(np.prod(dims))
    c_fin = conv_cfg[-1][1]
    features_size = c_fin * s_fin
    wfc = _kaiming(keys[6], (n_classes, features_size), features_size)
    bfc = jnp.zeros((n_classes,), jnp.float32)
    wfc_fold = np.transpose(
        np.asarray(wfc).reshape(n_classes, c_fin, s_fin), (2, 1, 0)
    ).reshape(features_size, n_classes)
    n_out_pad = _round_up(n_classes, 128)          # lane-dense output store
    wfc_pad = np.zeros((features_size, n_out_pad), np.float32)
    wfc_pad[:, :n_classes] = wfc_fold
    bfc_pad = np.zeros((1, n_out_pad), np.float32)
    bfc_pad[0, :n_classes] = np.asarray(bfc)
    params["w6"] = jnp.asarray(wfc_pad, jnp.bfloat16)
    params["b6"] = jnp.asarray(bfc_pad, jnp.float32)
    relus.append(False)
    flops += 2 * features_size * n_out_pad

    param_bytes = sum(int(np.prod(v.shape)) * v.dtype.itemsize for v in params.values())
    config = {
        "relus": tuple(relus),
        "s_in0": s_in0,
        "n_classes": n_classes,
        "n_out_pad": n_out_pad,
        "features_size": features_size,
        "flops_per_sample": int(flops),
        "param_bytes": int(param_bytes),
    }
    ref_weights = {"convs": ref_convs, "fc_w": wfc, "fc_b": bfc, "dilation": dilation}
    return params, ref_weights, config


# ----------------------------------------------------------------------------
# The fused Pallas kernel: whole forward pass for ONE batch tile per grid step.
# refs = (x_ref, w0, b0, w1, b1, ..., w6, b6, out_ref).
# ----------------------------------------------------------------------------
def _hamida_fused_kernel(*refs, relus):
    x_ref, out_ref = refs[0], refs[-1]
    a = x_ref[...]                                  # (Bt, s_in0) bf16, lane-dense
    z = None
    for li, relu in enumerate(relus):
        w_ref = refs[1 + 2 * li]                    # (N_in, N_out)  bf16, resident
        b_ref = refs[2 + 2 * li]                    # (1,    N_out)  f32
        z = jnp.dot(a, w_ref[...], preferred_element_type=jnp.float32)
        z = z + b_ref[...]                          # f32 bias, broadcasts over rows
        if relu:
            z = jnp.maximum(z, 0.0)                 # f32 VPU work only
        a = z.astype(jnp.bfloat16)                  # feeds the next layer's matmul
    out_ref[...] = z                                # (Bt, n_out_pad) f32, unmasked vst


# ----------------------------------------------------------------------------
# Forward pass (mirrors HamidaEtAl.forward) — single pallas_call.
# ----------------------------------------------------------------------------
def hamida_forward(params, x, config, block_b=128):
    """x: (B, 1, input_channels, patch, patch) f32 -> logits (B, n_classes) f32."""
    B = x.shape[0]
    relus = config["relus"]
    s_in0 = config["s_in0"]
    n_classes = config["n_classes"]
    n_out_pad = config["n_out_pad"]

    # Lane-dense (B, s_in0) layout; pad batch to a multiple of the batch tile.
    bt = min(block_b, _round_up(max(B, 1), 8))
    b_pad = _round_up(B, bt)
    x2 = x.reshape(B, s_in0)
    if b_pad != B:
        x2 = jnp.pad(x2, ((0, b_pad - B), (0, 0)))
    x2 = x2.astype(jnp.bfloat16)

    inputs = [x2]
    in_specs = [pl.BlockSpec((bt, s_in0), lambda b: (b, 0))]
    for li in range(len(relus)):
        w = params[f"w{li}"]
        bias = params[f"b{li}"]
        inputs += [w, bias]
        in_specs += [
            pl.BlockSpec(w.shape, lambda b: (0, 0)),     # constant -> VMEM resident
            pl.BlockSpec(bias.shape, lambda b: (0, 0)),
        ]

    kernel = functools.partial(_hamida_fused_kernel, relus=relus)
    bytes_accessed = int(x2.size * 2 + config["param_bytes"] + b_pad * n_out_pad * 4)

    out = pl.pallas_call(
        kernel,
        out_shape=jax.ShapeDtypeStruct((b_pad, n_out_pad), jnp.float32),
        grid=(b_pad // bt,),
        in_specs=in_specs,
        out_specs=pl.BlockSpec((bt, n_out_pad), lambda b: (b, 0)),
        compiler_params=pltpu.CompilerParams(
            dimension_semantics=("parallel",),            # megacore sharding on v7x
            vmem_limit_bytes=32 * 1024 * 1024),           # ~2 MB resident + tiles: huge headroom
        cost_estimate=pl.CostEstimate(
            flops=config["flops_per_sample"] * b_pad,
            transcendentals=0,
            bytes_accessed=bytes_accessed),
    )(*inputs)
    return out[:B, :n_classes]


# ----------------------------------------------------------------------------
# Pure-XLA f32 reference (for an in-script correctness self-check).
# ----------------------------------------------------------------------------
def _reference_forward(ref_w, x):
    dn = ("NCDHW", "OIDHW", "NCDHW")
    rhs_dil = (ref_w["dilation"], 1, 1)
    act = x
    for w, b, stride, pad, relu in ref_w["convs"]:
        act = lax.conv_general_dilated(
            act, w, window_strides=stride,
            padding=[(p, p) for p in pad],
            rhs_dilation=rhs_dil, dimension_numbers=dn)
        act = act + b.reshape(1, -1, 1, 1, 1)
        if relu:
            act = jnp.maximum(act, 0.0)
    flat = act.reshape(act.shape[0], -1)                 # NCDHW flatten == torch .view
    return flat @ ref_w["fc_w"].T + ref_w["fc_b"]


# ----------------------------------------------------------------------------
if __name__ == "__main__":
    BATCH = 2
    INPUT_CHANNELS = 8     # spectral bands
    PATCH_SIZE = 5
    N_CLASSES = 10

    params, ref_weights, config = make_params(INPUT_CHANNELS, N_CLASSES, PATCH_SIZE, seed=0)

    key = jax.random.PRNGKey(0)
    # PyTorch input layout: (B, 1, input_channels, patch, patch)
    x = jax.random.normal(
        key, (BATCH, 1, INPUT_CHANNELS, PATCH_SIZE, PATCH_SIZE), dtype=jnp.float32)

    fwd = jax.jit(functools.partial(hamida_forward, config=config))
    out = jax.block_until_ready(fwd(params, x))

    assert out.shape == (BATCH, N_CLASSES), out.shape
    assert out.dtype == jnp.float32

    # Self-check against the pure-XLA f32 reference (loose tolerance: the kernel
    # feeds the MXU with bf16 operands; accumulation / bias / ReLU are f32).
    ref = _reference_forward(ref_weights, x)
    rel_err = float(jnp.max(jnp.abs(out - ref)) / jnp.maximum(jnp.max(jnp.abs(ref)), 1.0))
    assert rel_err < 0.15, f"mismatch vs reference: rel_err={rel_err}"

    print("KERNEL_OK")
</pallas_src>

<mosaic_0001>
module attributes {stable_mosaic.version = 11 : i64} {
  func.func @_hamida_fused_kernel(%arg0: i32, %arg1: memref<8x200xbf16, #tpu.memory_space<vmem>>, %arg2: memref<200x1080xbf16, #tpu.memory_space<vmem>>, %arg3: memref<1x1080xf32, #tpu.memory_space<vmem>>, %arg4: memref<1080x540xbf16, #tpu.memory_space<vmem>>, %arg5: memref<1x540xf32, #tpu.memory_space<vmem>>, %arg6: memref<540x105xbf16, #tpu.memory_space<vmem>>, %arg7: memref<1x105xf32, #tpu.memory_space<vmem>>, %arg8: memref<105x70xbf16, #tpu.memory_space<vmem>>, %arg9: memref<1x70xf32, #tpu.memory_space<vmem>>, %arg10: memref<70x70xbf16, #tpu.memory_space<vmem>>, %arg11: memref<1x70xf32, #tpu.memory_space<vmem>>, %arg12: memref<70x70xbf16, #tpu.memory_space<vmem>>, %arg13: memref<1x70xf32, #tpu.memory_space<vmem>>, %arg14: memref<70x128xbf16, #tpu.memory_space<vmem>>, %arg15: memref<1x128xf32, #tpu.memory_space<vmem>>, %arg16: memref<8x128xf32, #tpu.memory_space<vmem>>) attributes {dimension_semantics = [#tpu.dimension_semantics<parallel>], iteration_bounds = array<i64: 1>, scalar_prefetch = 0 : i64, scratch_operands = 0 : i64, tpu.core_type = #tpu.core_type<tc>, window_params = [{transform_indices = @transform_0, window_bounds = array<i64: 8, 200>}, {pipeline_mode = #tpu.pipeline_mode<synchronous>, transform_indices = @transform_1, window_bounds = array<i64: 200, 1080>}, {pipeline_mode = #tpu.pipeline_mode<synchronous>, transform_indices = @transform_2, window_bounds = array<i64: 1, 1080>}, {pipeline_mode = #tpu.pipeline_mode<synchronous>, transform_indices = @transform_3, window_bounds = array<i64: 1080, 540>}, {pipeline_mode = #tpu.pipeline_mode<synchronous>, transform_indices = @transform_4, window_bounds = array<i64: 1, 540>}, {pipeline_mode = #tpu.pipeline_mode<synchronous>, transform_indices = @transform_5, window_bounds = array<i64: 540, 105>}, {pipeline_mode = #tpu.pipeline_mode<synchronous>, transform_indices = @transform_6, window_bounds = array<i64: 1, 105>}, {pipeline_mode = #tpu.pipeline_mode<synchronous>, transform_indices = @transform_7, window_bounds = array<i64: 105, 70>}, {pipeline_mode = #tpu.pipeline_mode<synchronous>, transform_indices = @transform_8, window_bounds = array<i64: 1, 70>}, {pipeline_mode = #tpu.pipeline_mode<synchronous>, transform_indices = @transform_9, window_bounds = array<i64: 70, 70>}, {pipeline_mode = #tpu.pipeline_mode<synchronous>, transform_indices = @transform_10, window_bounds = array<i64: 1, 70>}, {pipeline_mode = #tpu.pipeline_mode<synchronous>, transform_indices = @transform_11, window_bounds = array<i64: 70, 70>}, {pipeline_mode = #tpu.pipeline_mode<synchronous>, transform_indices = @transform_12, window_bounds = array<i64: 1, 70>}, {pipeline_mode = #tpu.pipeline_mode<synchronous>, transform_indices = @transform_13, window_bounds = array<i64: 70, 128>}, {pipeline_mode = #tpu.pipeline_mode<synchronous>, transform_indices = @transform_14, window_bounds = array<i64: 1, 128>}, {transform_indices = @transform_15, window_bounds = array<i64: 8, 128>}]} {
    %c0 = arith.constant 0 : index
    %c0_0 = arith.constant 0 : index
    %0 = vector.load %arg1[%c0, %c0_0] : memref<8x200xbf16, #tpu.memory_space<vmem>>, vector<8x200xbf16>
    %c0_1 = arith.constant 0 : index
    %c0_2 = arith.constant 0 : index
    %1 = vector.load %arg2[%c0_1, %c0_2] : memref<200x1080xbf16, #tpu.memory_space<vmem>>, vector<200x1080xbf16>
    %cst = arith.constant dense<0.000000e+00> : vector<8x1080xf32>
    %2 = tpu.matmul %0, %1, %cst {dimension_numbers = #tpu.dot_dimension_numbers<[1], [0], [0], [1], [0, 0, 1, 1], [], []>} : vector<8x200xbf16>, vector<200x1080xbf16>, vector<8x1080xf32> -> vector<8x1080xf32>
    %c0_3 = arith.constant 0 : index
    %c0_4 = arith.constant 0 : index
    %3 = vector.load %arg3[%c0_3, %c0_4] : memref<1x1080xf32, #tpu.memory_space<vmem>>, vector<1x1080xf32>
    %4 = vector.broadcast %3 : vector<1x1080xf32> to vector<8x1080xf32>
    %5 = arith.addf %2, %4 : vector<8x1080xf32>
    %cst_5 = arith.constant 0.000000e+00 : f32
    %6 = vector.broadcast %cst_5 : f32 to vector<8x1080xf32>
    %7 = arith.maximumf %5, %6 : vector<8x1080xf32>
    %8 = arith.truncf %7 : vector<8x1080xf32> to vector<8x1080xbf16>
    %c0_6 = arith.constant 0 : index
    %c0_7 = arith.constant 0 : index
    %9 = vector.load %arg4[%c0_6, %c0_7] : memref<1080x540xbf16, #tpu.memory_space<vmem>>, vector<1080x540xbf16>
    %cst_8 = arith.constant dense<0.000000e+00> : vector<8x540xf32>
    %10 = tpu.matmul %8, %9, %cst_8 {dimension_numbers = #tpu.dot_dimension_numbers<[1], [0], [0], [1], [0, 0, 1, 1], [], []>} : vector<8x1080xbf16>, vector<1080x540xbf16>, vector<8x540xf32> -> vector<8x540xf32>
    %c0_9 = arith.constant 0 : index
    %c0_10 = arith.constant 0 : index
    %11 = vector.load %arg5[%c0_9, %c0_10] : memref<1x540xf32, #tpu.memory_space<vmem>>, vector<1x540xf32>
    %12 = vector.broadcast %11 : vector<1x540xf32> to vector<8x540xf32>
    %13 = arith.addf %10, %12 : vector<8x540xf32>
    %14 = arith.truncf %13 : vector<8x540xf32> to vector<8x540xbf16>
    %c0_11 = arith.constant 0 : index
    %c0_12 = arith.constant 0 : index
    %15 = vector.load %arg6[%c0_11, %c0_12] : memref<540x105xbf16, #tpu.memory_space<vmem>>, vector<540x105xbf16>
    %cst_13 = arith.constant dense<0.000000e+00> : vector<8x105xf32>
    %16 = tpu.matmul %14, %15, %cst_13 {dimension_numbers = #tpu.dot_dimension_numbers<[1], [0], [0], [1], [0, 0, 1, 1], [], []>} : vector<8x540xbf16>, vector<540x105xbf16>, vector<8x105xf32> -> vector<8x105xf32>
    %c0_14 = arith.constant 0 : index
    %c0_15 = arith.constant 0 : index
    %17 = vector.load %arg7[%c0_14, %c0_15] : memref<1x105xf32, #tpu.memory_space<vmem>>, vector<1x105xf32>
    %18 = vector.broadcast %17 : vector<1x105xf32> to vector<8x105xf32>
    %19 = arith.addf %16, %18 : vector<8x105xf32>
    %cst_16 = arith.constant 0.000000e+00 : f32
    %20 = vector.broadcast %cst_16 : f32 to vector<8x105xf32>
    %21 = arith.maximumf %19, %20 : vector<8x105xf32>
    %22 = arith.truncf %21 : vector<8x105xf32> to vector<8x105xbf16>
    %c0_17 = arith.constant 0 : index
    %c0_18 = arith.constant 0 : index
    %23 = vector.load %arg8[%c0_17, %c0_18] : memref<105x70xbf16, #tpu.memory_space<vmem>>, vector<105x70xbf16>
    %cst_19 = arith.constant dense<0.000000e+00> : vector<8x70xf32>
    %24 = tpu.matmul %22, %23, %cst_19 {dimension_numbers = #tpu.dot_dimension_numbers<[1], [0], [0], [1], [0, 0, 1, 1], [], []>} : vector<8x105xbf16>, vector<105x70xbf16>, vector<8x70xf32> -> vector<8x70xf32>
    %c0_20 = arith.constant 0 : index
    %c0_21 = arith.constant 0 : index
    %25 = vector.load %arg9[%c0_20, %c0_21] : memref<1x70xf32, #tpu.memory_space<vmem>>, vector<1x70xf32>
    %26 = vector.broadcast %25 : vector<1x70xf32> to vector<8x70xf32>
    %27 = arith.addf %24, %26 : vector<8x70xf32>
    %28 = arith.truncf %27 : vector<8x70xf32> to vector<8x70xbf16>
    %c0_22 = arith.constant 0 : index
    %c0_23 = arith.constant 0 : index
    %29 = vector.load %arg10[%c0_22, %c0_23] : memref<70x70xbf16, #tpu.memory_space<vmem>>, vector<70x70xbf16>
    %cst_24 = arith.constant dense<0.000000e+00> : vector<8x70xf32>
    %30 = tpu.matmul %28, %29, %cst_24 {dimension_numbers = #tpu.dot_dimension_numbers<[1], [0], [0], [1], [0, 0, 1, 1], [], []>} : vector<8x70xbf16>, vector<70x70xbf16>, vector<8x70xf32> -> vector<8x70xf32>
    %c0_25 = arith.constant 0 : index
    %c0_26 = arith.constant 0 : index
    %31 = vector.load %arg11[%c0_25, %c0_26] : memref<1x70xf32, #tpu.memory_space<vmem>>, vector<1x70xf32>
    %32 = vector.broadcast %31 : vector<1x70xf32> to vector<8x70xf32>
    %33 = arith.addf %30, %32 : vector<8x70xf32>
    %cst_27 = arith.constant 0.000000e+00 : f32
    %34 = vector.broadcast %cst_27 : f32 to vector<8x70xf32>
    %35 = arith.maximumf %33, %34 : vector<8x70xf32>
    %36 = arith.truncf %35 : vector<8x70xf32> to vector<8x70xbf16>
    %c0_28 = arith.constant 0 : index
    %c0_29 = arith.constant 0 : index
    %37 = vector.load %arg12[%c0_28, %c0_29] : memref<70x70xbf16, #tpu.memory_space<vmem>>, vector<70x70xbf16>
    %cst_30 = arith.constant dense<0.000000e+00> : vector<8x70xf32>
    %38 = tpu.matmul %36, %37, %cst_30 {dimension_numbers = #tpu.dot_dimension_numbers<[1], [0], [0], [1], [0, 0, 1, 1], [], []>} : vector<8x70xbf16>, vector<70x70xbf16>, vector<8x70xf32> -> vector<8x70xf32>
    %c0_31 = arith.constant 0 : index
    %c0_32 = arith.constant 0 : index
    %39 = vector.load %arg13[%c0_31, %c0_32] : memref<1x70xf32, #tpu.memory_space<vmem>>, vector<1x70xf32>
    %40 = vector.broadcast %39 : vector<1x70xf32> to vector<8x70xf32>
    %41 = arith.addf %38, %40 : vector<8x70xf32>
    %cst_33 = arith.constant 0.000000e+00 : f32
    %42 = vector.broadcast %cst_33 : f32 to vector<8x70xf32>
    %43 = arith.maximumf %41, %42 : vector<8x70xf32>
    %44 = arith.truncf %43 : vector<8x70xf32> to vector<8x70xbf16>
    %c0_34 = arith.constant 0 : index
    %c0_35 = arith.constant 0 : index
    %45 = vector.load %arg14[%c0_34, %c0_35] : memref<70x128xbf16, #tpu.memory_space<vmem>>, vector<70x128xbf16>
    %cst_36 = arith.constant dense<0.000000e+00> : vector<8x128xf32>
    %46 = tpu.matmul %44, %45, %cst_36 {dimension_numbers = #tpu.dot_dimension_numbers<[1], [0], [0], [1], [0, 0, 1, 1], [], []>} : vector<8x70xbf16>, vector<70x128xbf16>, vector<8x128xf32> -> vector<8x128xf32>
    %c0_37 = arith.constant 0 : index
    %c0_38 = arith.constant 0 : index
    %47 = vector.load %arg15[%c0_37, %c0_38] : memref<1x128xf32, #tpu.memory_space<vmem>>, vector<1x128xf32>
    %48 = vector.broadcast %47 : vector<1x128xf32> to vector<8x128xf32>
    %49 = arith.addf %46, %48 : vector<8x128xf32>
    %c0_39 = arith.constant 0 : index
    %c0_40 = arith.constant 0 : index
    %50 = vector.load %arg16[%c0_39, %c0_40] : memref<8x128xf32, #tpu.memory_space<vmem>>, vector<8x128xf32>
    tpu.vector_store %arg16[%c0_39, %c0_40], %49 {strides = array<i32>} : memref<8x128xf32, #tpu.memory_space<vmem>>, vector<8x128xf32>,
    return
  }
  func.func @transform_0(%arg0: i32) -> (i32, i32) {
    %c0_i32 = arith.constant 0 : i32
    %c0_i32_0 = arith.constant 0 : i32
    return %arg0, %c0_i32 : i32, i32
  }
  func.func @transform_1(%arg0: i32) -> (i32, i32) {
    %c0_i32 = arith.constant 0 : i32
    %c0_i32_0 = arith.constant 0 : i32
    %c0_i32_1 = arith.constant 0 : i32
    return %c0_i32, %c0_i32_0 : i32, i32
  }
  func.func @transform_2(%arg0: i32) -> (i32, i32) {
    %c0_i32 = arith.constant 0 : i32
    %c0_i32_0 = arith.constant 0 : i32
    %c0_i32_1 = arith.constant 0 : i32
    return %c0_i32, %c0_i32_0 : i32, i32
  }
  func.func @transform_3(%arg0: i32) -> (i32, i32) {
    %c0_i32 = arith.constant 0 : i32
    %c0_i32_0 = arith.constant 0 : i32
    %c0_i32_1 = arith.constant 0 : i32
    return %c0_i32, %c0_i32_0 : i32, i32
  }
  func.func @transform_4(%arg0: i32) -> (i32, i32) {
    %c0_i32 = arith.constant 0 : i32
    %c0_i32_0 = arith.constant 0 : i32
    %c0_i32_1 = arith.constant 0 : i32
    return %c0_i32, %c0_i32_0 : i32, i32
  }
  func.func @transform_5(%arg0: i32) -> (i32, i32) {
    %c0_i32 = arith.constant 0 : i32
    %c0_i32_0 = arith.constant 0 : i32
    %c0_i32_1 = arith.constant 0 : i32
    return %c0_i32, %c0_i32_0 : i32, i32
  }
  func.func @transform_6(%arg0: i32) -> (i32, i32) {
    %c0_i32 = arith.constant 0 : i32
    %c0_i32_0 = arith.constant 0 : i32
    %c0_i32_1 = arith.constant 0 : i32
    return %c0_i32, %c0_i32_0 : i32, i32
  }
  func.func @transform_7(%arg0: i32) -> (i32, i32) {
    %c0_i32 = arith.constant 0 : i32
    %c0_i32_0 = arith.constant 0 : i32
    %c0_i32_1 = arith.constant 0 : i32
    return %c0_i32, %c0_i32_0 : i32, i32
  }
  func.func @transform_8(%arg0: i32) -> (i32, i32) {
    %c0_i32 = arith.constant 0 : i32
    %c0_i32_0 = arith.constant 0 : i32
    %c0_i32_1 = arith.constant 0 : i32
    return %c0_i32, %c0_i32_0 : i32, i32
  }
  func.func @transform_9(%arg0: i32) -> (i32, i32) {
    %c0_i32 = arith.constant 0 : i32
    %c0_i32_0 = arith.constant 0 : i32
    %c0_i32_1 = arith.constant 0 : i32
    return %c0_i32, %c0_i32_0 : i32, i32
  }
  func.func @transform_10(%arg0: i32) -> (i32, i32) {
    %c0_i32 = arith.constant 0 : i32
    %c0_i32_0 = arith.constant 0 : i32
    %c0_i32_1 = arith.constant 0 : i32
    return %c0_i32, %c0_i32_0 : i32, i32
  }
  func.func @transform_11(%arg0: i32) -> (i32, i32) {
    %c0_i32 = arith.constant 0 : i32
    %c0_i32_0 = arith.constant 0 : i32
    %c0_i32_1 = arith.constant 0 : i32
    return %c0_i32, %c0_i32_0 : i32, i32
  }
  func.func @transform_12(%arg0: i32) -> (i32, i32) {
    %c0_i32 = arith.constant 0 : i32
    %c0_i32_0 = arith.constant 0 : i32
    %c0_i32_1 = arith.constant 0 : i32
    return %c0_i32, %c0_i32_0 : i32, i32
  }
  func.func @transform_13(%arg0: i32) -> (i32, i32) {
    %c0_i32 = arith.constant 0 : i32
    %c0_i32_0 = arith.constant 0 : i32
    %c0_i32_1 = arith.constant 0 : i32
    return %c0_i32, %c0_i32_0 : i32, i32
  }
  func.func @transform_14(%arg0: i32) -> (i32, i32) {
    %c0_i32 = arith.constant 0 : i32
    %c0_i32_0 = arith.constant 0 : i32
    %c0_i32_1 = arith.constant 0 : i32
    return %c0_i32, %c0_i32_0 : i32, i32
  }
  func.func @transform_15(%arg0: i32) -> (i32, i32) {
    %c0_i32 = arith.constant 0 : i32
    %c0_i32_0 = arith.constant 0 : i32
    return %arg0, %c0_i32 : i32, i32
  }
}

</mosaic_0001>

<llo_original>
// kernel: hamida_forward.1
$region0: #{hamida_forward.1}
  #allocation0 [shape = 'u32[]', space=smem, size = 0x4, offset = 0x4, fixed_abs, tag = 'smem constant byte address 0x4 - core index']
  #allocation1 [shape = 'u32[72,128]{1,0:T(1,128)}', space=vmem, size = 0x9000, scoped, tag = 'internal scratch']
  %s0 = inlined_call_operand.vmem [shape: bf16[8,200], index: 0, kind: input, shape index: {}]
  %s1 = inlined_call_operand.vmem [shape: bf16[200,1080], index: 1, kind: input, shape index: {}]
  %s2 = inlined_call_operand.vmem [shape: f32[1,1080], index: 2, kind: input, shape index: {}]
  %s3 = inlined_call_operand.vmem [shape: bf16[1080,540], index: 3, kind: input, shape index: {}]
  %s4 = inlined_call_operand.vmem [shape: f32[1,540], index: 4, kind: input, shape index: {}]
  %s5 = inlined_call_operand.vmem [shape: bf16[540,105], index: 5, kind: input, shape index: {}]
  %s6 = inlined_call_operand.vmem [shape: f32[1,105], index: 6, kind: input, shape index: {}]
  %s7 = inlined_call_operand.vmem [shape: bf16[105,70], index: 7, kind: input, shape index: {}]
  %s8 = inlined_call_operand.vmem [shape: f32[1,70], index: 8, kind: input, shape index: {}]
  %s9 = inlined_call_operand.vmem [shape: bf16[70,70], index: 9, kind: input, shape index: {}]
  %s10 = inlined_call_operand.vmem [shape: f32[1,70], index: 10, kind: input, shape index: {}]
  %s11 = inlined_call_operand.vmem [shape: bf16[70,70], index: 11, kind: input, shape index: {}]
  %s12 = inlined_call_operand.vmem [shape: f32[1,70], index: 12, kind: input, shape index: {}]
  %s13 = inlined_call_operand.vmem [shape: bf16[70,128], index: 13, kind: input, shape index: {}]
  %s14 = inlined_call_operand.vmem [shape: f32[1,128], index: 14, kind: input, shape index: {}]
  %s15 = inlined_call_operand.vmem [shape: f32[8,128], index: 15, kind: output, shape index: {}]
  %s16 = sld [smem:[#allocation0]]
  $region70: #{hamida_forward.1} parent=0
    _
  %s18 = ssub.s32 1, %s16
  %s19 = scalar_select 0, %s18, %s16
  // Predicated region
  $region2: #{hamida_forward.1} parent=0 // pred_check
    _
  $region3: #{hamida_forward.1} parent=0 // pred_check_branch
    %21 = sbr.rel (0) target = $region5
  $region4: #{hamida_forward.1} parent=0 // pred_region
    _
  $region5: #{hamida_forward.1} parent=0 // pred_fallthru
    _
  // Predicated region
  $region6: #{hamida_forward.1} parent=0 // pred_check
    _
  $region7: #{hamida_forward.1} parent=0 // pred_check_branch
    %23 = sbr.rel (0) target = $region9
  $region8: #{hamida_forward.1} parent=0 // pred_region
    _
  $region9: #{hamida_forward.1} parent=0 // pred_fallthru
    _
  // Predicated region
  $region10: #{hamida_forward.1} parent=0 // pred_check
    _
  $region11: #{hamida_forward.1} parent=0 // pred_check_branch
    %25 = sbr.rel (0) target = $region13
  $region12: #{hamida_forward.1} parent=0 // pred_region
    _
  $region13: #{hamida_forward.1} parent=0 // pred_fallthru
    _
  // Predicated region
  $region14: #{hamida_forward.1} parent=0 // pred_check
    _
  $region15: #{hamida_forward.1} parent=0 // pred_check_branch
    %27 = sbr.rel (0) target = $region17
  $region16: #{hamida_forward.1} parent=0 // pred_region
    _
  $region17: #{hamida_forward.1} parent=0 // pred_fallthru
    _
  // Predicated region
  $region18: #{hamida_forward.1} parent=0 // pred_check
    _
  $region19: #{hamida_forward.1} parent=0 // pred_check_branch
    %29 = sbr.rel (0) target = $region21
  $region20: #{hamida_forward.1} parent=0 // pred_region
    _
  $region21: #{hamida_forward.1} parent=0 // pred_fallthru
    _
  // Predicated region
  $region22: #{hamida_forward.1} parent=0 // pred_check
    _
  $region23: #{hamida_forward.1} parent=0 // pred_check_branch
    %31 = sbr.rel (0) target = $region25
  $region24: #{hamida_forward.1} parent=0 // pred_region
    _
  $region25: #{hamida_forward.1} parent=0 // pred_fallthru
    _
  // Predicated region
  $region26: #{hamida_forward.1} parent=0 // pred_check
    _
  $region27: #{hamida_forward.1} parent=0 // pred_check_branch
    %33 = sbr.rel (0) target = $region29
  $region28: #{hamida_forward.1} parent=0 // pred_region
    _
  $region29: #{hamida_forward.1} parent=0 // pred_fallthru
    _
  // Predicated region
  $region30: #{hamida_forward.1} parent=0 // pred_check
    _
  $region31: #{hamida_forward.1} parent=0 // pred_check_branch
    %35 = sbr.rel (0) target = $region33
  $region32: #{hamida_forward.1} parent=0 // pred_region
    _
  $region33: #{hamida_forward.1} parent=0 // pred_fallthru
    _
  // Predicated region
  $region34: #{hamida_forward.1} parent=0 // pred_check
    _
  $region35: #{hamida_forward.1} parent=0 // pred_check_branch
    %37 = sbr.rel (0) target = $region37
  $region36: #{hamida_forward.1} parent=0 // pred_region
    _
  $region37: #{hamida_forward.1} parent=0 // pred_fallthru
    _
  // Predicated region
  $region38: #{hamida_forward.1} parent=0 // pred_check
    _
  $region39: #{hamida_forward.1} parent=0 // pred_check_branch
    %39 = sbr.rel (0) target = $region41
  $region40: #{hamida_forward.1} parent=0 // pred_region
    _
  $region41: #{hamida_forward.1} parent=0 // pred_fallthru
    _
  // Predicated region
  $region42: #{hamida_forward.1} parent=0 // pred_check
    _
  $region43: #{hamida_forward.1} parent=0 // pred_check_branch
    %41 = sbr.rel (0) target = $region45
  $region44: #{hamida_forward.1} parent=0 // pred_region
    _
  $region45: #{hamida_forward.1} parent=0 // pred_fallthru
    _
  // Predicated region
  $region46: #{hamida_forward.1} parent=0 // pred_check
    _
  $region47: #{hamida_forward.1} parent=0 // pred_check_branch
    %43 = sbr.rel (0) target = $region49
  $region48: #{hamida_forward.1} parent=0 // pred_region
    _
  $region49: #{hamida_forward.1} parent=0 // pred_fallthru
    _
  // Predicated region
  $region50: #{hamida_forward.1} parent=0 // pred_check
    _
  $region51: #{hamida_forward.1} parent=0 // pred_check_branch
    %45 = sbr.rel (0) target = $region53
  $region52: #{hamida_forward.1} parent=0 // pred_region
    _
  $region53: #{hamida_forward.1} parent=0 // pred_fallthru
    _
  // Predicated region
  $region54: #{hamida_forward.1} parent=0 // pred_check
    _
  $region55: #{hamida_forward.1} parent=0 // pred_check_branch
    %47 = sbr.rel (0) target = $region57
  $region56: #{hamida_forward.1} parent=0 // pred_region
    _
  $region57: #{hamida_forward.1} parent=0 // pred_fallthru
    _
  // Predicated region
  $region58: #{hamida_forward.1} parent=0 // pred_check
    _
  $region59: #{hamida_forward.1} parent=0 // pred_check_branch
    %49 = sbr.rel (0) target = $region61
  $region60: #{hamida_forward.1} parent=0 // pred_region
    _
  $region61: #{hamida_forward.1} parent=0 // pred_fallthru
    _
  %v51 = vld [vmem:[%s0] sm:$0xff]
  %v52 = vld [vmem:[%s1] sm:$0xff]
  %v53 = vld [vmem:[%s1 + $0x8] sm:$0xff]
  %v54 = vld [vmem:[%s1 + $0x10] sm:$0xff]
  %v55 = vld [vmem:[%s1 + $0x18] sm:$0xff]
  %v56 = vld [vmem:[%s1 + $0x20] sm:$0xf]
  %v57 = vld [vmem:[%s1 + $0x24] sm:$0xff]
  %v58 = vld [vmem:[%s1 + $0x2c] sm:$0xff]
  %v59 = vld [vmem:[%s1 + $0x34] sm:$0xff]
  %v60 = vld [vmem:[%s1 + $0x3c] sm:$0xff]
  %v61 = vld [vmem:[%s1 + $0x44] sm:$0xf]
  %v62 = vld [vmem:[%s1 + $0x48] sm:$0xff]
  %v63 = vld [vmem:[%s1 + $0x50] sm:$0xff]
  %v64 = vld [vmem:[%s1 + $0x58] sm:$0xff]
  %v65 = vld [vmem:[%s1 + $0x60] sm:$0xff]
  %v66 = vld [vmem:[%s1 + $0x68] sm:$0xf]
  %v67 = vld [vmem:[%s1 + $0x6c] sm:$0xff]
  %v68 = vld [vmem:[%s1 + $0x74] sm:$0xff]
  %v69 = vld [vmem:[%s1 + $0x7c] sm:$0xff]
  %v70 = vld [vmem:[%s1 + $0x84] sm:$0xff]
  %v71 = vld [vmem:[%s1 + $0x8c] sm:$0xf]
  %v72 = vld [vmem:[%s1 + $0x90] sm:$0xff]
  %v73 = vld [vmem:[%s1 + $0x98] sm:$0xff]
  %v74 = vld [vmem:[%s1 + $0xa0] sm:$0xff]
  %v75 = vld [vmem:[%s1 + $0xa8] sm:$0xff]
  %v76 = vld [vmem:[%s1 + $0xb0] sm:$0xf]
  %v77 = vld [vmem:[%s1 + $0xb4] sm:$0xff]
  %v78 = vld [vmem:[%s1 + $0xbc] sm:$0xff]
  %v79 = vld [vmem:[%s1 + $0xc4] sm:$0xff]
  %v80 = vld [vmem:[%s1 + $0xcc] sm:$0xff]
  %v81 = vld [vmem:[%s1 + $0xd4] sm:$0xf]
  %v82 = vld [vmem:[%s1 + $0xd8] sm:$0xff]
  %v83 = vld [vmem:[%s1 + $0xe0] sm:$0xff]
  %v84 = vld [vmem:[%s1 + $0xe8] sm:$0xff]
  %v85 = vld [vmem:[%s1 + $0xf0] sm:$0xff]
  %v86 = vld [vmem:[%s1 + $0xf8] sm:$0xf]
  %v87 = vld [vmem:[%s1 + $0xfc] sm:$0xff]
  %v88 = vld [vmem:[%s1 + $0x104] sm:$0xff]
  %v89 = vld [vmem:[%s1 + $0x10c] sm:$0xff]
  %v90 = vld [vmem:[%s1 + $0x114] sm:$0xff]
  %v91 = vld [vmem:[%s1 + $0x11c] sm:$0xf]
  %v92 = vld [vmem:[%s1 + $0x120] sm:$0xff]
  %v93 = vld [vmem:[%s1 + $0x128] sm:$0xff]
  %v94 = vld [vmem:[%s1 + $0x130] sm:$0xff]
  %v95 = vld [vmem:[%s1 + $0x138] sm:$0xff]
  %v96 = vld [vmem:[%s1 + $0x140] sm:$0xf]
  %v97 = vld [vmem:[%s1 + $0x144] sm:$0xff]
  %v98 = vld [vmem:[%s1 + $0x14c] sm:$0xff]
  %v99 = vld [vmem:[%s1 + $0x154] sm:$0xff]
  %v100 = vld [vmem:[%s1 + $0x15c] sm:$0xff]
  %v101 = vld [vmem:[%s1 + $0x164] sm:$0xf]
  %v102 = vld [vmem:[%s1 + $0x168] sm:$0xff]
  %v103 = vld [vmem:[%s1 + $0x170] sm:$0xff]
  %v104 = vld [vmem:[%s1 + $0x178] sm:$0xff]
  %v105 = vld [vmem:[%s1 + $0x180] sm:$0xff]
  %v106 = vld [vmem:[%s1 + $0x188] sm:$0xf]
  %v107 = vld [vmem:[%s1 + $0x18c] sm:$0xff]
  %v108 = vld [vmem:[%s1 + $0x194] sm:$0xff]
  %v109 = vld [vmem:[%s1 + $0x19c] sm:$0xff]
  %v110 = vld [vmem:[%s1 + $0x1a4] sm:$0xff]
  %v111 = vld [vmem:[%s1 + $0x1ac] sm:$0xf]
  %v112 = vld [vmem:[%s1 + $0x1b0] sm:$0xff]
  %v113 = vld [vmem:[%s1 + $0x1b8] sm:$0xff]
  %v114 = vld [vmem:[%s1 + $0x1c0] sm:$0xff]
  %v115 = vld [vmem:[%s1 + $0x1c8] sm:$0xff]
  %v116 = vld [vmem:[%s1 + $0x1d0] sm:$0xf]
  %v117 = vld [vmem:[%s1 + $0x1d4] sm:$0xff]
  %v118 = vld [vmem:[%s1 + $0x1dc] sm:$0xff]
  %v119 = vld [vmem:[%s1 + $0x1e4] sm:$0xff]
  %v120 = vld [vmem:[%s1 + $0x1ec] sm:$0xff]
  %v121 = vld [vmem:[%s1 + $0x1f4] sm:$0xf]
  %v122 = vld [vmem:[%s1 + $0x1f8] sm:$0xff]
  %v123 = vld [vmem:[%s1 + $0x200] sm:$0xff]
  %v124 = vld [vmem:[%s1 + $0x208] sm:$0xff]
  %v125 = vld [vmem:[%s1 + $0x210] sm:$0xff]
  %v126 = vld [vmem:[%s1 + $0x218] sm:$0xf]
  %v127 = vld [vmem:[%s1 + $0x21c] sm:$0xff]
  %v128 = vld [vmem:[%s1 + $0x224] sm:$0xff]
  %v129 = vld [vmem:[%s1 + $0x22c] sm:$0xff]
  %v130 = vld [vmem:[%s1 + $0x234] sm:$0xff]
  %v131 = vld [vmem:[%s1 + $0x23c] sm:$0xf]
  %v132 = vld [vmem:[%s1 + $0x240] sm:$0xff]
  %v133 = vld [vmem:[%s1 + $0x248] sm:$0xff]
  %v134 = vld [vmem:[%s1 + $0x250] sm:$0xff]
  %v135 = vld [vmem:[%s1 + $0x258] sm:$0xff]
  %v136 = vld [vmem:[%s1 + $0x260] sm:$0xf]
  %v137 = vld [vmem:[%s1 + $0x264] sm:$0xff]
  %v138 = vld [vmem:[%s1 + $0x26c] sm:$0xff]
  %v139 = vld [vmem:[%s1 + $0x274] sm:$0xff]
  %v140 = vld [vmem:[%s1 + $0x27c] sm:$0xff]
  %v141 = vld [vmem:[%s1 + $0x284] sm:$0xf]
  %v142 = vld [vmem:[%s1 + $0x288] sm:$0xff]
  %v143 = vld [vmem:[%s1 + $0x290] sm:$0xff]
  %v144 = vld [vmem:[%s1 + $0x298] sm:$0xff]
  %v145 = vld [vmem:[%s1 + $0x2a0] sm:$0xff]
  %v146 = vld [vmem:[%s1 + $0x2a8] sm:$0xf]
  %v147 = vld [vmem:[%s1 + $0x2ac] sm:$0xff]
  %v148 = vld [vmem:[%s1 + $0x2b4] sm:$0xff]
  %v149 = vld [vmem:[%s1 + $0x2bc] sm:$0xff]
  %v150 = vld [vmem:[%s1 + $0x2c4] sm:$0xff]
  %v151 = vld [vmem:[%s1 + $0x2cc] sm:$0xf]
  %v152 = vld [vmem:[%s1 + $0x2d0] sm:$0xff]
  %v153 = vld [vmem:[%s1 + $0x2d8] sm:$0xff]
  %v154 = vld [vmem:[%s1 + $0x2e0] sm:$0xff]
  %v155 = vld [vmem:[%s1 + $0x2e8] sm:$0xff]
  %v156 = vld [vmem:[%s1 + $0x2f0] sm:$0xf]
  %v157 = vld [vmem:[%s1 + $0x2f4] sm:$0xff]
  %v158 = vld [vmem:[%s1 + $0x2fc] sm:$0xff]
  %v159 = vld [vmem:[%s1 + $0x304] sm:$0xff]
  %v160 = vld [vmem:[%s1 + $0x30c] sm:$0xff]
  %v161 = vld [vmem:[%s1 + $0x314] sm:$0xf]
  %v162 = vld [vmem:[%s1 + $0x318] sm:$0xff]
  %v163 = vld [vmem:[%s1 + $0x320] sm:$0xff]
  %v164 = vld [vmem:[%s1 + $0x328] sm:$0xff]
  %v165 = vld [vmem:[%s1 + $0x330] sm:$0xff]
  %v166 = vld [vmem:[%s1 + $0x338] sm:$0xf]
  %v167 = vld [vmem:[%s1 + $0x33c] sm:$0xff]
  %v168 = vld [vmem:[%s1 + $0x344] sm:$0xff]
  %v169 = vld [vmem:[%s1 + $0x34c] sm:$0xff]
  %v170 = vld [vmem:[%s1 + $0x354] sm:$0xff]
  %v171 = vld [vmem:[%s1 + $0x35c] sm:$0xf]
  %v172 = vld [vmem:[%s1 + $0x360] sm:$0xff]
  %v173 = vld [vmem:[%s1 + $0x368] sm:$0xff]
  %v174 = vld [vmem:[%s1 + $0x370] sm:$0xff]
  %v175 = vld [vmem:[%s1 + $0x378] sm:$0xff]
  %v176 = vld [vmem:[%s1 + $0x380] sm:$0xf]
  %v177 = vld [vmem:[%s2] sm:$0xff]
  %v178 = vld [vmem:[%s2 + $0x8] sm:$0x1]
  %v181 = vperm.slane %v177, 0
  %v182 = vperm.slane %v177, 1
  %v183 = vperm.slane %v177, 2
  %v184 = vperm.slane %v177, 3
  %v185 = vperm.slane %v177, 4
  %v186 = vperm.slane %v177, 5
  %v187 = vperm.slane %v177, 6
  %v188 = vperm.slane %v177, 7
  %v189 = vperm.slane %v178, 0
  %v200 = vunpack.c.l.b16 %v51
  %v201 = vunpack.c.h.b16 %v51
  %v202 = vpack.c.b16 %v200, %v200
  %v203 = vpack.c.b16 %v201, %v201
  %v330 = vunpack.c.l.b16 %v52
  %v331 = vunpack.c.h.b16 %v52
  %v332 = vunpack.c.l.b16 %v53
  %v333 = vunpack.c.h.b16 %v53
  %v334 = vunpack.c.l.b16 %v54
  %v335 = vunpack.c.h.b16 %v54
  %v336 = vunpack.c.l.b16 %v55
  %v337 = vunpack.c.h.b16 %v55
  %v338 = vunpack.c.l.b16 %v56
  %v339 = vunpack.c.l.b16 %v57
  %v340 = vunpack.c.h.b16 %v57
  %v341 = vunpack.c.l.b16 %v58
  %v342 = vunpack.c.h.b16 %v58
  %v343 = vunpack.c.l.b16 %v59
  %v344 = vunpack.c.h.b16 %v59
  %v345 = vunpack.c.l.b16 %v60
  %v346 = vunpack.c.h.b16 %v60
  %v347 = vunpack.c.l.b16 %v61
  %v348 = vunpack.c.l.b16 %v62
  %v349 = vunpack.c.h.b16 %v62
  %v350 = vunpack.c.l.b16 %v63
  %v351 = vunpack.c.h.b16 %v63
  %v352 = vunpack.c.l.b16 %v64
  %v353 = vunpack.c.h.b16 %v64
  %v354 = vunpack.c.l.b16 %v65
  %v355 = vunpack.c.h.b16 %v65
  %v356 = vunpack.c.l.b16 %v66
  %v357 = vunpack.c.l.b16 %v67
  %v358 = vunpack.c.h.b16 %v67
  %v359 = vunpack.c.l.b16 %v68
  %v360 = vunpack.c.h.b16 %v68
  %v361 = vunpack.c.l.b16 %v69
  %v362 = vunpack.c.h.b16 %v69
  %v363 = vunpack.c.l.b16 %v70
  %v364 = vunpack.c.h.b16 %v70
  %v365 = vunpack.c.l.b16 %v71
  %v366 = vunpack.c.l.b16 %v72
  %v367 = vunpack.c.h.b16 %v72
  %v368 = vunpack.c.l.b16 %v73
  %v369 = vunpack.c.h.b16 %v73
  %v370 = vunpack.c.l.b16 %v74
  %v371 = vunpack.c.h.b16 %v74
  %v372 = vunpack.c.l.b16 %v75
  %v373 = vunpack.c.h.b16 %v75
  %v374 = vunpack.c.l.b16 %v76
  %v375 = vunpack.c.l.b16 %v77
  %v376 = vunpack.c.h.b16 %v77
  %v377 = vunpack.c.l.b16 %v78
  %v378 = vunpack.c.h.b16 %v78
  %v379 = vunpack.c.l.b16 %v79
  %v380 = vunpack.c.h.b16 %v79
  %v381 = vunpack.c.l.b16 %v80
  %v382 = vunpack.c.h.b16 %v80
  %v383 = vunpack.c.l.b16 %v81
  %v384 = vunpack.c.l.b16 %v82
  %v385 = vunpack.c.h.b16 %v82
  %v386 = vunpack.c.l.b16 %v83
  %v387 = vunpack.c.h.b16 %v83
  %v388 = vunpack.c.l.b16 %v84
  %v389 = vunpack.c.h.b16 %v84
  %v390 = vunpack.c.l.b16 %v85
  %v391 = vunpack.c.h.b16 %v85
  %v392 = vunpack.c.l.b16 %v86
  %v393 = vunpack.c.l.b16 %v87
  %v394 = vunpack.c.h.b16 %v87
  %v395 = vunpack.c.l.b16 %v88
  %v396 = vunpack.c.h.b16 %v88
  %v397 = vunpack.c.l.b16 %v89
  %v398 = vunpack.c.h.b16 %v89
  %v399 = vunpack.c.l.b16 %v90
  %v400 = vunpack.c.h.b16 %v90
  %v401 = vunpack.c.l.b16 %v91
  %v402 = vunpack.c.l.b16 %v92
  %v403 = vunpack.c.h.b16 %v92
  %v404 = vunpack.c.l.b16 %v93
  %v405 = vunpack.c.h.b16 %v93
  %v406 = vunpack.c.l.b16 %v94
  %v407 = vunpack.c.h.b16 %v94
  %v408 = vunpack.c.l.b16 %v95
  %v409 = vunpack.c.h.b16 %v95
  %v410 = vunpack.c.l.b16 %v96
  %v411 = vunpack.c.l.b16 %v97
  %v412 = vunpack.c.h.b16 %v97
  %v413 = vunpack.c.l.b16 %v98
  %v414 = vunpack.c.h.b16 %v98
  %v415 = vunpack.c.l.b16 %v99
  %v416 = vunpack.c.h.b16 %v99
  %v417 = vunpack.c.l.b16 %v100
  %v418 = vunpack.c.h.b16 %v100
  %v419 = vunpack.c.l.b16 %v101
  %v420 = vunpack.c.l.b16 %v102
  %v421 = vunpack.c.h.b16 %v102
  %v422 = vunpack.c.l.b16 %v103
  %v423 = vunpack.c.h.b16 %v103
  %v424 = vunpack.c.l.b16 %v104
  %v425 = vunpack.c.h.b16 %v104
  %v426 = vunpack.c.l.b16 %v105
  %v427 = vunpack.c.h.b16 %v105
  %v428 = vunpack.c.l.b16 %v106
  %v429 = vunpack.c.l.b16 %v107
  %v430 = vunpack.c.h.b16 %v107
  %v431 = vunpack.c.l.b16 %v108
  %v432 = vunpack.c.h.b16 %v108
  %v433 = vunpack.c.l.b16 %v109
  %v434 = vunpack.c.h.b16 %v109
  %v435 = vunpack.c.l.b16 %v110
  %v436 = vunpack.c.h.b16 %v110
  %v437 = vunpack.c.l.b16 %v111
  %v438 = vunpack.c.l.b16 %v112
  %v439 = vunpack.c.h.b16 %v112
  %v440 = vunpack.c.l.b16 %v113
  %v441 = vunpack.c.h.b16 %v113
  %v442 = vunpack.c.l.b16 %v114
  %v443 = vunpack.c.h.b16 %v114
  %v444 = vunpack.c.l.b16 %v115
  %v445 = vunpack.c.h.b16 %v115
  %v446 = vunpack.c.l.b16 %v116
  %v447 = vunpack.c.l.b16 %v117
  %v448 = vunpack.c.h.b16 %v117
  %v449 = vunpack.c.l.b16 %v118
  %v450 = vunpack.c.h.b16 %v118
  %v451 = vunpack.c.l.b16 %v119
  %v452 = vunpack.c.h.b16 %v119
  %v453 = vunpack.c.l.b16 %v120
  %v454 = vunpack.c.h.b16 %v120
  %v455 = vunpack.c.l.b16 %v121
  %v456 = vunpack.c.l.b16 %v122
  %v457 = vunpack.c.h.b16 %v122
  %v458 = vunpack.c.l.b16 %v123
  %v459 = vunpack.c.h.b16 %v123
  %v460 = vunpack.c.l.b16 %v124
  %v461 = vunpack.c.h.b16 %v124
  %v462 = vunpack.c.l.b16 %v125
  %v463 = vunpack.c.h.b16 %v125
  %v464 = vunpack.c.l.b16 %v126
  %v465 = vunpack.c.l.b16 %v127
  %v466 = vunpack.c.h.b16 %v127
  %v467 = vunpack.c.l.b16 %v128
  %v468 = vunpack.c.h.b16 %v128
  %v469 = vunpack.c.l.b16 %v129
  %v470 = vunpack.c.h.b16 %v129
  %v471 = vunpack.c.l.b16 %v130
  %v472 = vunpack.c.h.b16 %v130
  %v473 = vunpack.c.l.b16 %v131
  %v474 = vunpack.c.l.b16 %v132
  %v475 = vunpack.c.h.b16 %v132
  %v476 = vunpack.c.l.b16 %v133
  %v477 = vunpack.c.h.b16 %v133
  %v478 = vunpack.c.l.b16 %v134
  %v479 = vunpack.c.h.b16 %v134
  %v480 = vunpack.c.l.b16 %v135
  %v481 = vunpack.c.h.b16 %v135
  %v482 = vunpack.c.l.b16 %v136
  %v483 = vunpack.c.l.b16 %v137
  %v484 = vunpack.c.h.b16 %v137
  %v485 = vunpack.c.l.b16 %v138
  %v486 = vunpack.c.h.b16 %v138
  %v487 = vunpack.c.l.b16 %v139
  %v488 = vunpack.c.h.b16 %v139
  %v489 = vunpack.c.l.b16 %v140
  %v490 = vunpack.c.h.b16 %v140
  %v491 = vunpack.c.l.b16 %v141
  %v492 = vunpack.c.l.b16 %v142
  %v493 = vunpack.c.h.b16 %v142
  %v494 = vunpack.c.l.b16 %v143
  %v495 = vunpack.c.h.b16 %v143
  %v496 = vunpack.c.l.b16 %v144
  %v497 = vunpack.c.h.b16 %v144
  %v498 = vunpack.c.l.b16 %v145
  %v499 = vunpack.c.h.b16 %v145
  %v500 = vunpack.c.l.b16 %v146
  %v501 = vunpack.c.l.b16 %v147
  %v502 = vunpack.c.h.b16 %v147
  %v503 = vunpack.c.l.b16 %v148
  %v504 = vunpack.c.h.b16 %v148
  %v505 = vunpack.c.l.b16 %v149
  %v506 = vunpack.c.h.b16 %v149
  %v507 = vunpack.c.l.b16 %v150
  %v508 = vunpack.c.h.b16 %v150
  %v509 = vunpack.c.l.b16 %v151
  %v510 = vunpack.c.l.b16 %v152
  %v511 = vunpack.c.h.b16 %v152
  %v512 = vunpack.c.l.b16 %v153
  %v513 = vunpack.c.h.b16 %v153
  %v514 = vunpack.c.l.b16 %v154
  %v515 = vunpack.c.h.b16 %v154
  %v516 = vunpack.c.l.b16 %v155
  %v517 = vunpack.c.h.b16 %v155
  %v518 = vunpack.c.l.b16 %v156
  %v519 = vunpack.c.l.b16 %v157
  %v520 = vunpack.c.h.b16 %v157
  %v521 = vunpack.c.l.b16 %v158
  %v522 = vunpack.c.h.b16 %v158
  %v523 = vunpack.c.l.b16 %v159
  %v524 = vunpack.c.h.b16 %v159
  %v525 = vunpack.c.l.b16 %v160
  %v526 = vunpack.c.h.b16 %v160
  %v527 = vunpack.c.l.b16 %v161
  %v528 = vunpack.c.l.b16 %v162
  %v529 = vunpack.c.h.b16 %v162
  %v530 = vunpack.c.l.b16 %v163
  %v531 = vunpack.c.h.b16 %v163
  %v532 = vunpack.c.l.b16 %v164
  %v533 = vunpack.c.h.b16 %v164
  %v534 = vunpack.c.l.b16 %v165
  %v535 = vunpack.c.h.b16 %v165
  %v536 = vunpack.c.l.b16 %v166
  %v537 = vunpack.c.l.b16 %v167
  %v538 = vunpack.c.h.b16 %v167
  %v539 = vunpack.c.l.b16 %v168
  %v540 = vunpack.c.h.b16 %v168
  %v541 = vunpack.c.l.b16 %v169
  %v542 = vunpack.c.h.b16 %v169
  %v543 = vunpack.c.l.b16 %v170
  %v544 = vunpack.c.h.b16 %v170
  %v545 = vunpack.c.l.b16 %v171
  %v546 = vunpack.c.l.b16 %v172
  %v547 = vunpack.c.h.b16 %v172
  %v548 = vunpack.c.l.b16 %v173
  %v549 = vunpack.c.h.b16 %v173
  %v550 = vunpack.c.l.b16 %v174
  %v551 = vunpack.c.h.b16 %v174
  %v552 = vunpack.c.l.b16 %v175
  %v553 = vunpack.c.h.b16 %v175
  %v554 = vunpack.c.l.b16 %v176
  %v555 = vpack.c.b16 %v339, %v330
  %v556 = vpack.c.b16 %v340, %v331
  %v557 = vpack.c.b16 %v341, %v332
  %v558 = vpack.c.b16 %v342, %v333
  %v559 = vpack.c.b16 %v343, %v334
  %v560 = vpack.c.b16 %v344, %v335
  %v561 = vpack.c.b16 %v345, %v336
  %v562 = vpack.c.b16 %v346, %v337
  %v563 = vpack.c.b16 %v347, %v338
  %v564 = vpack.c.b16 %v357, %v348
  %v565 = vpack.c.b16 %v358, %v349
  %v566 = vpack.c.b16 %v359, %v350
  %v567 = vpack.c.b16 %v360, %v351
  %v568 = vpack.c.b16 %v361, %v352
  %v569 = vpack.c.b16 %v362, %v353
  %v570 = vpack.c.b16 %v363, %v354
  %v571 = vpack.c.b16 %v364, %v355
  %v572 = vpack.c.b16 %v365, %v356
  %v573 = vpack.c.b16 %v375, %v366
  %v574 = vpack.c.b16 %v376, %v367
  %v575 = vpack.c.b16 %v377, %v368
  %v576 = vpack.c.b16 %v378, %v369
  %v577 = vpack.c.b16 %v379, %v370
  %v578 = vpack.c.b16 %v380, %v371
  %v579 = vpack.c.b16 %v381, %v372
  %v580 = vpack.c.b16 %v382, %v373
  %v581 = vpack.c.b16 %v383, %v374
  %v582 = vpack.c.b16 %v393, %v384
  %v583 = vpack.c.b16 %v394, %v385
  %v584 = vpack.c.b16 %v395, %v386
  %v585 = vpack.c.b16 %v396, %v387
  %v586 = vpack.c.b16 %v397, %v388
  %v587 = vpack.c.b16 %v398, %v389
  %v588 = vpack.c.b16 %v399, %v390
  %v589 = vpack.c.b16 %v400, %v391
  %v590 = vpack.c.b16 %v401, %v392
  %v591 = vpack.c.b16 %v411, %v402
  %v592 = vpack.c.b16 %v412, %v403
  %v593 = vpack.c.b16 %v413, %v404
  %v594 = vpack.c.b16 %v414, %v405
  %v595 = vpack.c.b16 %v415, %v406
  %v596 = vpack.c.b16 %v416, %v407
  %v597 = vpack.c.b16 %v417, %v408
  %v598 = vpack.c.b16 %v418, %v409
  %v599 = vpack.c.b16 %v419, %v410
  %v600 = vpack.c.b16 %v429, %v420
  %v601 = vpack.c.b16 %v430, %v421
  %v602 = vpack.c.b16 %v431, %v422
  %v603 = vpack.c.b16 %v432, %v423
  %v604 = vpack.c.b16 %v433, %v424
  %v605 = vpack.c.b16 %v434, %v425
  %v606 = vpack.c.b16 %v435, %v426
  %v607 = vpack.c.b16 %v436, %v427
  %v608 = vpack.c.b16 %v437, %v428
  %v609 = vpack.c.b16 %v447, %v438
  %v610 = vpack.c.b16 %v448, %v439
  %v611 = vpack.c.b16 %v449, %v440
  %v612 = vpack.c.b16 %v450, %v441
  %v613 = vpack.c.b16 %v451, %v442
  %v614 = vpack.c.b16 %v452, %v443
  %v615 = vpack.c.b16 %v453, %v444
  %v616 = vpack.c.b16 %v454, %v445
  %v617 = vpack.c.b16 %v455, %v446
  %v618 = vpack.c.b16 %v465, %v456
  %v619 = vpack.c.b16 %v466, %v457
  %v620 = vpack.c.b16 %v467, %v458
  %v621 = vpack.c.b16 %v468, %v459
  %v622 = vpack.c.b16 %v469, %v460
  %v623 = vpack.c.b16 %v470, %v461
  %v624 = vpack.c.b16 %v471, %v462
  %v625 = vpack.c.b16 %v472, %v463
  %v626 = vpack.c.b16 %v473, %v464
  %v627 = vpack.c.b16 %v483, %v474
  %v628 = vpack.c.b16 %v484, %v475
  %v629 = vpack.c.b16 %v485, %v476
  %v630 = vpack.c.b16 %v486, %v477
  %v631 = vpack.c.b16 %v487, %v478
  %v632 = vpack.c.b16 %v488, %v479
  %v633 = vpack.c.b16 %v489, %v480
  %v634 = vpack.c.b16 %v490, %v481
  %v635 = vpack.c.b16 %v491, %v482
  %v636 = vpack.c.b16 %v501, %v492
  %v637 = vpack.c.b16 %v502, %v493
  %v638 = vpack.c.b16 %v503, %v494
  %v639 = vpack.c.b16 %v504, %v495
  %v640 = vpack.c.b16 %v505, %v496
  %v641 = vpack.c.b16 %v506, %v497
  %v642 = vpack.c.b16 %v507, %v498
  %v643 = vpack.c.b16 %v508, %v499
  %v644 = vpack.c.b16 %v509, %v500
  %v645 = vpack.c.b16 %v519, %v510
  %v646 = vpack.c.b16 %v520, %v511
  %v647 = vpack.c.b16 %v521, %v512
  %v648 = vpack.c.b16 %v522, %v513
  %v649 = vpack.c.b16 %v523, %v514
  %v650 = vpack.c.b16 %v524, %v515
  %v651 = vpack.c.b16 %v525, %v516
  %v652 = vpack.c.b16 %v526, %v517
  %v653 = vpack.c.b16 %v527, %v518
  %v654 = vpack.c.b16 %v537, %v528
  %v655 = vpack.c.b16 %v538, %v529
  %v656 = vpack.c.b16 %v539, %v530
  %v657 = vpack.c.b16 %v540, %v531
  %v658 = vpack.c.b16 %v541, %v532
  %v659 = vpack.c.b16 %v542, %v533
  %v660 = vpack.c.b16 %v543, %v534
  %v661 = vpack.c.b16 %v544, %v535
  %v662 = vpack.c.b16 %v545, %v536
  %v663 = vpack.c.b16 %v546, %v546
  %v664 = vpack.c.b16 %v547, %v547
  %v665 = vpack.c.b16 %v548, %v548
  %v666 = vpack.c.b16 %v549, %v549
  %v667 = vpack.c.b16 %v550, %v550
  %v668 = vpack.c.b16 %v551, %v551
  %v669 = vpack.c.b16 %v552, %v552
  %v670 = vpack.c.b16 %v553, %v553
  %v671 = vpack.c.b16 %v554, %v554
  %vm780 = vcmask 588800
  %v782 = vsel %vm780, %v203, 0
  %vm784 = vcmask 1043456
  %v786 = vsel %vm784, %v663, 0
  %v789 = vsel %vm784, %v664, 0
  %v792 = vsel %vm784, %v665, 0
  %v795 = vsel %vm784, %v666, 0
  %v798 = vsel %vm784, %v667, 0
  %v801 = vsel %vm784, %v668, 0
  %v804 = vsel %vm784, %v669, 0
  %v807 = vsel %vm784, %v670, 0
  %v810 = vsel %vm784, %v671, 0
  %812 = vmatpush.bf16.msra.mxu0 %v618
  %813 = vmatpush.bf16.msra.mxu0 %v609
  %814 = vmatpush.bf16.msra.mxu0 %v600
  %815 = vmatpush.bf16.msra.mxu0 %v591
  %816 = vmatpush.bf16.msra.mxu0 %v582
  %817 = vmatpush.bf16.msra.mxu0 %v573
  %818 = vmatpush.bf16.msra.mxu0 %v564
  %819 = vmatpush.bf16.msra.mxu0 %v555
  %820 = vmatmul.bf16.gmra.mxu0 %v202
  %v821 = vpop.f32.mrf.mxu0
  %v822 = vadd.f32 %v181, %v821
  %v823 = vpop.f32.mrf.mxu0
  %824 = vdwg.mxu0
  %825 = vmatpush.bf16.msra.mxu0 0
  %826 = vmatpush.bf16.msra.mxu0 0
  %827 = vmatpush.bf16.msra.mxu0 0
  %828 = vmatpush.bf16.msra.mxu0 %v786
  %829 = vmatpush.bf16.msra.mxu0 %v654
  %830 = vmatpush.bf16.msra.mxu0 %v645
  %831 = vmatpush.bf16.msra.mxu0 %v636
  %832 = vmatpush.bf16.msra.mxu0 %v627
  %833 = vmatmul.bf16.gmra.mxu0 %v782
  %v834 = vpop.f32.mrf.mxu0
  %v835 = vadd.f32 %v822, %v834
  %v836 = vpop.f32.mrf.mxu0
  %837 = vdwg.mxu0
  %838 = vmatpush.bf16.msra.mxu0 %v619
  %839 = vmatpush.bf16.msra.mxu0 %v610
  %840 = vmatpush.bf16.msra.mxu0 %v601
  %841 = vmatpush.bf16.msra.mxu0 %v592
  %842 = vmatpush.bf16.msra.mxu0 %v583
  %843 = vmatpush.bf16.msra.mxu0 %v574
  %844 = vmatpush.bf16.msra.mxu0 %v565
  %845 = vmatpush.bf16.msra.mxu0 %v556
  %846 = vmatmul.bf16.gmra.mxu0 %v202
  %v847 = vpop.f32.mrf.mxu0
  %v848 = vadd.f32 %v182, %v847
  %v849 = vpop.f32.mrf.mxu0
  %850 = vdwg.mxu0
  %851 = vmatpush.bf16.msra.mxu0 0
  %852 = vmatpush.bf16.msra.mxu0 0
  %853 = vmatpush.bf16.msra.mxu0 0
  %854 = vmatpush.bf16.msra.mxu0 %v789
  %855 = vmatpush.bf16.msra.mxu0 %v655
  %856 = vmatpush.bf16.msra.mxu0 %v646
  %857 = vmatpush.bf16.msra.mxu0 %v637
  %858 = vmatpush.bf16.msra.mxu0 %v628
  %859 = vmatmul.bf16.gmra.mxu0 %v782
  %v860 = vpop.f32.mrf.mxu0
  %v861 = vadd.f32 %v848, %v860
  %v862 = vpop.f32.mrf.mxu0
  %863 = vdwg.mxu0
  %864 = vmatpush.bf16.msra.mxu0 %v620
  %865 = vmatpush.bf16.msra.mxu0 %v611
  %866 = vmatpush.bf16.msra.mxu0 %v602
  %867 = vmatpush.bf16.msra.mxu0 %v593
  %868 = vmatpush.bf16.msra.mxu0 %v584
  %869 = vmatpush.bf16.msra.mxu0 %v575
  %870 = vmatpush.bf16.msra.mxu0 %v566
  %871 = vmatpush.bf16.msra.mxu0 %v557
  %872 = vmatmul.bf16.gmra.mxu0 %v202
  %v873 = vpop.f32.mrf.mxu0
  %v874 = vadd.f32 %v183, %v873
  %v875 = vpop.f32.mrf.mxu0
  %876 = vdwg.mxu0
  %877 = vmatpush.bf16.msra.mxu0 0
  %878 = vmatpush.bf16.msra.mxu0 0
  %879 = vmatpush.bf16.msra.mxu0 0
  %880 = vmatpush.bf16.msra.mxu0 %v792
  %881 = vmatpush.bf16.msra.mxu0 %v656
  %882 = vmatpush.bf16.msra.mxu0 %v647
  %883 = vmatpush.bf16.msra.mxu0 %v638
  %884 = vmatpush.bf16.msra.mxu0 %v629
  %885 = vmatmul.bf16.gmra.mxu0 %v782
  %v886 = vpop.f32.mrf.mxu0
  %v887 = vadd.f32 %v874, %v886
  %v888 = vpop.f32.mrf.mxu0
  %889 = vdwg.mxu0
  %890 = vmatpush.bf16.msra.mxu0 %v621
  %891 = vmatpush.bf16.msra.mxu0 %v612
  %892 = vmatpush.bf16.msra.mxu0 %v603
  %893 = vmatpush.bf16.msra.mxu0 %v594
  %894 = vmatpush.bf16.msra.mxu0 %v585
  %895 = vmatpush.bf16.msra.mxu0 %v576
  %896 = vmatpush.bf16.msra.mxu0 %v567
  %897 = vmatpush.bf16.msra.mxu0 %v558
  %898 = vmatmul.bf16.gmra.mxu0 %v202
  %v899 = vpop.f32.mrf.mxu0
  %v900 = vadd.f32 %v184, %v899
  %v901 = vpop.f32.mrf.mxu0
  %902 = vdwg.mxu0
  %903 = vmatpush.bf16.msra.mxu0 0
  %904 = vmatpush.bf16.msra.mxu0 0
  %905 = vmatpush.bf16.msra.mxu0 0
  %906 = vmatpush.bf16.msra.mxu0 %v795
  %907 = vmatpush.bf16.msra.mxu0 %v657
  %908 = vmatpush.bf16.msra.mxu0 %v648
  %909 = vmatpush.bf16.msra.mxu0 %v639
  %910 = vmatpush.bf16.msra.mxu0 %v630
  %911 = vmatmul.bf16.gmra.mxu0 %v782
  %v912 = vpop.f32.mrf.mxu0
  %v913 = vadd.f32 %v900, %v912
  %v914 = vpop.f32.mrf.mxu0
  %915 = vdwg.mxu0
  %916 = vmatpush.bf16.msra.mxu0 %v622
  %917 = vmatpush.bf16.msra.mxu0 %v613
  %918 = vmatpush.bf16.msra.mxu0 %v604
  %919 = vmatpush.bf16.msra.mxu0 %v595
  %920 = vmatpush.bf16.msra.mxu0 %v586
  %921 = vmatpush.bf16.msra.mxu0 %v577
  %922 = vmatpush.bf16.msra.mxu0 %v568
  %923 = vmatpush.bf16.msra.mxu0 %v559
  %924 = vmatmul.bf16.gmra.mxu0 %v202
  %v925 = vpop.f32.mrf.mxu0
  %v926 = vadd.f32 %v185, %v925
  %v927 = vpop.f32.mrf.mxu0
  %928 = vdwg.mxu0
  %929 = vmatpush.bf16.msra.mxu0 0
  %930 = vmatpush.bf16.msra.mxu0 0
  %931 = vmatpush.bf16.msra.mxu0 0
  %932 = vmatpush.bf16.msra.mxu0 %v798
  %933 = vmatpush.bf16.msra.mxu0 %v658
  %934 = vmatpush.bf16.msra.mxu0 %v649
  %935 = vmatpush.bf16.msra.mxu0 %v640
  %936 = vmatpush.bf16.msra.mxu0 %v631
  %937 = vmatmul.bf16.gmra.mxu0 %v782
  %v938 = vpop.f32.mrf.mxu0
  %v939 = vadd.f32 %v926, %v938
  %v940 = vpop.f32.mrf.mxu0
  %941 = vdwg.mxu0
  %942 = vmatpush.bf16.msra.mxu0 %v623
  %943 = vmatpush.bf16.msra.mxu0 %v614
  %944 = vmatpush.bf16.msra.mxu0 %v605
  %945 = vmatpush.bf16.msra.mxu0 %v596
  %946 = vmatpush.bf16.msra.mxu0 %v587
  %947 = vmatpush.bf16.msra.mxu0 %v578
  %948 = vmatpush.bf16.msra.mxu0 %v569
  %949 = vmatpush.bf16.msra.mxu0 %v560
  %950 = vmatmul.bf16.gmra.mxu0 %v202
  %v951 = vpop.f32.mrf.mxu0
  %v952 = vadd.f32 %v186, %v951
  %v953 = vpop.f32.mrf.mxu0
  %954 = vdwg.mxu0
  %955 = vmatpush.bf16.msra.mxu0 0
  %956 = vmatpush.bf16.msra.mxu0 0
  %957 = vmatpush.bf16.msra.mxu0 0
  %958 = vmatpush.bf16.msra.mxu0 %v801
  %959 = vmatpush.bf16.msra.mxu0 %v659
  %960 = vmatpush.bf16.msra.mxu0 %v650
  %961 = vmatpush.bf16.msra.mxu0 %v641
  %962 = vmatpush.bf16.msra.mxu0 %v632
  %963 = vmatmul.bf16.gmra.mxu0 %v782
  %v964 = vpop.f32.mrf.mxu0
  %v965 = vadd.f32 %v952, %v964
  %v966 = vpop.f32.mrf.mxu0
  %967 = vdwg.mxu0
  %968 = vmatpush.bf16.msra.mxu0 %v624
  %969 = vmatpush.bf16.msra.mxu0 %v615
  %970 = vmatpush.bf16.msra.mxu0 %v606
  %971 = vmatpush.bf16.msra.mxu0 %v597
  %972 = vmatpush.bf16.msra.mxu0 %v588
  %973 = vmatpush.bf16.msra.mxu0 %v579
  %974 = vmatpush.bf16.msra.mxu0 %v570
  %975 = vmatpush.bf16.msra.mxu0 %v561
  %976 = vmatmul.bf16.gmra.mxu0 %v202
  %v977 = vpop.f32.mrf.mxu0
  %v978 = vadd.f32 %v187, %v977
  %v979 = vpop.f32.mrf.mxu0
  %980 = vdwg.mxu0
  %981 = vmatpush.bf16.msra.mxu0 0
  %982 = vmatpush.bf16.msra.mxu0 0
  %983 = vmatpush.bf16.msra.mxu0 0
  %984 = vmatpush.bf16.msra.mxu0 %v804
  %985 = vmatpush.bf16.msra.mxu0 %v660
  %986 = vmatpush.bf16.msra.mxu0 %v651
  %987 = vmatpush.bf16.msra.mxu0 %v642
  %988 = vmatpush.bf16.msra.mxu0 %v633
  %989 = vmatmul.bf16.gmra.mxu0 %v782
  %v990 = vpop.f32.mrf.mxu0
  %v991 = vadd.f32 %v978, %v990
  %v992 = vpop.f32.mrf.mxu0
  %993 = vdwg.mxu0
  %994 = vmatpush.bf16.msra.mxu0 %v625
  %995 = vmatpush.bf16.msra.mxu0 %v616
  %996 = vmatpush.bf16.msra.mxu0 %v607
  %997 = vmatpush.bf16.msra.mxu0 %v598
  %998 = vmatpush.bf16.msra.mxu0 %v589
  %999 = vmatpush.bf16.msra.mxu0 %v580
  %1000 = vmatpush.bf16.msra.mxu0 %v571
  %1001 = vmatpush.bf16.msra.mxu0 %v562
  %1002 = vmatmul.bf16.gmra.mxu0 %v202
  %v1003 = vpop.f32.mrf.mxu0
  %v1004 = vadd.f32 %v188, %v1003
  %v1005 = vpop.f32.mrf.mxu0
  %1006 = vdwg.mxu0
  %1007 = vmatpush.bf16.msra.mxu0 0
  %1008 = vmatpush.bf16.msra.mxu0 0
  %1009 = vmatpush.bf16.msra.mxu0 0
  %1010 = vmatpush.bf16.msra.mxu0 %v807
  %1011 = vmatpush.bf16.msra.mxu0 %v661
  %1012 = vmatpush.bf16.msra.mxu0 %v652
  %1013 = vmatpush.bf16.msra.mxu0 %v643
  %1014 = vmatpush.bf16.msra.mxu0 %v634
  %1015 = vmatmul.bf16.gmra.mxu0 %v782
  %v1016 = vpop.f32.mrf.mxu0
  %v1017 = vadd.f32 %v1004, %v1016
  %v1018 = vpop.f32.mrf.mxu0
  %1019 = vdwg.mxu0
  %1020 = vmatpush.bf16.msra.mxu0 %v626
  %1021 = vmatpush.bf16.msra.mxu0 %v617
  %1022 = vmatpush.bf16.msra.mxu0 %v608
  %1023 = vmatpush.bf16.msra.mxu0 %v599
  %1024 = vmatpush.bf16.msra.mxu0 %v590
  %1025 = vmatpush.bf16.msra.mxu0 %v581
  %1026 = vmatpush.bf16.msra.mxu0 %v572
  %1027 = vmatpush.bf16.msra.mxu0 %v563
  %1028 = vmatmul.bf16.gmra.mxu0 %v202
  %v1029 = vpop.f32.mrf.mxu0
  %v1030 = vadd.f32 %v189, %v1029
  %v1031 = vpop.f32.mrf.mxu0
  %1032 = vdwg.mxu0
  %1033 = vmatpush.bf16.msra.mxu0 0
  %1034 = vmatpush.bf16.msra.mxu0 0
  %1035 = vmatpush.bf16.msra.mxu0 0
  %1036 = vmatpush.bf16.msra.mxu0 %v810
  %1037 = vmatpush.bf16.msra.mxu0 %v662
  %1038 = vmatpush.bf16.msra.mxu0 %v653
  %1039 = vmatpush.bf16.msra.mxu0 %v644
  %1040 = vmatpush.bf16.msra.mxu0 %v635
  %1041 = vmatmul.bf16.gmra.mxu0 %v782
  %v1042 = vpop.f32.mrf.mxu0
  %v1043 = vadd.f32 %v1030, %v1042
  %v1044 = vpop.f32.mrf.mxu0
  %1045 = vdwg.mxu0
  %v1046 = vmax.f32 %v835, 0.0
  %v1047 = vmax.f32 %v861, 0.0
  %v1048 = vmax.f32 %v887, 0.0
  %v1049 = vmax.f32 %v913, 0.0
  %v1050 = vmax.f32 %v939, 0.0
  %v1051 = vmax.f32 %v965, 0.0
  %v1052 = vmax.f32 %v991, 0.0
  %v1053 = vmax.f32 %v1017, 0.0
  %v1054 = vmax.f32 %v1043, 0.0
  %v1055 = vpack.c.bf16 %v1046, %v1046
  %v1056 = vpack.c.bf16 %v1047, %v1047
  %v1057 = vpack.c.bf16 %v1048, %v1048
  %v1058 = vpack.c.bf16 %v1049, %v1049
  %v1059 = vpack.c.bf16 %v1050, %v1050
  %v1060 = vpack.c.bf16 %v1051, %v1051
  %v1061 = vpack.c.bf16 %v1052, %v1052
  %v1062 = vpack.c.bf16 %v1053, %v1053
  %v1063 = vpack.c.bf16 %v1054, %v1054
  %v1064 = vld [vmem:[%s3] sm:$0xff]
  %v1065 = vld [vmem:[%s3 + $0x8] sm:$0xff]
  %v1066 = vld [vmem:[%s3 + $0x10] sm:$0xf]
  %v1067 = vld [vmem:[%s3 + $0x14] sm:$0xff]
  %v1068 = vld [vmem:[%s3 + $0x1c] sm:$0xff]
  %v1069 = vld [vmem:[%s3 + $0x24] sm:$0xf]
  %v1070 = vld [vmem:[%s3 + $0x28] sm:$0xff]
  %v1071 = vld [vmem:[%s3 + $0x30] sm:$0xff]
  %v1072 = vld [vmem:[%s3 + $0x38] sm:$0xf]
  %v1073 = vld [vmem:[%s3 + $0x3c] sm:$0xff]
  %v1074 = vld [vmem:[%s3 + $0x44] sm:$0xff]
  %v1075 = vld [vmem:[%s3 + $0x4c] sm:$0xf]
  %v1076 = vld [vmem:[%s3 + $0x50] sm:$0xff]
  %v1077 = vld [vmem:[%s3 + $0x58] sm:$0xff]
  %v1078 = vld [vmem:[%s3 + $0x60] sm:$0xf]
  %v1079 = vld [vmem:[%s3 + $0x64] sm:$0xff]
  %v1080 = vld [vmem:[%s3 + $0x6c] sm:$0xff]
  %v1081 = vld [vmem:[%s3 + $0x74] sm:$0xf]
  %v1082 = vld [vmem:[%s3 + $0x78] sm:$0xff]
  %v1083 = vld [vmem:[%s3 + $0x80] sm:$0xff]
  %v1084 = vld [vmem:[%s3 + $0x88] sm:$0xf]
  %v1085 = vld [vmem:[%s3 + $0x8c] sm:$0xff]
  %v1086 = vld [vmem:[%s3 + $0x94] sm:$0xff]
  %v1087 = vld [vmem:[%s3 + $0x9c] sm:$0xf]
  %v1088 = vld [vmem:[%s3 + $0xa0] sm:$0xff]
  %v1089 = vld [vmem:[%s3 + $0xa8] sm:$0xff]
  %v1090 = vld [vmem:[%s3 + $0xb0] sm:$0xf]
  %v1091 = vld [vmem:[%s3 + $0xb4] sm:$0xff]
  %v1092 = vld [vmem:[%s3 + $0xbc] sm:$0xff]
  %v1093 = vld [vmem:[%s3 + $0xc4] sm:$0xf]
  %v1094 = vld [vmem:[%s3 + $0xc8] sm:$0xff]
  %v1095 = vld [vmem:[%s3 + $0xd0] sm:$0xff]
  %v1096 = vld [vmem:[%s3 + $0xd8] sm:$0xf]
  %v1097 = vld [vmem:[%s3 + $0xdc] sm:$0xff]
  %v1098 = vld [vmem:[%s3 + $0xe4] sm:$0xff]
  %v1099 = vld [vmem:[%s3 + $0xec] sm:$0xf]
  %v1100 = vld [vmem:[%s3 + $0xf0] sm:$0xff]
  %v1101 = vld [vmem:[%s3 + $0xf8] sm:$0xff]
  %v1102 = vld [vmem:[%s3 + $0x100] sm:$0xf]
  %v1103 = vld [vmem:[%s3 + $0x104] sm:$0xff]
  %v1104 = vld [vmem:[%s3 + $0x10c] sm:$0xff]
  %v1105 = vld [vmem:[%s3 + $0x114] sm:$0xf]
  %v1106 = vld [vmem:[%s3 + $0x118] sm:$0xff]
  %v1107 = vld [vmem:[%s3 + $0x120] sm:$0xff]
  %v1108 = vld [vmem:[%s3 + $0x128] sm:$0xf]
  %v1109 = vld [vmem:[%s3 + $0x12c] sm:$0xff]
  %v1110 = vld [vmem:[%s3 + $0x134] sm:$0xff]
  %v1111 = vld [vmem:[%s3 + $0x13c] sm:$0xf]
  %v1112 = vld [vmem:[%s3 + $0x140] sm:$0xff]
  %v1113 = vld [vmem:[%s3 + $0x148] sm:$0xff]
  %v1114 = vld [vmem:[%s3 + $0x150] sm:$0xf]
  %v1115 = vld [vmem:[%s3 + $0x154] sm:$0xff]
  %v1116 = vld [vmem:[%s3 + $0x15c] sm:$0xff]
  %v1117 = vld [vmem:[%s3 + $0x164] sm:$0xf]
  %v1118 = vld [vmem:[%s3 + $0x168] sm:$0xff]
  %v1119 = vld [vmem:[%s3 + $0x170] sm:$0xff]
  %v1120 = vld [vmem:[%s3 + $0x178] sm:$0xf]
  %v1121 = vld [vmem:[%s3 + $0x17c] sm:$0xff]
  %v1122 = vld [vmem:[%s3 + $0x184] sm:$0xff]
  %v1123 = vld [vmem:[%s3 + $0x18c] sm:$0xf]
  %v1124 = vld [vmem:[%s3 + $0x190] sm:$0xff]
  %v1125 = vld [vmem:[%s3 + $0x198] sm:$0xff]
  %v1126 = vld [vmem:[%s3 + $0x1a0] sm:$0xf]
  %v1127 = vld [vmem:[%s3 + $0x1a4] sm:$0xff]
  %v1128 = vld [vmem:[%s3 + $0x1ac] sm:$0xff]
  %v1129 = vld [vmem:[%s3 + $0x1b4] sm:$0xf]
  %v1130 = vld [vmem:[%s3 + $0x1b8] sm:$0xff]
  %v1131 = vld [vmem:[%s3 + $0x1c0] sm:$0xff]
  %v1132 = vld [vmem:[%s3 + $0x1c8] sm:$0xf]
  %v1133 = vld [vmem:[%s3 + $0x1cc] sm:$0xff]
  %v1134 = vld [vmem:[%s3 + $0x1d4] sm:$0xff]
  %v1135 = vld [vmem:[%s3 + $0x1dc] sm:$0xf]
  %v1136 = vld [vmem:[%s3 + $0x1e0] sm:$0xff]
  %v1137 = vld [vmem:[%s3 + $0x1e8] sm:$0xff]
  %v1138 = vld [vmem:[%s3 + $0x1f0] sm:$0xf]
  %v1139 = vld [vmem:[%s3 + $0x1f4] sm:$0xff]
  %v1140 = vld [vmem:[%s3 + $0x1fc] sm:$0xff]
  %v1141 = vld [vmem:[%s3 + $0x204] sm:$0xf]
  %v1142 = vld [vmem:[%s3 + $0x208] sm:$0xff]
  %v1143 = vld [vmem:[%s3 + $0x210] sm:$0xff]
  %v1144 = vld [vmem:[%s3 + $0x218] sm:$0xf]
  %v1145 = vld [vmem:[%s3 + $0x21c] sm:$0xff]
  %v1146 = vld [vmem:[%s3 + $0x224] sm:$0xff]
  %v1147 = vld [vmem:[%s3 + $0x22c] sm:$0xf]
  %v1148 = vld [vmem:[%s3 + $0x230] sm:$0xff]
  %v1149 = vld [vmem:[%s3 + $0x238] sm:$0xff]
  %v1150 = vld [vmem:[%s3 + $0x240] sm:$0xf]
  %v1151 = vld [vmem:[%s3 + $0x244] sm:$0xff]
  %v1152 = vld [vmem:[%s3 + $0x24c] sm:$0xff]
  %v1153 = vld [vmem:[%s3 + $0x254] sm:$0xf]
  %v1154 = vld [vmem:[%s3 + $0x258] sm:$0xff]
  %v1155 = vld [vmem:[%s3 + $0x260] sm:$0xff]
  %v1156 = vld [vmem:[%s3 + $0x268] sm:$0xf]
  %v1157 = vld [vmem:[%s3 + $0x26c] sm:$0xff]
  %v1158 = vld [vmem:[%s3 + $0x274] sm:$0xff]
  %v1159 = vld [vmem:[%s3 + $0x27c] sm:$0xf]
  %v1160 = vld [vmem:[%s3 + $0x280] sm:$0xff]
  %v1161 = vld [vmem:[%s3 + $0x288] sm:$0xff]
  %v1162 = vld [vmem:[%s3 + $0x290] sm:$0xf]
  %v1163 = vld [vmem:[%s3 + $0x294] sm:$0xff]
  %v1164 = vld [vmem:[%s3 + $0x29c] sm:$0xff]
  %v1165 = vld [vmem:[%s3 + $0x2a4] sm:$0xf]
  %v1166 = vld [vmem:[%s3 + $0x2a8] sm:$0xff]
  %v1167 = vld [vmem:[%s3 + $0x2b0] sm:$0xff]
  %v1168 = vld [vmem:[%s3 + $0x2b8] sm:$0xf]
  %v1169 = vld [vmem:[%s3 + $0x2bc] sm:$0xff]
  %v1170 = vld [vmem:[%s3 + $0x2c4] sm:$0xff]
  %v1171 = vld [vmem:[%s3 + $0x2cc] sm:$0xf]
  %v1172 = vld [vmem:[%s3 + $0x2d0] sm:$0xff]
  %v1173 = vld [vmem:[%s3 + $0x2d8] sm:$0xff]
  %v1174 = vld [vmem:[%s3 + $0x2e0] sm:$0xf]
  %v1175 = vld [vmem:[%s3 + $0x2e4] sm:$0xff]
  %v1176 = vld [vmem:[%s3 + $0x2ec] sm:$0xff]
  %v1177 = vld [vmem:[%s3 + $0x2f4] sm:$0xf]
  %v1178 = vld [vmem:[%s3 + $0x2f8] sm:$0xff]
  %v1179 = vld [vmem:[%s3 + $0x300] sm:$0xff]
  %v1180 = vld [vmem:[%s3 + $0x308] sm:$0xf]
  %v1181 = vld [vmem:[%s3 + $0x30c] sm:$0xff]
  %v1182 = vld [vmem:[%s3 + $0x314] sm:$0xff]
  %v1183 = vld [vmem:[%s3 + $0x31c] sm:$0xf]
  %v1184 = vld [vmem:[%s3 + $0x320] sm:$0xff]
  %v1185 = vld [vmem:[%s3 + $0x328] sm:$0xff]
  %v1186 = vld [vmem:[%s3 + $0x330] sm:$0xf]
  %v1187 = vld [vmem:[%s3 + $0x334] sm:$0xff]
  %v1188 = vld [vmem:[%s3 + $0x33c] sm:$0xff]
  %v1189 = vld [vmem:[%s3 + $0x344] sm:$0xf]
  %v1190 = vld [vmem:[%s3 + $0x348] sm:$0xff]
  %v1191 = vld [vmem:[%s3 + $0x350] sm:$0xff]
  %v1192 = vld [vmem:[%s3 + $0x358] sm:$0xf]
  %v1193 = vld [vmem:[%s3 + $0x35c] sm:$0xff]
  %v1194 = vld [vmem:[%s3 + $0x364] sm:$0xff]
  %v1195 = vld [vmem:[%s3 + $0x36c] sm:$0xf]
  %v1196 = vld [vmem:[%s3 + $0x370] sm:$0xff]
  %v1197 = vld [vmem:[%s3 + $0x378] sm:$0xff]
  %v1198 = vld [vmem:[%s3 + $0x380] sm:$0xf]
  %v1199 = vld [vmem:[%s3 + $0x384] sm:$0xff]
  %v1200 = vld [vmem:[%s3 + $0x38c] sm:$0xff]
  %v1201 = vld [vmem:[%s3 + $0x394] sm:$0xf]
  %v1202 = vld [vmem:[%s3 + $0x398] sm:$0xff]
  %v1203 = vld [vmem:[%s3 + $0x3a0] sm:$0xff]
  %v1204 = vld [vmem:[%s3 + $0x3a8] sm:$0xf]
  %v1205 = vld [vmem:[%s3 + $0x3ac] sm:$0xff]
  %v1206 = vld [vmem:[%s3 + $0x3b4] sm:$0xff]
  %v1207 = vld [vmem:[%s3 + $0x3bc] sm:$0xf]
  %v1208 = vld [vmem:[%s3 + $0x3c0] sm:$0xff]
  %v1209 = vld [vmem:[%s3 + $0x3c8] sm:$0xff]
  %v1210 = vld [vmem:[%s3 + $0x3d0] sm:$0xf]
  %v1211 = vld [vmem:[%s3 + $0x3d4] sm:$0xff]
  %v1212 = vld [vmem:[%s3 + $0x3dc] sm:$0xff]
  %v1213 = vld [vmem:[%s3 + $0x3e4] sm:$0xf]
  %v1214 = vld [vmem:[%s3 + $0x3e8] sm:$0xff]
  %v1215 = vld [vmem:[%s3 + $0x3f0] sm:$0xff]
  %v1216 = vld [vmem:[%s3 + $0x3f8] sm:$0xf]
  %v1217 = vld [vmem:[%s3 + $0x3fc] sm:$0xff]
  %v1218 = vld [vmem:[%s3 + $0x404] sm:$0xff]
  %v1219 = vld [vmem:[%s3 + $0x40c] sm:$0xf]
  %v1220 = vld [vmem:[%s3 + $0x410] sm:$0xff]
  %v1221 = vld [vmem:[%s3 + $0x418] sm:$0xff]
  %v1222 = vld [vmem:[%s3 + $0x420] sm:$0xf]
  %v1223 = vld [vmem:[%s3 + $0x424] sm:$0xff]
  %v1224 = vld [vmem:[%s3 + $0x42c] sm:$0xff]
  %v1225 = vld [vmem:[%s3 + $0x434] sm:$0xf]
  %v1226 = vld [vmem:[%s3 + $0x438] sm:$0xff]
  %v1227 = vld [vmem:[%s3 + $0x440] sm:$0xff]
  %v1228 = vld [vmem:[%s3 + $0x448] sm:$0xf]
  %v1229 = vld [vmem:[%s3 + $0x44c] sm:$0xff]
  %v1230 = vld [vmem:[%s3 + $0x454] sm:$0xff]
  %v1231 = vld [vmem:[%s3 + $0x45c] sm:$0xf]
  %v1232 = vld [vmem:[%s3 + $0x460] sm:$0xff]
  %v1233 = vld [vmem:[%s3 + $0x468] sm:$0xff]
  %v1234 = vld [vmem:[%s3 + $0x470] sm:$0xf]
  %v1235 = vld [vmem:[%s3 + $0x474] sm:$0xff]
  %v1236 = vld [vmem:[%s3 + $0x47c] sm:$0xff]
  %v1237 = vld [vmem:[%s3 + $0x484] sm:$0xf]
  %v1238 = vld [vmem:[%s3 + $0x488] sm:$0xff]
  %v1239 = vld [vmem:[%s3 + $0x490] sm:$0xff]
  %v1240 = vld [vmem:[%s3 + $0x498] sm:$0xf]
  %v1241 = vld [vmem:[%s3 + $0x49c] sm:$0xff]
  %v1242 = vld [vmem:[%s3 + $0x4a4] sm:$0xff]
  %v1243 = vld [vmem:[%s3 + $0x4ac] sm:$0xf]
  %v1244 = vld [vmem:[%s3 + $0x4b0] sm:$0xff]
  %v1245 = vld [vmem:[%s3 + $0x4b8] sm:$0xff]
  %v1246 = vld [vmem:[%s3 + $0x4c0] sm:$0xf]
  %v1247 = vld [vmem:[%s3 + $0x4c4] sm:$0xff]
  %v1248 = vld [vmem:[%s3 + $0x4cc] sm:$0xff]
  %v1249 = vld [vmem:[%s3 + $0x4d4] sm:$0xf]
  %v1250 = vld [vmem:[%s3 + $0x4d8] sm:$0xff]
  %v1251 = vld [vmem:[%s3 + $0x4e0] sm:$0xff]
  %v1252 = vld [vmem:[%s3 + $0x4e8] sm:$0xf]
  %v1253 = vld [vmem:[%s3 + $0x4ec] sm:$0xff]
  %v1254 = vld [vmem:[%s3 + $0x4f4] sm:$0xff]
  %v1255 = vld [vmem:[%s3 + $0x4fc] sm:$0xf]
  %v1256 = vld [vmem:[%s3 + $0x500] sm:$0xff]
  %v1257 = vld [vmem:[%s3 + $0x508] sm:$0xff]
  %v1258 = vld [vmem:[%s3 + $0x510] sm:$0xf]
  %v1259 = vld [vmem:[%s3 + $0x514] sm:$0xff]
  %v1260 = vld [vmem:[%s3 + $0x51c] sm:$0xff]
  %v1261 = vld [vmem:[%s3 + $0x524] sm:$0xf]
  %v1262 = vld [vmem:[%s3 + $0x528] sm:$0xff]
  %v1263 = vld [vmem:[%s3 + $0x530] sm:$0xff]
  %v1264 = vld [vmem:[%s3 + $0x538] sm:$0xf]
  %v1265 = vld [vmem:[%s3 + $0x53c] sm:$0xff]
  %v1266 = vld [vmem:[%s3 + $0x544] sm:$0xff]
  %v1267 = vld [vmem:[%s3 + $0x54c] sm:$0xf]
  %v1268 = vld [vmem:[%s3 + $0x550] sm:$0xff]
  %v1269 = vld [vmem:[%s3 + $0x558] sm:$0xff]
  %v1270 = vld [vmem:[%s3 + $0x560] sm:$0xf]
  %v1271 = vld [vmem:[%s3 + $0x564] sm:$0xff]
  %v1272 = vld [vmem:[%s3 + $0x56c] sm:$0xff]
  %v1273 = vld [vmem:[%s3 + $0x574] sm:$0xf]
  %v1274 = vld [vmem:[%s3 + $0x578] sm:$0xff]
  %v1275 = vld [vmem:[%s3 + $0x580] sm:$0xff]
  %v1276 = vld [vmem:[%s3 + $0x588] sm:$0xf]
  %v1277 = vld [vmem:[%s3 + $0x58c] sm:$0xff]
  %v1278 = vld [vmem:[%s3 + $0x594] sm:$0xff]
  %v1279 = vld [vmem:[%s3 + $0x59c] sm:$0xf]
  %v1280 = vld [vmem:[%s3 + $0x5a0] sm:$0xff]
  %v1281 = vld [vmem:[%s3 + $0x5a8] sm:$0xff]
  %v1282 = vld [vmem:[%s3 + $0x5b0] sm:$0xf]
  %v1283 = vld [vmem:[%s3 + $0x5b4] sm:$0xff]
  %v1284 = vld [vmem:[%s3 + $0x5bc] sm:$0xff]
  %v1285 = vld [vmem:[%s3 + $0x5c4] sm:$0xf]
  %v1286 = vld [vmem:[%s3 + $0x5c8] sm:$0xff]
  %v1287 = vld [vmem:[%s3 + $0x5d0] sm:$0xff]
  %v1288 = vld [vmem:[%s3 + $0x5d8] sm:$0xf]
  %v1289 = vld [vmem:[%s3 + $0x5dc] sm:$0xff]
  %v1290 = vld [vmem:[%s3 + $0x5e4] sm:$0xff]
  %v1291 = vld [vmem:[%s3 + $0x5ec] sm:$0xf]
  %v1292 = vld [vmem:[%s3 + $0x5f0] sm:$0xff]
  %v1293 = vld [vmem:[%s3 + $0x5f8] sm:$0xff]
  %v1294 = vld [vmem:[%s3 + $0x600] sm:$0xf]
  %v1295 = vld [vmem:[%s3 + $0x604] sm:$0xff]
  %v1296 = vld [vmem:[%s3 + $0x60c] sm:$0xff]
  %v1297 = vld [vmem:[%s3 + $0x614] sm:$0xf]
  %v1298 = vld [vmem:[%s3 + $0x618] sm:$0xff]
  %v1299 = vld [vmem:[%s3 + $0x620] sm:$0xff]
  %v1300 = vld [vmem:[%s3 + $0x628] sm:$0xf]
  %v1301 = vld [vmem:[%s3 + $0x62c] sm:$0xff]
  %v1302 = vld [vmem:[%s3 + $0x634] sm:$0xff]
  %v1303 = vld [vmem:[%s3 + $0x63c] sm:$0xf]
  %v1304 = vld [vmem:[%s3 + $0x640] sm:$0xff]
  %v1305 = vld [vmem:[%s3 + $0x648] sm:$0xff]
  %v1306 = vld [vmem:[%s3 + $0x650] sm:$0xf]
  %v1307 = vld [vmem:[%s3 + $0x654] sm:$0xff]
  %v1308 = vld [vmem:[%s3 + $0x65c] sm:$0xff]
  %v1309 = vld [vmem:[%s3 + $0x664] sm:$0xf]
  %v1310 = vld [vmem:[%s3 + $0x668] sm:$0xff]
  %v1311 = vld [vmem:[%s3 + $0x670] sm:$0xff]
  %v1312 = vld [vmem:[%s3 + $0x678] sm:$0xf]
  %v1313 = vld [vmem:[%s3 + $0x67c] sm:$0xff]
  %v1314 = vld [vmem:[%s3 + $0x684] sm:$0xff]
  %v1315 = vld [vmem:[%s3 + $0x68c] sm:$0xf]
  %v1316 = vld [vmem:[%s3 + $0x690] sm:$0xff]
  %v1317 = vld [vmem:[%s3 + $0x698] sm:$0xff]
  %v1318 = vld [vmem:[%s3 + $0x6a0] sm:$0xf]
  %v1319 = vld [vmem:[%s3 + $0x6a4] sm:$0xff]
  %v1320 = vld [vmem:[%s3 + $0x6ac] sm:$0xff]
  %v1321 = vld [vmem:[%s3 + $0x6b4] sm:$0xf]
  %v1322 = vld [vmem:[%s3 + $0x6b8] sm:$0xff]
  %v1323 = vld [vmem:[%s3 + $0x6c0] sm:$0xff]
  %v1324 = vld [vmem:[%s3 + $0x6c8] sm:$0xf]
  %v1325 = vld [vmem:[%s3 + $0x6cc] sm:$0xff]
  %v1326 = vld [vmem:[%s3 + $0x6d4] sm:$0xff]
  %v1327 = vld [vmem:[%s3 + $0x6dc] sm:$0xf]
  %v1328 = vld [vmem:[%s3 + $0x6e0] sm:$0xff]
  %v1329 = vld [vmem:[%s3 + $0x6e8] sm:$0xff]
  %v1330 = vld [vmem:[%s3 + $0x6f0] sm:$0xf]
  %v1331 = vld [vmem:[%s3 + $0x6f4] sm:$0xff]
  %v1332 = vld [vmem:[%s3 + $0x6fc] sm:$0xff]
  %v1333 = vld [vmem:[%s3 + $0x704] sm:$0xf]
  %v1334 = vld [vmem:[%s3 + $0x708] sm:$0xff]
  %v1335 = vld [vmem:[%s3 + $0x710] sm:$0xff]
  %v1336 = vld [vmem:[%s3 + $0x718] sm:$0xf]
  %v1337 = vld [vmem:[%s3 + $0x71c] sm:$0xff]
  %v1338 = vld [vmem:[%s3 + $0x724] sm:$0xff]
  %v1339 = vld [vmem:[%s3 + $0x72c] sm:$0xf]
  %v1340 = vld [vmem:[%s3 + $0x730] sm:$0xff]
  %v1341 = vld [vmem:[%s3 + $0x738] sm:$0xff]
  %v1342 = vld [vmem:[%s3 + $0x740] sm:$0xf]
  %v1343 = vld [vmem:[%s3 + $0x744] sm:$0xff]
  %v1344 = vld [vmem:[%s3 + $0x74c] sm:$0xff]
  %v1345 = vld [vmem:[%s3 + $0x754] sm:$0xf]
  %v1346 = vld [vmem:[%s3 + $0x758] sm:$0xff]
  %v1347 = vld [vmem:[%s3 + $0x760] sm:$0xff]
  %v1348 = vld [vmem:[%s3 + $0x768] sm:$0xf]
  %v1349 = vld [vmem:[%s3 + $0x76c] sm:$0xff]
  %v1350 = vld [vmem:[%s3 + $0x774] sm:$0xff]
  %v1351 = vld [vmem:[%s3 + $0x77c] sm:$0xf]
  %v1352 = vld [vmem:[%s3 + $0x780] sm:$0xff]
  %v1353 = vld [vmem:[%s3 + $0x788] sm:$0xff]
  %v1354 = vld [vmem:[%s3 + $0x790] sm:$0xf]
  %v1355 = vld [vmem:[%s3 + $0x794] sm:$0xff]
  %v1356 = vld [vmem:[%s3 + $0x79c] sm:$0xff]
  %v1357 = vld [vmem:[%s3 + $0x7a4] sm:$0xf]
  %v1358 = vld [vmem:[%s3 + $0x7a8] sm:$0xff]
  %v1359 = vld [vmem:[%s3 + $0x7b0] sm:$0xff]
  %v1360 = vld [vmem:[%s3 + $0x7b8] sm:$0xf]
  %v1361 = vld [vmem:[%s3 + $0x7bc] sm:$0xff]
  %v1362 = vld [vmem:[%s3 + $0x7c4] sm:$0xff]
  %v1363 = vld [vmem:[%s3 + $0x7cc] sm:$0xf]
  %v1364 = vld [vmem:[%s3 + $0x7d0] sm:$0xff]
  %v1365 = vld [vmem:[%s3 + $0x7d8] sm:$0xff]
  %v1366 = vld [vmem:[%s3 + $0x7e0] sm:$0xf]
  %v1367 = vld [vmem:[%s3 + $0x7e4] sm:$0xff]
  %v1368 = vld [vmem:[%s3 + $0x7ec] sm:$0xff]
  %v1369 = vld [vmem:[%s3 + $0x7f4] sm:$0xf]
  %v1370 = vld [vmem:[%s3 + $0x7f8] sm:$0xff]
  %v1371 = vld [vmem:[%s3 + $0x800] sm:$0xff]
  %v1372 = vld [vmem:[%s3 + $0x808] sm:$0xf]
  %v1373 = vld [vmem:[%s3 + $0x80c] sm:$0xff]
  %v1374 = vld [vmem:[%s3 + $0x814] sm:$0xff]
  %v1375 = vld [vmem:[%s3 + $0x81c] sm:$0xf]
  %v1376 = vld [vmem:[%s3 + $0x820] sm:$0xff]
  %v1377 = vld [vmem:[%s3 + $0x828] sm:$0xff]
  %v1378 = vld [vmem:[%s3 + $0x830] sm:$0xf]
  %v1379 = vld [vmem:[%s3 + $0x834] sm:$0xff]
  %v1380 = vld [vmem:[%s3 + $0x83c] sm:$0xff]
  %v1381 = vld [vmem:[%s3 + $0x844] sm:$0xf]
  %v1382 = vld [vmem:[%s3 + $0x848] sm:$0xff]
  %v1383 = vld [vmem:[%s3 + $0x850] sm:$0xff]
  %v1384 = vld [vmem:[%s3 + $0x858] sm:$0xf]
  %v1385 = vld [vmem:[%s3 + $0x85c] sm:$0xff]
  %v1386 = vld [vmem:[%s3 + $0x864] sm:$0xff]
  %v1387 = vld [vmem:[%s3 + $0x86c] sm:$0xf]
  %v1388 = vld [vmem:[%s3 + $0x870] sm:$0xff]
  %v1389 = vld [vmem:[%s3 + $0x878] sm:$0xff]
  %v1390 = vld [vmem:[%s3 + $0x880] sm:$0xf]
  %v1391 = vld [vmem:[%s3 + $0x884] sm:$0xff]
  %v1392 = vld [vmem:[%s3 + $0x88c] sm:$0xff]
  %v1393 = vld [vmem:[%s3 + $0x894] sm:$0xf]
  %v1394 = vld [vmem:[%s3 + $0x898] sm:$0xff]
  %v1395 = vld [vmem:[%s3 + $0x8a0] sm:$0xff]
  %v1396 = vld [vmem:[%s3 + $0x8a8] sm:$0xf]
  %v1397 = vld [vmem:[%s3 + $0x8ac] sm:$0xff]
  %v1398 = vld [vmem:[%s3 + $0x8b4] sm:$0xff]
  %v1399 = vld [vmem:[%s3 + $0x8bc] sm:$0xf]
  %v1400 = vld [vmem:[%s3 + $0x8c0] sm:$0xff]
  %v1401 = vld [vmem:[%s3 + $0x8c8] sm:$0xff]
  %v1402 = vld [vmem:[%s3 + $0x8d0] sm:$0xf]
  %v1403 = vld [vmem:[%s3 + $0x8d4] sm:$0xff]
  %v1404 = vld [vmem:[%s3 + $0x8dc] sm:$0xff]
  %v1405 = vld [vmem:[%s3 + $0x8e4] sm:$0xf]
  %v1406 = vld [vmem:[%s3 + $0x8e8] sm:$0xff]
  %v1407 = vld [vmem:[%s3 + $0x8f0] sm:$0xff]
  %v1408 = vld [vmem:[%s3 + $0x8f8] sm:$0xf]
  %v1409 = vld [vmem:[%s3 + $0x8fc] sm:$0xff]
  %v1410 = vld [vmem:[%s3 + $0x904] sm:$0xff]
  %v1411 = vld [vmem:[%s3 + $0x90c] sm:$0xf]
  %v1412 = vld [vmem:[%s3 + $0x910] sm:$0xff]
  %v1413 = vld [vmem:[%s3 + $0x918] sm:$0xff]
  %v1414 = vld [vmem:[%s3 + $0x920] sm:$0xf]
  %v1415 = vld [vmem:[%s3 + $0x924] sm:$0xff]
  %v1416 = vld [vmem:[%s3 + $0x92c] sm:$0xff]
  %v1417 = vld [vmem:[%s3 + $0x934] sm:$0xf]
  %v1418 = vld [vmem:[%s3 + $0x938] sm:$0xff]
  %v1419 = vld [vmem:[%s3 + $0x940] sm:$0xff]
  %v1420 = vld [vmem:[%s3 + $0x948] sm:$0xf]
  %v1421 = vld [vmem:[%s3 + $0x94c] sm:$0xff]
  %v1422 = vld [vmem:[%s3 + $0x954] sm:$0xff]
  %v1423 = vld [vmem:[%s3 + $0x95c] sm:$0xf]
  %v1424 = vld [vmem:[%s3 + $0x960] sm:$0xff]
  %v1425 = vld [vmem:[%s3 + $0x968] sm:$0xff]
  %v1426 = vld [vmem:[%s3 + $0x970] sm:$0xf]
  %v1427 = vld [vmem:[%s3 + $0x974] sm:$0xff]
  %v1428 = vld [vmem:[%s3 + $0x97c] sm:$0xff]
  %v1429 = vld [vmem:[%s3 + $0x984] sm:$0xf]
  %v1430 = vld [vmem:[%s3 + $0x988] sm:$0xff]
  %v1431 = vld [vmem:[%s3 + $0x990] sm:$0xff]
  %v1432 = vld [vmem:[%s3 + $0x998] sm:$0xf]
  %v1433 = vld [vmem:[%s3 + $0x99c] sm:$0xff]
  %v1434 = vld [vmem:[%s3 + $0x9a4] sm:$0xff]
  %v1435 = vld [vmem:[%s3 + $0x9ac] sm:$0xf]
  %v1436 = vld [vmem:[%s3 + $0x9b0] sm:$0xff]
  %v1437 = vld [vmem:[%s3 + $0x9b8] sm:$0xff]
  %v1438 = vld [vmem:[%s3 + $0x9c0] sm:$0xf]
  %v1439 = vld [vmem:[%s3 + $0x9c4] sm:$0xff]
  %v1440 = vld [vmem:[%s3 + $0x9cc] sm:$0xff]
  %v1441 = vld [vmem:[%s3 + $0x9d4] sm:$0xf]
  %v1442 = vld [vmem:[%s3 + $0x9d8] sm:$0xff]
  %v1443 = vld [vmem:[%s3 + $0x9e0] sm:$0xff]
  %v1444 = vld [vmem:[%s3 + $0x9e8] sm:$0xf]
  %v1445 = vld [vmem:[%s3 + $0x9ec] sm:$0xff]
  %v1446 = vld [vmem:[%s3 + $0x9f4] sm:$0xff]
  %v1447 = vld [vmem:[%s3 + $0x9fc] sm:$0xf]
  %v1448 = vld [vmem:[%s3 + $0xa00] sm:$0xff]
  %v1449 = vld [vmem:[%s3 + $0xa08] sm:$0xff]
  %v1450 = vld [vmem:[%s3 + $0xa10] sm:$0xf]
  %v1451 = vld [vmem:[%s3 + $0xa14] sm:$0xff]
  %v1452 = vld [vmem:[%s3 + $0xa1c] sm:$0xff]
  %v1453 = vld [vmem:[%s3 + $0xa24] sm:$0xf]
  %v1454 = vld [vmem:[%s3 + $0xa28] sm:$0xff]
  %v1455 = vld [vmem:[%s3 + $0xa30] sm:$0xff]
  %v1456 = vld [vmem:[%s3 + $0xa38] sm:$0xf]
  %v1457 = vld [vmem:[%s3 + $0xa3c] sm:$0xff]
  %v1458 = vld [vmem:[%s3 + $0xa44] sm:$0xff]
  %v1459 = vld [vmem:[%s3 + $0xa4c] sm:$0xf]
  %v1460 = vld [vmem:[%s3 + $0xa50] sm:$0xff]
  %v1461 = vld [vmem:[%s3 + $0xa58] sm:$0xff]
  %v1462 = vld [vmem:[%s3 + $0xa60] sm:$0xf]
  %v1463 = vld [vmem:[%s3 + $0xa64] sm:$0xff]
  %v1464 = vld [vmem:[%s3 + $0xa6c] sm:$0xff]
  %v1465 = vld [vmem:[%s3 + $0xa74] sm:$0xf]
  %v1466 = vld [vmem:[%s3 + $0xa78] sm:$0xff]
  %v1467 = vld [vmem:[%s3 + $0xa80] sm:$0xff]
  %v1468 = vld [vmem:[%s3 + $0xa88] sm:$0xf]
  %v1469 = vld [vmem:[%s4] sm:$0x1f]
  %v1471 = vperm.slane %v1469, 0
  %v1472 = vperm.slane %v1469, 1
  %v1473 = vperm.slane %v1469, 2
  %v1474 = vperm.slane %v1469, 3
  %v1475 = vperm.slane %v1469, 4
  %v1886 = vunpack.c.l.b16 %v1064
  %v1887 = vunpack.c.h.b16 %v1064
  %v1888 = vunpack.c.l.b16 %v1065
  %v1889 = vunpack.c.h.b16 %v1065
  %v1890 = vunpack.c.l.b16 %v1066
  %v1891 = vunpack.c.l.b16 %v1067
  %v1892 = vunpack.c.h.b16 %v1067
  %v1893 = vunpack.c.l.b16 %v1068
  %v1894 = vunpack.c.h.b16 %v1068
  %v1895 = vunpack.c.l.b16 %v1069
  %v1896 = vunpack.c.l.b16 %v1070
  %v1897 = vunpack.c.h.b16 %v1070
  %v1898 = vunpack.c.l.b16 %v1071
  %v1899 = vunpack.c.h.b16 %v1071
  %v1900 = vunpack.c.l.b16 %v1072
  %v1901 = vunpack.c.l.b16 %v1073
  %v1902 = vunpack.c.h.b16 %v1073
  %v1903 = vunpack.c.l.b16 %v1074
  %v1904 = vunpack.c.h.b16 %v1074
  %v1905 = vunpack.c.l.b16 %v1075
  %v1906 = vunpack.c.l.b16 %v1076
  %v1907 = vunpack.c.h.b16 %v1076
  %v1908 = vunpack.c.l.b16 %v1077
  %v1909 = vunpack.c.h.b16 %v1077
  %v1910 = vunpack.c.l.b16 %v1078
  %v1911 = vunpack.c.l.b16 %v1079
  %v1912 = vunpack.c.h.b16 %v1079
  %v1913 = vunpack.c.l.b16 %v1080
  %v1914 = vunpack.c.h.b16 %v1080
  %v1915 = vunpack.c.l.b16 %v1081
  %v1916 = vunpack.c.l.b16 %v1082
  %v1917 = vunpack.c.h.b16 %v1082
  %v1918 = vunpack.c.l.b16 %v1083
  %v1919 = vunpack.c.h.b16 %v1083
  %v1920 = vunpack.c.l.b16 %v1084
  %v1921 = vunpack.c.l.b16 %v1085
  %v1922 = vunpack.c.h.b16 %v1085
  %v1923 = vunpack.c.l.b16 %v1086
  %v1924 = vunpack.c.h.b16 %v1086
  %v1925 = vunpack.c.l.b16 %v1087
  %v1926 = vunpack.c.l.b16 %v1088
  %v1927 = vunpack.c.h.b16 %v1088
  %v1928 = vunpack.c.l.b16 %v1089
  %v1929 = vunpack.c.h.b16 %v1089
  %v1930 = vunpack.c.l.b16 %v1090
  %v1931 = vunpack.c.l.b16 %v1091
  %v1932 = vunpack.c.h.b16 %v1091
  %v1933 = vunpack.c.l.b16 %v1092
  %v1934 = vunpack.c.h.b16 %v1092
  %v1935 = vunpack.c.l.b16 %v1093
  %v1936 = vunpack.c.l.b16 %v1094
  %v1937 = vunpack.c.h.b16 %v1094
  %v1938 = vunpack.c.l.b16 %v1095
  %v1939 = vunpack.c.h.b16 %v1095
  %v1940 = vunpack.c.l.b16 %v1096
  %v1941 = vunpack.c.l.b16 %v1097
  %v1942 = vunpack.c.h.b16 %v1097
  %v1943 = vunpack.c.l.b16 %v1098
  %v1944 = vunpack.c.h.b16 %v1098
  %v1945 = vunpack.c.l.b16 %v1099
  %v1946 = vunpack.c.l.b16 %v1100
  %v1947 = vunpack.c.h.b16 %v1100
  %v1948 = vunpack.c.l.b16 %v1101
  %v1949 = vunpack.c.h.b16 %v1101
  %v1950 = vunpack.c.l.b16 %v1102
  %v1951 = vunpack.c.l.b16 %v1103
  %v1952 = vunpack.c.h.b16 %v1103
  %v1953 = vunpack.c.l.b16 %v1104
  %v1954 = vunpack.c.h.b16 %v1104
  %v1955 = vunpack.c.l.b16 %v1105
  %v1956 = vunpack.c.l.b16 %v1106
  %v1957 = vunpack.c.h.b16 %v1106
  %v1958 = vunpack.c.l.b16 %v1107
  %v1959 = vunpack.c.h.b16 %v1107
  %v1960 = vunpack.c.l.b16 %v1108
  %v1961 = vunpack.c.l.b16 %v1109
  %v1962 = vunpack.c.h.b16 %v1109
  %v1963 = vunpack.c.l.b16 %v1110
  %v1964 = vunpack.c.h.b16 %v1110
  %v1965 = vunpack.c.l.b16 %v1111
  %v1966 = vunpack.c.l.b16 %v1112
  %v1967 = vunpack.c.h.b16 %v1112
  %v1968 = vunpack.c.l.b16 %v1113
  %v1969 = vunpack.c.h.b16 %v1113
  %v1970 = vunpack.c.l.b16 %v1114
  %v1971 = vunpack.c.l.b16 %v1115
  %v1972 = vunpack.c.h.b16 %v1115
  %v1973 = vunpack.c.l.b16 %v1116
  %v1974 = vunpack.c.h.b16 %v1116
  %v1975 = vunpack.c.l.b16 %v1117
  %v1976 = vunpack.c.l.b16 %v1118
  %v1977 = vunpack.c.h.b16 %v1118
  %v1978 = vunpack.c.l.b16 %v1119
  %v1979 = vunpack.c.h.b16 %v1119
  %v1980 = vunpack.c.l.b16 %v1120
  %v1981 = vunpack.c.l.b16 %v1121
  %v1982 = vunpack.c.h.b16 %v1121
  %v1983 = vunpack.c.l.b16 %v1122
  %v1984 = vunpack.c.h.b16 %v1122
  %v1985 = vunpack.c.l.b16 %v1123
  %v1986 = vunpack.c.l.b16 %v1124
  %v1987 = vunpack.c.h.b16 %v1124
  %v1988 = vunpack.c.l.b16 %v1125
  %v1989 = vunpack.c.h.b16 %v1125
  %v1990 = vunpack.c.l.b16 %v1126
  %v1991 = vunpack.c.l.b16 %v1127
  %v1992 = vunpack.c.h.b16 %v1127
  %v1993 = vunpack.c.l.b16 %v1128
  %v1994 = vunpack.c.h.b16 %v1128
  %v1995 = vunpack.c.l.b16 %v1129
  %v1996 = vunpack.c.l.b16 %v1130
  %v1997 = vunpack.c.h.b16 %v1130
  %v1998 = vunpack.c.l.b16 %v1131
  %v1999 = vunpack.c.h.b16 %v1131
  %v2000 = vunpack.c.l.b16 %v1132
  %v2001 = vunpack.c.l.b16 %v1133
  %v2002 = vunpack.c.h.b16 %v1133
  %v2003 = vunpack.c.l.b16 %v1134
  %v2004 = vunpack.c.h.b16 %v1134
  %v2005 = vunpack.c.l.b16 %v1135
  %v2006 = vunpack.c.l.b16 %v1136
  %v2007 = vunpack.c.h.b16 %v1136
  %v2008 = vunpack.c.l.b16 %v1137
  %v2009 = vunpack.c.h.b16 %v1137
  %v2010 = vunpack.c.l.b16 %v1138
  %v2011 = vunpack.c.l.b16 %v1139
  %v2012 = vunpack.c.h.b16 %v1139
  %v2013 = vunpack.c.l.b16 %v1140
  %v2014 = vunpack.c.h.b16 %v1140
  %v2015 = vunpack.c.l.b16 %v1141
  %v2016 = vunpack.c.l.b16 %v1142
  %v2017 = vunpack.c.h.b16 %v1142
  %v2018 = vunpack.c.l.b16 %v1143
  %v2019 = vunpack.c.h.b16 %v1143
  %v2020 = vunpack.c.l.b16 %v1144
  %v2021 = vunpack.c.l.b16 %v1145
  %v2022 = vunpack.c.h.b16 %v1145
  %v2023 = vunpack.c.l.b16 %v1146
  %v2024 = vunpack.c.h.b16 %v1146
  %v2025 = vunpack.c.l.b16 %v1147
  %v2026 = vunpack.c.l.b16 %v1148
  %v2027 = vunpack.c.h.b16 %v1148
  %v2028 = vunpack.c.l.b16 %v1149
  %v2029 = vunpack.c.h.b16 %v1149
  %v2030 = vunpack.c.l.b16 %v1150
  %v2031 = vunpack.c.l.b16 %v1151
  %v2032 = vunpack.c.h.b16 %v1151
  %v2033 = vunpack.c.l.b16 %v1152
  %v2034 = vunpack.c.h.b16 %v1152
  %v2035 = vunpack.c.l.b16 %v1153
  %v2036 = vunpack.c.l.b16 %v1154
  %v2037 = vunpack.c.h.b16 %v1154
  %v2038 = vunpack.c.l.b16 %v1155
  %v2039 = vunpack.c.h.b16 %v1155
  %v2040 = vunpack.c.l.b16 %v1156
  %v2041 = vunpack.c.l.b16 %v1157
  %v2042 = vunpack.c.h.b16 %v1157
  %v2043 = vunpack.c.l.b16 %v1158
  %v2044 = vunpack.c.h.b16 %v1158
  %v2045 = vunpack.c.l.b16 %v1159
  %v2046 = vunpack.c.l.b16 %v1160
  %v2047 = vunpack.c.h.b16 %v1160
  %v2048 = vunpack.c.l.b16 %v1161
  %v2049 = vunpack.c.h.b16 %v1161
  %v2050 = vunpack.c.l.b16 %v1162
  %v2051 = vunpack.c.l.b16 %v1163
  %v2052 = vunpack.c.h.b16 %v1163
  %v2053 = vunpack.c.l.b16 %v1164
  %v2054 = vunpack.c.h.b16 %v1164
  %v2055 = vunpack.c.l.b16 %v1165
  %v2056 = vunpack.c.l.b16 %v1166
  %v2057 = vunpack.c.h.b16 %v1166
  %v2058 = vunpack.c.l.b16 %v1167
  %v2059 = vunpack.c.h.b16 %v1167
  %v2060 = vunpack.c.l.b16 %v1168
  %v2061 = vunpack.c.l.b16 %v1169
  %v2062 = vunpack.c.h.b16 %v1169
  %v2063 = vunpack.c.l.b16 %v1170
  %v2064 = vunpack.c.h.b16 %v1170
  %v2065 = vunpack.c.l.b16 %v1171
  %v2066 = vunpack.c.l.b16 %v1172
  %v2067 = vunpack.c.h.b16 %v1172
  %v2068 = vunpack.c.l.b16 %v1173
  %v2069 = vunpack.c.h.b16 %v1173
  %v2070 = vunpack.c.l.b16 %v1174
  %v2071 = vunpack.c.l.b16 %v1175
  %v2072 = vunpack.c.h.b16 %v1175
  %v2073 = vunpack.c.l.b16 %v1176
  %v2074 = vunpack.c.h.b16 %v1176
  %v2075 = vunpack.c.l.b16 %v1177
  %v2076 = vunpack.c.l.b16 %v1178
  %v2077 = vunpack.c.h.b16 %v1178
  %v2078 = vunpack.c.l.b16 %v1179
  %v2079 = vunpack.c.h.b16 %v1179
  %v2080 = vunpack.c.l.b16 %v1180
  %v2081 = vunpack.c.l.b16 %v1181
  %v2082 = vunpack.c.h.b16 %v1181
  %v2083 = vunpack.c.l.b16 %v1182
  %v2084 = vunpack.c.h.b16 %v1182
  %v2085 = vunpack.c.l.b16 %v1183
  %v2086 = vunpack.c.l.b16 %v1184
  %v2087 = vunpack.c.h.b16 %v1184
  %v2088 = vunpack.c.l.b16 %v1185
  %v2089 = vunpack.c.h.b16 %v1185
  %v2090 = vunpack.c.l.b16 %v1186
  %v2091 = vunpack.c.l.b16 %v1187
  %v2092 = vunpack.c.h.b16 %v1187
  %v2093 = vunpack.c.l.b16 %v1188
  %v2094 = vunpack.c.h.b16 %v1188
  %v2095 = vunpack.c.l.b16 %v1189
  %v2096 = vunpack.c.l.b16 %v1190
  %v2097 = vunpack.c.h.b16 %v1190
  %v2098 = vunpack.c.l.b16 %v1191
  %v2099 = vunpack.c.h.b16 %v1191
  %v2100 = vunpack.c.l.b16 %v1192
  %v2101 = vunpack.c.l.b16 %v1193
  %v2102 = vunpack.c.h.b16 %v1193
  %v2103 = vunpack.c.l.b16 %v1194
  %v2104 = vunpack.c.h.b16 %v1194
  %v2105 = vunpack.c.l.b16 %v1195
  %v2106 = vunpack.c.l.b16 %v1196
  %v2107 = vunpack.c.h.b16 %v1196
  %v2108 = vunpack.c.l.b16 %v1197
  %v2109 = vunpack.c.h.b16 %v1197
  %v2110 = vunpack.c.l.b16 %v1198
  %v2111 = vunpack.c.l.b16 %v1199
  %v2112 = vunpack.c.h.b16 %v1199
  %v2113 = vunpack.c.l.b16 %v1200
  %v2114 = vunpack.c.h.b16 %v1200
  %v2115 = vunpack.c.l.b16 %v1201
  %v2116 = vunpack.c.l.b16 %v1202
  %v2117 = vunpack.c.h.b16 %v1202
  %v2118 = vunpack.c.l.b16 %v1203
  %v2119 = vunpack.c.h.b16 %v1203
  %v2120 = vunpack.c.l.b16 %v1204
  %v2121 = vunpack.c.l.b16 %v1205
  %v2122 = vunpack.c.h.b16 %v1205
  %v2123 = vunpack.c.l.b16 %v1206
  %v2124 = vunpack.c.h.b16 %v1206
  %v2125 = vunpack.c.l.b16 %v1207
  %v2126 = vunpack.c.l.b16 %v1208
  %v2127 = vunpack.c.h.b16 %v1208
  %v2128 = vunpack.c.l.b16 %v1209
  %v2129 = vunpack.c.h.b16 %v1209
  %v2130 = vunpack.c.l.b16 %v1210
  %v2131 = vunpack.c.l.b16 %v1211
  %v2132 = vunpack.c.h.b16 %v1211
  %v2133 = vunpack.c.l.b16 %v1212
  %v2134 = vunpack.c.h.b16 %v1212
  %v2135 = vunpack.c.l.b16 %v1213
  %v2136 = vunpack.c.l.b16 %v1214
  %v2137 = vunpack.c.h.b16 %v1214
  %v2138 = vunpack.c.l.b16 %v1215
  %v2139 = vunpack.c.h.b16 %v1215
  %v2140 = vunpack.c.l.b16 %v1216
  %v2141 = vunpack.c.l.b16 %v1217
  %v2142 = vunpack.c.h.b16 %v1217
  %v2143 = vunpack.c.l.b16 %v1218
  %v2144 = vunpack.c.h.b16 %v1218
  %v2145 = vunpack.c.l.b16 %v1219
  %v2146 = vunpack.c.l.b16 %v1220
  %v2147 = vunpack.c.h.b16 %v1220
  %v2148 = vunpack.c.l.b16 %v1221
  %v2149 = vunpack.c.h.b16 %v1221
  %v2150 = vunpack.c.l.b16 %v1222
  %v2151 = vunpack.c.l.b16 %v1223
  %v2152 = vunpack.c.h.b16 %v1223
  %v2153 = vunpack.c.l.b16 %v1224
  %v2154 = vunpack.c.h.b16 %v1224
  %v2155 = vunpack.c.l.b16 %v1225
  %v2156 = vunpack.c.l.b16 %v1226
  %v2157 = vunpack.c.h.b16 %v1226
  %v2158 = vunpack.c.l.b16 %v1227
  %v2159 = vunpack.c.h.b16 %v1227
  %v2160 = vunpack.c.l.b16 %v1228
  %v2161 = vunpack.c.l.b16 %v1229
  %v2162 = vunpack.c.h.b16 %v1229
  %v2163 = vunpack.c.l.b16 %v1230
  %v2164 = vunpack.c.h.b16 %v1230
  %v2165 = vunpack.c.l.b16 %v1231
  %v2166 = vunpack.c.l.b16 %v1232
  %v2167 = vunpack.c.h.b16 %v1232
  %v2168 = vunpack.c.l.b16 %v1233
  %v2169 = vunpack.c.h.b16 %v1233
  %v2170 = vunpack.c.l.b16 %v1234
  %v2171 = vunpack.c.l.b16 %v1235
  %v2172 = vunpack.c.h.b16 %v1235
  %v2173 = vunpack.c.l.b16 %v1236
  %v2174 = vunpack.c.h.b16 %v1236
  %v2175 = vunpack.c.l.b16 %v1237
  %v2176 = vunpack.c.l.b16 %v1238
  %v2177 = vunpack.c.h.b16 %v1238
  %v2178 = vunpack.c.l.b16 %v1239
  %v2179 = vunpack.c.h.b16 %v1239
  %v2180 = vunpack.c.l.b16 %v1240
  %v2181 = vunpack.c.l.b16 %v1241
  %v2182 = vunpack.c.h.b16 %v1241
  %v2183 = vunpack.c.l.b16 %v1242
  %v2184 = vunpack.c.h.b16 %v1242
  %v2185 = vunpack.c.l.b16 %v1243
  %v2186 = vunpack.c.l.b16 %v1244
  %v2187 = vunpack.c.h.b16 %v1244
  %v2188 = vunpack.c.l.b16 %v1245
  %v2189 = vunpack.c.h.b16 %v1245
  %v2190 = vunpack.c.l.b16 %v1246
  %v2191 = vunpack.c.l.b16 %v1247
  %v2192 = vunpack.c.h.b16 %v1247
  %v2193 = vunpack.c.l.b16 %v1248
  %v2194 = vunpack.c.h.b16 %v1248
  %v2195 = vunpack.c.l.b16 %v1249
  %v2196 = vunpack.c.l.b16 %v1250
  %v2197 = vunpack.c.h.b16 %v1250
  %v2198 = vunpack.c.l.b16 %v1251
  %v2199 = vunpack.c.h.b16 %v1251
  %v2200 = vunpack.c.l.b16 %v1252
  %v2201 = vunpack.c.l.b16 %v1253
  %v2202 = vunpack.c.h.b16 %v1253
  %v2203 = vunpack.c.l.b16 %v1254
  %v2204 = vunpack.c.h.b16 %v1254
  %v2205 = vunpack.c.l.b16 %v1255
  %v2206 = vunpack.c.l.b16 %v1256
  %v2207 = vunpack.c.h.b16 %v1256
  %v2208 = vunpack.c.l.b16 %v1257
  %v2209 = vunpack.c.h.b16 %v1257
  %v2210 = vunpack.c.l.b16 %v1258
  %v2211 = vunpack.c.l.b16 %v1259
  %v2212 = vunpack.c.h.b16 %v1259
  %v2213 = vunpack.c.l.b16 %v1260
  %v2214 = vunpack.c.h.b16 %v1260
  %v2215 = vunpack.c.l.b16 %v1261
  %v2216 = vunpack.c.l.b16 %v1262
  %v2217 = vunpack.c.h.b16 %v1262
  %v2218 = vunpack.c.l.b16 %v1263
  %v2219 = vunpack.c.h.b16 %v1263
  %v2220 = vunpack.c.l.b16 %v1264
  %v2221 = vunpack.c.l.b16 %v1265
  %v2222 = vunpack.c.h.b16 %v1265
  %v2223 = vunpack.c.l.b16 %v1266
  %v2224 = vunpack.c.h.b16 %v1266
  %v2225 = vunpack.c.l.b16 %v1267
  %v2226 = vunpack.c.l.b16 %v1268
  %v2227 = vunpack.c.h.b16 %v1268
  %v2228 = vunpack.c.l.b16 %v1269
  %v2229 = vunpack.c.h.b16 %v1269
  %v2230 = vunpack.c.l.b16 %v1270
  %v2231 = vunpack.c.l.b16 %v1271
  %v2232 = vunpack.c.h.b16 %v1271
  %v2233 = vunpack.c.l.b16 %v1272
  %v2234 = vunpack.c.h.b16 %v1272
  %v2235 = vunpack.c.l.b16 %v1273
  %v2236 = vunpack.c.l.b16 %v1274
  %v2237 = vunpack.c.h.b16 %v1274
  %v2238 = vunpack.c.l.b16 %v1275
  %v2239 = vunpack.c.h.b16 %v1275
  %v2240 = vunpack.c.l.b16 %v1276
  %v2241 = vunpack.c.l.b16 %v1277
  %v2242 = vunpack.c.h.b16 %v1277
  %v2243 = vunpack.c.l.b16 %v1278
  %v2244 = vunpack.c.h.b16 %v1278
  %v2245 = vunpack.c.l.b16 %v1279
  %v2246 = vunpack.c.l.b16 %v1280
  %v2247 = vunpack.c.h.b16 %v1280
  %v2248 = vunpack.c.l.b16 %v1281
  %v2249 = vunpack.c.h.b16 %v1281
  %v2250 = vunpack.c.l.b16 %v1282
  %v2251 = vunpack.c.l.b16 %v1283
  %v2252 = vunpack.c.h.b16 %v1283
  %v2253 = vunpack.c.l.b16 %v1284
  %v2254 = vunpack.c.h.b16 %v1284
  %v2255 = vunpack.c.l.b16 %v1285
  %v2256 = vunpack.c.l.b16 %v1286
  %v2257 = vunpack.c.h.b16 %v1286
  %v2258 = vunpack.c.l.b16 %v1287
  %v2259 = vunpack.c.h.b16 %v1287
  %v2260 = vunpack.c.l.b16 %v1288
  %v2261 = vunpack.c.l.b16 %v1289
  %v2262 = vunpack.c.h.b16 %v1289
  %v2263 = vunpack.c.l.b16 %v1290
  %v2264 = vunpack.c.h.b16 %v1290
  %v2265 = vunpack.c.l.b16 %v1291
  %v2266 = vunpack.c.l.b16 %v1292
  %v2267 = vunpack.c.h.b16 %v1292
  %v2268 = vunpack.c.l.b16 %v1293
  %v2269 = vunpack.c.h.b16 %v1293
  %v2270 = vunpack.c.l.b16 %v1294
  %v2271 = vunpack.c.l.b16 %v1295
  %v2272 = vunpack.c.h.b16 %v1295
  %v2273 = vunpack.c.l.b16 %v1296
  %v2274 = vunpack.c.h.b16 %v1296
  %v2275 = vunpack.c.l.b16 %v1297
  %v2276 = vunpack.c.l.b16 %v1298
  %v2277 = vunpack.c.h.b16 %v1298
  %v2278 = vunpack.c.l.b16 %v1299
  %v2279 = vunpack.c.h.b16 %v1299
  %v2280 = vunpack.c.l.b16 %v1300
  %v2281 = vunpack.c.l.b16 %v1301
  %v2282 = vunpack.c.h.b16 %v1301
  %v2283 = vunpack.c.l.b16 %v1302
  %v2284 = vunpack.c.h.b16 %v1302
  %v2285 = vunpack.c.l.b16 %v1303
  %v2286 = vunpack.c.l.b16 %v1304
  %v2287 = vunpack.c.h.b16 %v1304
  %v2288 = vunpack.c.l.b16 %v1305
  %v2289 = vunpack.c.h.b16 %v1305
  %v2290 = vunpack.c.l.b16 %v1306
  %v2291 = vunpack.c.l.b16 %v1307
  %v2292 = vunpack.c.h.b16 %v1307
  %v2293 = vunpack.c.l.b16 %v1308
  %v2294 = vunpack.c.h.b16 %v1308
  %v2295 = vunpack.c.l.b16 %v1309
  %v2296 = vunpack.c.l.b16 %v1310
  %v2297 = vunpack.c.h.b16 %v1310
  %v2298 = vunpack.c.l.b16 %v1311
  %v2299 = vunpack.c.h.b16 %v1311
  %v2300 = vunpack.c.l.b16 %v1312
  %v2301 = vunpack.c.l.b16 %v1313
  %v2302 = vunpack.c.h.b16 %v1313
  %v2303 = vunpack.c.l.b16 %v1314
  %v2304 = vunpack.c.h.b16 %v1314
  %v2305 = vunpack.c.l.b16 %v1315
  %v2306 = vunpack.c.l.b16 %v1316
  %v2307 = vunpack.c.h.b16 %v1316
  %v2308 = vunpack.c.l.b16 %v1317
  %v2309 = vunpack.c.h.b16 %v1317
  %v2310 = vunpack.c.l.b16 %v1318
  %v2311 = vunpack.c.l.b16 %v1319
  %v2312 = vunpack.c.h.b16 %v1319
  %v2313 = vunpack.c.l.b16 %v1320
  %v2314 = vunpack.c.h.b16 %v1320
  %v2315 = vunpack.c.l.b16 %v1321
  %v2316 = vunpack.c.l.b16 %v1322
  %v2317 = vunpack.c.h.b16 %v1322
  %v2318 = vunpack.c.l.b16 %v1323
  %v2319 = vunpack.c.h.b16 %v1323
  %v2320 = vunpack.c.l.b16 %v1324
  %v2321 = vunpack.c.l.b16 %v1325
  %v2322 = vunpack.c.h.b16 %v1325
  %v2323 = vunpack.c.l.b16 %v1326
  %v2324 = vunpack.c.h.b16 %v1326
  %v2325 = vunpack.c.l.b16 %v1327
  %v2326 = vunpack.c.l.b16 %v1328
  %v2327 = vunpack.c.h.b16 %v1328
  %v2328 = vunpack.c.l.b16 %v1329
  %v2329 = vunpack.c.h.b16 %v1329
  %v2330 = vunpack.c.l.b16 %v1330
  %v2331 = vunpack.c.l.b16 %v1331
  %v2332 = vunpack.c.h.b16 %v1331
  %v2333 = vunpack.c.l.b16 %v1332
  %v2334 = vunpack.c.h.b16 %v1332
  %v2335 = vunpack.c.l.b16 %v1333
  %v2336 = vunpack.c.l.b16 %v1334
  %v2337 = vunpack.c.h.b16 %v1334
  %v2338 = vunpack.c.l.b16 %v1335
  %v2339 = vunpack.c.h.b16 %v1335
  %v2340 = vunpack.c.l.b16 %v1336
  %v2341 = vunpack.c.l.b16 %v1337
  %v2342 = vunpack.c.h.b16 %v1337
  %v2343 = vunpack.c.l.b16 %v1338
  %v2344 = vunpack.c.h.b16 %v1338
  %v2345 = vunpack.c.l.b16 %v1339
  %v2346 = vunpack.c.l.b16 %v1340
  %v2347 = vunpack.c.h.b16 %v1340
  %v2348 = vunpack.c.l.b16 %v1341
  %v2349 = vunpack.c.h.b16 %v1341
  %v2350 = vunpack.c.l.b16 %v1342
  %v2351 = vunpack.c.l.b16 %v1343
  %v2352 = vunpack.c.h.b16 %v1343
  %v2353 = vunpack.c.l.b16 %v1344
  %v2354 = vunpack.c.h.b16 %v1344
  %v2355 = vunpack.c.l.b16 %v1345
  %v2356 = vunpack.c.l.b16 %v1346
  %v2357 = vunpack.c.h.b16 %v1346
  %v2358 = vunpack.c.l.b16 %v1347
  %v2359 = vunpack.c.h.b16 %v1347
  %v2360 = vunpack.c.l.b16 %v1348
  %v2361 = vunpack.c.l.b16 %v1349
  %v2362 = vunpack.c.h.b16 %v1349
  %v2363 = vunpack.c.l.b16 %v1350
  %v2364 = vunpack.c.h.b16 %v1350
  %v2365 = vunpack.c.l.b16 %v1351
  %v2366 = vunpack.c.l.b16 %v1352
  %v2367 = vunpack.c.h.b16 %v1352
  %v2368 = vunpack.c.l.b16 %v1353
  %v2369 = vunpack.c.h.b16 %v1353
  %v2370 = vunpack.c.l.b16 %v1354
  %v2371 = vunpack.c.l.b16 %v1355
  %v2372 = vunpack.c.h.b16 %v1355
  %v2373 = vunpack.c.l.b16 %v1356
  %v2374 = vunpack.c.h.b16 %v1356
  %v2375 = vunpack.c.l.b16 %v1357
  %v2376 = vunpack.c.l.b16 %v1358
  %v2377 = vunpack.c.h.b16 %v1358
  %v2378 = vunpack.c.l.b16 %v1359
  %v2379 = vunpack.c.h.b16 %v1359
  %v2380 = vunpack.c.l.b16 %v1360
  %v2381 = vunpack.c.l.b16 %v1361
  %v2382 = vunpack.c.h.b16 %v1361
  %v2383 = vunpack.c.l.b16 %v1362
  %v2384 = vunpack.c.h.b16 %v1362
  %v2385 = vunpack.c.l.b16 %v1363
  %v2386 = vunpack.c.l.b16 %v1364
  %v2387 = vunpack.c.h.b16 %v1364
  %v2388 = vunpack.c.l.b16 %v1365
  %v2389 = vunpack.c.h.b16 %v1365
  %v2390 = vunpack.c.l.b16 %v1366
  %v2391 = vunpack.c.l.b16 %v1367
  %v2392 = vunpack.c.h.b16 %v1367
  %v2393 = vunpack.c.l.b16 %v1368
  %v2394 = vunpack.c.h.b16 %v1368
  %v2395 = vunpack.c.l.b16 %v1369
  %v2396 = vunpack.c.l.b16 %v1370
  %v2397 = vunpack.c.h.b16 %v1370
  %v2398 = vunpack.c.l.b16 %v1371
  %v2399 = vunpack.c.h.b16 %v1371
  %v2400 = vunpack.c.l.b16 %v1372
  %v2401 = vunpack.c.l.b16 %v1373
  %v2402 = vunpack.c.h.b16 %v1373
  %v2403 = vunpack.c.l.b16 %v1374
  %v2404 = vunpack.c.h.b16 %v1374
  %v2405 = vunpack.c.l.b16 %v1375
  %v2406 = vunpack.c.l.b16 %v1376
  %v2407 = vunpack.c.h.b16 %v1376
  %v2408 = vunpack.c.l.b16 %v1377
  %v2409 = vunpack.c.h.b16 %v1377
  %v2410 = vunpack.c.l.b16 %v1378
  %v2411 = vunpack.c.l.b16 %v1379
  %v2412 = vunpack.c.h.b16 %v1379
  %v2413 = vunpack.c.l.b16 %v1380
  %v2414 = vunpack.c.h.b16 %v1380
  %v2415 = vunpack.c.l.b16 %v1381
  %v2416 = vunpack.c.l.b16 %v1382
  %v2417 = vunpack.c.h.b16 %v1382
  %v2418 = vunpack.c.l.b16 %v1383
  %v2419 = vunpack.c.h.b16 %v1383
  %v2420 = vunpack.c.l.b16 %v1384
  %v2421 = vunpack.c.l.b16 %v1385
  %v2422 = vunpack.c.h.b16 %v1385
  %v2423 = vunpack.c.l.b16 %v1386
  %v2424 = vunpack.c.h.b16 %v1386
  %v2425 = vunpack.c.l.b16 %v1387
  %v2426 = vunpack.c.l.b16 %v1388
  %v2427 = vunpack.c.h.b16 %v1388
  %v2428 = vunpack.c.l.b16 %v1389
  %v2429 = vunpack.c.h.b16 %v1389
  %v2430 = vunpack.c.l.b16 %v1390
  %v2431 = vunpack.c.l.b16 %v1391
  %v2432 = vunpack.c.h.b16 %v1391
  %v2433 = vunpack.c.l.b16 %v1392
  %v2434 = vunpack.c.h.b16 %v1392
  %v2435 = vunpack.c.l.b16 %v1393
  %v2436 = vunpack.c.l.b16 %v1394
  %v2437 = vunpack.c.h.b16 %v1394
  %v2438 = vunpack.c.l.b16 %v1395
  %v2439 = vunpack.c.h.b16 %v1395
  %v2440 = vunpack.c.l.b16 %v1396
  %v2441 = vunpack.c.l.b16 %v1397
  %v2442 = vunpack.c.h.b16 %v1397
  %v2443 = vunpack.c.l.b16 %v1398
  %v2444 = vunpack.c.h.b16 %v1398
  %v2445 = vunpack.c.l.b16 %v1399
  %v2446 = vunpack.c.l.b16 %v1400
  %v2447 = vunpack.c.h.b16 %v1400
  %v2448 = vunpack.c.l.b16 %v1401
  %v2449 = vunpack.c.h.b16 %v1401
  %v2450 = vunpack.c.l.b16 %v1402
  %v2451 = vunpack.c.l.b16 %v1403
  %v2452 = vunpack.c.h.b16 %v1403
  %v2453 = vunpack.c.l.b16 %v1404
  %v2454 = vunpack.c.h.b16 %v1404
  %v2455 = vunpack.c.l.b16 %v1405
  %v2456 = vunpack.c.l.b16 %v1406
  %v2457 = vunpack.c.h.b16 %v1406
  %v2458 = vunpack.c.l.b16 %v1407
  %v2459 = vunpack.c.h.b16 %v1407
  %v2460 = vunpack.c.l.b16 %v1408
  %v2461 = vunpack.c.l.b16 %v1409
  %v2462 = vunpack.c.h.b16 %v1409
  %v2463 = vunpack.c.l.b16 %v1410
  %v2464 = vunpack.c.h.b16 %v1410
  %v2465 = vunpack.c.l.b16 %v1411
  %v2466 = vunpack.c.l.b16 %v1412
  %v2467 = vunpack.c.h.b16 %v1412
  %v2468 = vunpack.c.l.b16 %v1413
  %v2469 = vunpack.c.h.b16 %v1413
  %v2470 = vunpack.c.l.b16 %v1414
  %v2471 = vunpack.c.l.b16 %v1415
  %v2472 = vunpack.c.h.b16 %v1415
  %v2473 = vunpack.c.l.b16 %v1416
  %v2474 = vunpack.c.h.b16 %v1416
  %v2475 = vunpack.c.l.b16 %v1417
  %v2476 = vunpack.c.l.b16 %v1418
  %v2477 = vunpack.c.h.b16 %v1418
  %v2478 = vunpack.c.l.b16 %v1419
  %v2479 = vunpack.c.h.b16 %v1419
  %v2480 = vunpack.c.l.b16 %v1420
  %v2481 = vunpack.c.l.b16 %v1421
  %v2482 = vunpack.c.h.b16 %v1421
  %v2483 = vunpack.c.l.b16 %v1422
  %v2484 = vunpack.c.h.b16 %v1422
  %v2485 = vunpack.c.l.b16 %v1423
  %v2486 = vunpack.c.l.b16 %v1424
  %v2487 = vunpack.c.h.b16 %v1424
  %v2488 = vunpack.c.l.b16 %v1425
  %v2489 = vunpack.c.h.b16 %v1425
  %v2490 = vunpack.c.l.b16 %v1426
  %v2491 = vunpack.c.l.b16 %v1427
  %v2492 = vunpack.c.h.b16 %v1427
  %v2493 = vunpack.c.l.b16 %v1428
  %v2494 = vunpack.c.h.b16 %v1428
  %v2495 = vunpack.c.l.b16 %v1429
  %v2496 = vunpack.c.l.b16 %v1430
  %v2497 = vunpack.c.h.b16 %v1430
  %v2498 = vunpack.c.l.b16 %v1431
  %v2499 = vunpack.c.h.b16 %v1431
  %v2500 = vunpack.c.l.b16 %v1432
  %v2501 = vunpack.c.l.b16 %v1433
  %v2502 = vunpack.c.h.b16 %v1433
  %v2503 = vunpack.c.l.b16 %v1434
  %v2504 = vunpack.c.h.b16 %v1434
  %v2505 = vunpack.c.l.b16 %v1435
  %v2506 = vunpack.c.l.b16 %v1436
  %v2507 = vunpack.c.h.b16 %v1436
  %v2508 = vunpack.c.l.b16 %v1437
  %v2509 = vunpack.c.h.b16 %v1437
  %v2510 = vunpack.c.l.b16 %v1438
  %v2511 = vunpack.c.l.b16 %v1439
  %v2512 = vunpack.c.h.b16 %v1439
  %v2513 = vunpack.c.l.b16 %v1440
  %v2514 = vunpack.c.h.b16 %v1440
  %v2515 = vunpack.c.l.b16 %v1441
  %v2516 = vunpack.c.l.b16 %v1442
  %v2517 = vunpack.c.h.b16 %v1442
  %v2518 = vunpack.c.l.b16 %v1443
  %v2519 = vunpack.c.h.b16 %v1443
  %v2520 = vunpack.c.l.b16 %v1444
  %v2521 = vunpack.c.l.b16 %v1445
  %v2522 = vunpack.c.h.b16 %v1445
  %v2523 = vunpack.c.l.b16 %v1446
  %v2524 = vunpack.c.h.b16 %v1446
  %v2525 = vunpack.c.l.b16 %v1447
  %v2526 = vunpack.c.l.b16 %v1448
  %v2527 = vunpack.c.h.b16 %v1448
  %v2528 = vunpack.c.l.b16 %v1449
  %v2529 = vunpack.c.h.b16 %v1449
  %v2530 = vunpack.c.l.b16 %v1450
  %v2531 = vunpack.c.l.b16 %v1451
  %v2532 = vunpack.c.h.b16 %v1451
  %v2533 = vunpack.c.l.b16 %v1452
  %v2534 = vunpack.c.h.b16 %v1452
  %v2535 = vunpack.c.l.b16 %v1453
  %v2536 = vunpack.c.l.b16 %v1454
  %v2537 = vunpack.c.h.b16 %v1454
  %v2538 = vunpack.c.l.b16 %v1455
  %v2539 = vunpack.c.h.b16 %v1455
  %v2540 = vunpack.c.l.b16 %v1456
  %v2541 = vunpack.c.l.b16 %v1457
  %v2542 = vunpack.c.h.b16 %v1457
  %v2543 = vunpack.c.l.b16 %v1458
  %v2544 = vunpack.c.h.b16 %v1458
  %v2545 = vunpack.c.l.b16 %v1459
  %v2546 = vunpack.c.l.b16 %v1460
  %v2547 = vunpack.c.h.b16 %v1460
  %v2548 = vunpack.c.l.b16 %v1461
  %v2549 = vunpack.c.h.b16 %v1461
  %v2550 = vunpack.c.l.b16 %v1462
  %v2551 = vunpack.c.l.b16 %v1463
  %v2552 = vunpack.c.h.b16 %v1463
  %v2553 = vunpack.c.l.b16 %v1464
  %v2554 = vunpack.c.h.b16 %v1464
  %v2555 = vunpack.c.l.b16 %v1465
  %v2556 = vunpack.c.l.b16 %v1466
  %v2557 = vunpack.c.h.b16 %v1466
  %v2558 = vunpack.c.l.b16 %v1467
  %v2559 = vunpack.c.h.b16 %v1467
  %v2560 = vunpack.c.l.b16 %v1468
  %v2561 = vpack.c.b16 %v1891, %v1886
  %v2562 = vpack.c.b16 %v1892, %v1887
  %v2563 = vpack.c.b16 %v1893, %v1888
  %v2564 = vpack.c.b16 %v1894, %v1889
  %v2565 = vpack.c.b16 %v1895, %v1890
  %v2566 = vpack.c.b16 %v1901, %v1896
  %v2567 = vpack.c.b16 %v1902, %v1897
  %v2568 = vpack.c.b16 %v1903, %v1898
  %v2569 = vpack.c.b16 %v1904, %v1899
  %v2570 = vpack.c.b16 %v1905, %v1900
  %v2571 = vpack.c.b16 %v1911, %v1906
  %v2572 = vpack.c.b16 %v1912, %v1907
  %v2573 = vpack.c.b16 %v1913, %v1908
  %v2574 = vpack.c.b16 %v1914, %v1909
  %v2575 = vpack.c.b16 %v1915, %v1910
  %v2576 = vpack.c.b16 %v1921, %v1916
  %v2577 = vpack.c.b16 %v1922, %v1917
  %v2578 = vpack.c.b16 %v1923, %v1918
  %v2579 = vpack.c.b16 %v1924, %v1919
  %v2580 = vpack.c.b16 %v1925, %v1920
  %v2581 = vpack.c.b16 %v1931, %v1926
  %v2582 = vpack.c.b16 %v1932, %v1927
  %v2583 = vpack.c.b16 %v1933, %v1928
  %v2584 = vpack.c.b16 %v1934, %v1929
  %v2585 = vpack.c.b16 %v1935, %v1930
  %v2586 = vpack.c.b16 %v1941, %v1936
  %v2587 = vpack.c.b16 %v1942, %v1937
  %v2588 = vpack.c.b16 %v1943, %v1938
  %v2589 = vpack.c.b16 %v1944, %v1939
  %v2590 = vpack.c.b16 %v1945, %v1940
  %v2591 = vpack.c.b16 %v1951, %v1946
  %v2592 = vpack.c.b16 %v1952, %v1947
  %v2593 = vpack.c.b16 %v1953, %v1948
  %v2594 = vpack.c.b16 %v1954, %v1949
  %v2595 = vpack.c.b16 %v1955, %v1950
  %v2596 = vpack.c.b16 %v1961, %v1956
  %v2597 = vpack.c.b16 %v1962, %v1957
  %v2598 = vpack.c.b16 %v1963, %v1958
  %v2599 = vpack.c.b16 %v1964, %v1959
  %v2600 = vpack.c.b16 %v1965, %v1960
  %v2601 = vpack.c.b16 %v1971, %v1966
  %v2602 = vpack.c.b16 %v1972, %v1967
  %v2603 = vpack.c.b16 %v1973, %v1968
  %v2604 = vpack.c.b16 %v1974, %v1969
  %v2605 = vpack.c.b16 %v1975, %v1970
  %v2606 = vpack.c.b16 %v1981, %v1976
  %v2607 = vpack.c.b16 %v1982, %v1977
  %v2608 = vpack.c.b16 %v1983, %v1978
  %v2609 = vpack.c.b16 %v1984, %v1979
  %v2610 = vpack.c.b16 %v1985, %v1980
  %v2611 = vpack.c.b16 %v1991, %v1986
  %v2612 = vpack.c.b16 %v1992, %v1987
  %v2613 = vpack.c.b16 %v1993, %v1988
  %v2614 = vpack.c.b16 %v1994, %v1989
  %v2615 = vpack.c.b16 %v1995, %v1990
  %v2616 = vpack.c.b16 %v2001, %v1996
  %v2617 = vpack.c.b16 %v2002, %v1997
  %v2618 = vpack.c.b16 %v2003, %v1998
  %v2619 = vpack.c.b16 %v2004, %v1999
  %v2620 = vpack.c.b16 %v2005, %v2000
  %v2621 = vpack.c.b16 %v2011, %v2006
  %v2622 = vpack.c.b16 %v2012, %v2007
  %v2623 = vpack.c.b16 %v2013, %v2008
  %v2624 = vpack.c.b16 %v2014, %v2009
  %v2625 = vpack.c.b16 %v2015, %v2010
  %v2626 = vpack.c.b16 %v2021, %v2016
  %v2627 = vpack.c.b16 %v2022, %v2017
  %v2628 = vpack.c.b16 %v2023, %v2018
  %v2629 = vpack.c.b16 %v2024, %v2019
  %v2630 = vpack.c.b16 %v2025, %v2020
  %v2631 = vpack.c.b16 %v2031, %v2026
  %v2632 = vpack.c.b16 %v2032, %v2027
  %v2633 = vpack.c.b16 %v2033, %v2028
  %v2634 = vpack.c.b16 %v2034, %v2029
  %v2635 = vpack.c.b16 %v2035, %v2030
  %v2636 = vpack.c.b16 %v2041, %v2036
  %v2637 = vpack.c.b16 %v2042, %v2037
  %v2638 = vpack.c.b16 %v2043, %v2038
  %v2639 = vpack.c.b16 %v2044, %v2039
  %v2640 = vpack.c.b16 %v2045, %v2040
  %v2641 = vpack.c.b16 %v2051, %v2046
  %v2642 = vpack.c.b16 %v2052, %v2047
  %v2643 = vpack.c.b16 %v2053, %v2048
  %v2644 = vpack.c.b16 %v2054, %v2049
  %v2645 = vpack.c.b16 %v2055, %v2050
  %v2646 = vpack.c.b16 %v2061, %v2056
  %v2647 = vpack.c.b16 %v2062, %v2057
  %v2648 = vpack.c.b16 %v2063, %v2058
  %v2649 = vpack.c.b16 %v2064, %v2059
  %v2650 = vpack.c.b16 %v2065, %v2060
  %v2651 = vpack.c.b16 %v2071, %v2066
  %v2652 = vpack.c.b16 %v2072, %v2067
  %v2653 = vpack.c.b16 %v2073, %v2068
  %v2654 = vpack.c.b16 %v2074, %v2069
  %v2655 = vpack.c.b16 %v2075, %v2070
  %v2656 = vpack.c.b16 %v2081, %v2076
  %v2657 = vpack.c.b16 %v2082, %v2077
  %v2658 = vpack.c.b16 %v2083, %v2078
  %v2659 = vpack.c.b16 %v2084, %v2079
  %v2660 = vpack.c.b16 %v2085, %v2080
  %v2661 = vpack.c.b16 %v2091, %v2086
  %v2662 = vpack.c.b16 %v2092, %v2087
  %v2663 = vpack.c.b16 %v2093, %v2088
  %v2664 = vpack.c.b16 %v2094, %v2089
  %v2665 = vpack.c.b16 %v2095, %v2090
  %v2666 = vpack.c.b16 %v2101, %v2096
  %v2667 = vpack.c.b16 %v2102, %v2097
  %v2668 = vpack.c.b16 %v2103, %v2098
  %v2669 = vpack.c.b16 %v2104, %v2099
  %v2670 = vpack.c.b16 %v2105, %v2100
  %v2671 = vpack.c.b16 %v2111, %v2106
  %v2672 = vpack.c.b16 %v2112, %v2107
  %v2673 = vpack.c.b16 %v2113, %v2108
  %v2674 = vpack.c.b16 %v2114, %v2109
  %v2675 = vpack.c.b16 %v2115, %v2110
  %v2676 = vpack.c.b16 %v2121, %v2116
  %v2677 = vpack.c.b16 %v2122, %v2117
  %v2678 = vpack.c.b16 %v2123, %v2118
  %v2679 = vpack.c.b16 %v2124, %v2119
  %v2680 = vpack.c.b16 %v2125, %v2120
  %v2681 = vpack.c.b16 %v2131, %v2126
  %v2682 = vpack.c.b16 %v2132, %v2127
  %v2683 = vpack.c.b16 %v2133, %v2128
  %v2684 = vpack.c.b16 %v2134, %v2129
  %v2685 = vpack.c.b16 %v2135, %v2130
  %v2686 = vpack.c.b16 %v2141, %v2136
  %v2687 = vpack.c.b16 %v2142, %v2137
  %v2688 = vpack.c.b16 %v2143, %v2138
  %v2689 = vpack.c.b16 %v2144, %v2139
  %v2690 = vpack.c.b16 %v2145, %v2140
  %v2691 = vpack.c.b16 %v2151, %v2146
  %v2692 = vpack.c.b16 %v2152, %v2147
  %v2693 = vpack.c.b16 %v2153, %v2148
  %v2694 = vpack.c.b16 %v2154, %v2149
  %v2695 = vpack.c.b16 %v2155, %v2150
  %v2696 = vpack.c.b16 %v2161, %v2156
  %v2697 = vpack.c.b16 %v2162, %v2157
  %v2698 = vpack.c.b16 %v2163, %v2158
  %v2699 = vpack.c.b16 %v2164, %v2159
  %v2700 = vpack.c.b16 %v2165, %v2160
  %v2701 = vpack.c.b16 %v2171, %v2166
  %v2702 = vpack.c.b16 %v2172, %v2167
  %v2703 = vpack.c.b16 %v2173, %v2168
  %v2704 = vpack.c.b16 %v2174, %v2169
  %v2705 = vpack.c.b16 %v2175, %v2170
  %v2706 = vpack.c.b16 %v2181, %v2176
  %v2707 = vpack.c.b16 %v2182, %v2177
  %v2708 = vpack.c.b16 %v2183, %v2178
  %v2709 = vpack.c.b16 %v2184, %v2179
  %v2710 = vpack.c.b16 %v2185, %v2180
  %v2711 = vpack.c.b16 %v2191, %v2186
  %v2712 = vpack.c.b16 %v2192, %v2187
  %v2713 = vpack.c.b16 %v2193, %v2188
  %v2714 = vpack.c.b16 %v2194, %v2189
  %v2715 = vpack.c.b16 %v2195, %v2190
  %v2716 = vpack.c.b16 %v2201, %v2196
  %v2717 = vpack.c.b16 %v2202, %v2197
  %v2718 = vpack.c.b16 %v2203, %v2198
  %v2719 = vpack.c.b16 %v2204, %v2199
  %v2720 = vpack.c.b16 %v2205, %v2200
  %v2721 = vpack.c.b16 %v2211, %v2206
  %v2722 = vpack.c.b16 %v2212, %v2207
  %v2723 = vpack.c.b16 %v2213, %v2208
  %v2724 = vpack.c.b16 %v2214, %v2209
  %v2725 = vpack.c.b16 %v2215, %v2210
  %v2726 = vpack.c.b16 %v2221, %v2216
  %v2727 = vpack.c.b16 %v2222, %v2217
  %v2728 = vpack.c.b16 %v2223, %v2218
  %v2729 = vpack.c.b16 %v2224, %v2219
  %v2730 = vpack.c.b16 %v2225, %v2220
  %v2731 = vpack.c.b16 %v2231, %v2226
  %v2732 = vpack.c.b16 %v2232, %v2227
  %v2733 = vpack.c.b16 %v2233, %v2228
  %v2734 = vpack.c.b16 %v2234, %v2229
  %v2735 = vpack.c.b16 %v2235, %v2230
  %v2736 = vpack.c.b16 %v2241, %v2236
  %v2737 = vpack.c.b16 %v2242, %v2237
  %v2738 = vpack.c.b16 %v2243, %v2238
  %v2739 = vpack.c.b16 %v2244, %v2239
  %v2740 = vpack.c.b16 %v2245, %v2240
  %v2741 = vpack.c.b16 %v2251, %v2246
  %v2742 = vpack.c.b16 %v2252, %v2247
  %v2743 = vpack.c.b16 %v2253, %v2248
  %v2744 = vpack.c.b16 %v2254, %v2249
  %v2745 = vpack.c.b16 %v2255, %v2250
  %v2746 = vpack.c.b16 %v2261, %v2256
  %v2747 = vpack.c.b16 %v2262, %v2257
  %v2748 = vpack.c.b16 %v2263, %v2258
  %v2749 = vpack.c.b16 %v2264, %v2259
  %v2750 = vpack.c.b16 %v2265, %v2260
  %v2751 = vpack.c.b16 %v2271, %v2266
  %v2752 = vpack.c.b16 %v2272, %v2267
  %v2753 = vpack.c.b16 %v2273, %v2268
  %v2754 = vpack.c.b16 %v2274, %v2269
  %v2755 = vpack.c.b16 %v2275, %v2270
  %v2756 = vpack.c.b16 %v2281, %v2276
  %v2757 = vpack.c.b16 %v2282, %v2277
  %v2758 = vpack.c.b16 %v2283, %v2278
  %v2759 = vpack.c.b16 %v2284, %v2279
  %v2760 = vpack.c.b16 %v2285, %v2280
  %v2761 = vpack.c.b16 %v2291, %v2286
  %v2762 = vpack.c.b16 %v2292, %v2287
  %v2763 = vpack.c.b16 %v2293, %v2288
  %v2764 = vpack.c.b16 %v2294, %v2289
  %v2765 = vpack.c.b16 %v2295, %v2290
  %v2766 = vpack.c.b16 %v2301, %v2296
  %v2767 = vpack.c.b16 %v2302, %v2297
  %v2768 = vpack.c.b16 %v2303, %v2298
  %v2769 = vpack.c.b16 %v2304, %v2299
  %v2770 = vpack.c.b16 %v2305, %v2300
  %v2771 = vpack.c.b16 %v2311, %v2306
  %v2772 = vpack.c.b16 %v2312, %v2307
  %v2773 = vpack.c.b16 %v2313, %v2308
  %v2774 = vpack.c.b16 %v2314, %v2309
  %v2775 = vpack.c.b16 %v2315, %v2310
  %v2776 = vpack.c.b16 %v2321, %v2316
  %v2777 = vpack.c.b16 %v2322, %v2317
  %v2778 = vpack.c.b16 %v2323, %v2318
  %v2779 = vpack.c.b16 %v2324, %v2319
  %v2780 = vpack.c.b16 %v2325, %v2320
  %v2781 = vpack.c.b16 %v2331, %v2326
  %v2782 = vpack.c.b16 %v2332, %v2327
  %v2783 = vpack.c.b16 %v2333, %v2328
  %v2784 = vpack.c.b16 %v2334, %v2329
  %v2785 = vpack.c.b16 %v2335, %v2330
  %v2786 = vpack.c.b16 %v2341, %v2336
  %v2787 = vpack.c.b16 %v2342, %v2337
  %v2788 = vpack.c.b16 %v2343, %v2338
  %v2789 = vpack.c.b16 %v2344, %v2339
  %v2790 = vpack.c.b16 %v2345, %v2340
  %v2791 = vpack.c.b16 %v2351, %v2346
  %v2792 = vpack.c.b16 %v2352, %v2347
  %v2793 = vpack.c.b16 %v2353, %v2348
  %v2794 = vpack.c.b16 %v2354, %v2349
  %v2795 = vpack.c.b16 %v2355, %v2350
  %v2796 = vpack.c.b16 %v2361, %v2356
  %v2797 = vpack.c.b16 %v2362, %v2357
  %v2798 = vpack.c.b16 %v2363, %v2358
  %v2799 = vpack.c.b16 %v2364, %v2359
  %v2800 = vpack.c.b16 %v2365, %v2360
  %v2801 = vpack.c.b16 %v2371, %v2366
  %v2802 = vpack.c.b16 %v2372, %v2367
  %v2803 = vpack.c.b16 %v2373, %v2368
  %v2804 = vpack.c.b16 %v2374, %v2369
  %v2805 = vpack.c.b16 %v2375, %v2370
  %v2806 = vpack.c.b16 %v2381, %v2376
  %v2807 = vpack.c.b16 %v2382, %v2377
  %v2808 = vpack.c.b16 %v2383, %v2378
  %v2809 = vpack.c.b16 %v2384, %v2379
  %v2810 = vpack.c.b16 %v2385, %v2380
  %v2811 = vpack.c.b16 %v2391, %v2386
  %v2812 = vpack.c.b16 %v2392, %v2387
  %v2813 = vpack.c.b16 %v2393, %v2388
  %v2814 = vpack.c.b16 %v2394, %v2389
  %v2815 = vpack.c.b16 %v2395, %v2390
  %v2816 = vpack.c.b16 %v2401, %v2396
  %v2817 = vpack.c.b16 %v2402, %v2397
  %v2818 = vpack.c.b16 %v2403, %v2398
  %v2819 = vpack.c.b16 %v2404, %v2399
  %v2820 = vpack.c.b16 %v2405, %v2400
  %v2821 = vpack.c.b16 %v2411, %v2406
  %v2822 = vpack.c.b16 %v2412, %v2407
  %v2823 = vpack.c.b16 %v2413, %v2408
  %v2824 = vpack.c.b16 %v2414, %v2409
  %v2825 = vpack.c.b16 %v2415, %v2410
  %v2826 = vpack.c.b16 %v2421, %v2416
  %v2827 = vpack.c.b16 %v2422, %v2417
  %v2828 = vpack.c.b16 %v2423, %v2418
  %v2829 = vpack.c.b16 %v2424, %v2419
  %v2830 = vpack.c.b16 %v2425, %v2420
  %v2831 = vpack.c.b16 %v2431, %v2426
  %v2832 = vpack.c.b16 %v2432, %v2427
  %v2833 = vpack.c.b16 %v2433, %v2428
  %v2834 = vpack.c.b16 %v2434, %v2429
  %v2835 = vpack.c.b16 %v2435, %v2430
  %v2836 = vpack.c.b16 %v2441, %v2436
  %v2837 = vpack.c.b16 %v2442, %v2437
  %v2838 = vpack.c.b16 %v2443, %v2438
  %v2839 = vpack.c.b16 %v2444, %v2439
  %v2840 = vpack.c.b16 %v2445, %v2440
  %v2841 = vpack.c.b16 %v2451, %v2446
  %v2842 = vpack.c.b16 %v2452, %v2447
  %v2843 = vpack.c.b16 %v2453, %v2448
  %v2844 = vpack.c.b16 %v2454, %v2449
  %v2845 = vpack.c.b16 %v2455, %v2450
  %v2846 = vpack.c.b16 %v2461, %v2456
  %v2847 = vpack.c.b16 %v2462, %v2457
  %v2848 = vpack.c.b16 %v2463, %v2458
  %v2849 = vpack.c.b16 %v2464, %v2459
  %v2850 = vpack.c.b16 %v2465, %v2460
  %v2851 = vpack.c.b16 %v2471, %v2466
  %v2852 = vpack.c.b16 %v2472, %v2467
  %v2853 = vpack.c.b16 %v2473, %v2468
  %v2854 = vpack.c.b16 %v2474, %v2469
  %v2855 = vpack.c.b16 %v2475, %v2470
  %v2856 = vpack.c.b16 %v2481, %v2476
  %v2857 = vpack.c.b16 %v2482, %v2477
  %v2858 = vpack.c.b16 %v2483, %v2478
  %v2859 = vpack.c.b16 %v2484, %v2479
  %v2860 = vpack.c.b16 %v2485, %v2480
  %v2861 = vpack.c.b16 %v2491, %v2486
  %v2862 = vpack.c.b16 %v2492, %v2487
  %v2863 = vpack.c.b16 %v2493, %v2488
  %v2864 = vpack.c.b16 %v2494, %v2489
  %v2865 = vpack.c.b16 %v2495, %v2490
  %v2866 = vpack.c.b16 %v2501, %v2496
  %v2867 = vpack.c.b16 %v2502, %v2497
  %v2868 = vpack.c.b16 %v2503, %v2498
  %v2869 = vpack.c.b16 %v2504, %v2499
  %v2870 = vpack.c.b16 %v2505, %v2500
  %v2871 = vpack.c.b16 %v2511, %v2506
  %v2872 = vpack.c.b16 %v2512, %v2507
  %v2873 = vpack.c.b16 %v2513, %v2508
  %v2874 = vpack.c.b16 %v2514, %v2509
  %v2875 = vpack.c.b16 %v2515, %v2510
  %v2876 = vpack.c.b16 %v2521, %v2516
  %v2877 = vpack.c.b16 %v2522, %v2517
  %v2878 = vpack.c.b16 %v2523, %v2518
  %v2879 = vpack.c.b16 %v2524, %v2519
  %v2880 = vpack.c.b16 %v2525, %v2520
  %v2881 = vpack.c.b16 %v2531, %v2526
  %v2882 = vpack.c.b16 %v2532, %v2527
  %v2883 = vpack.c.b16 %v2533, %v2528
  %v2884 = vpack.c.b16 %v2534, %v2529
  %v2885 = vpack.c.b16 %v2535, %v2530
  %v2886 = vpack.c.b16 %v2541, %v2536
  %v2887 = vpack.c.b16 %v2542, %v2537
  %v2888 = vpack.c.b16 %v2543, %v2538
  %v2889 = vpack.c.b16 %v2544, %v2539
  %v2890 = vpack.c.b16 %v2545, %v2540
  %v2891 = vpack.c.b16 %v2551, %v2546
  %v2892 = vpack.c.b16 %v2552, %v2547
  %v2893 = vpack.c.b16 %v2553, %v2548
  %v2894 = vpack.c.b16 %v2554, %v2549
  %v2895 = vpack.c.b16 %v2555, %v2550
  %v2896 = vpack.c.b16 %v2556, %v2556
  %v2897 = vpack.c.b16 %v2557, %v2557
  %v2898 = vpack.c.b16 %v2558, %v2558
  %v2899 = vpack.c.b16 %v2559, %v2559
  %v2900 = vpack.c.b16 %v2560, %v2560
  %vm3236 = vcmask 457728
  %v3238 = vsel %vm3236, %v1063, 0
  %v3241 = vsel %vm784, %v2896, 0
  %v3244 = vsel %vm784, %v2897, 0
  %v3247 = vsel %vm784, %v2898, 0
  %v3250 = vsel %vm784, %v2899, 0
  %v3253 = vsel %vm784, %v2900, 0
  %3255 = vmatpush.bf16.msra.mxu0 %v2596
  %3256 = vmatpush.bf16.msra.mxu0 %v2591
  %3257 = vmatpush.bf16.msra.mxu0 %v2586
  %3258 = vmatpush.bf16.msra.mxu0 %v2581
  %3259 = vmatpush.bf16.msra.mxu0 %v2576
  %3260 = vmatpush.bf16.msra.mxu0 %v2571
  %3261 = vmatpush.bf16.msra.mxu0 %v2566
  %3262 = vmatpush.bf16.msra.mxu0 %v2561
  %3263 = vmatmul.bf16.gmra.mxu0 %v1055
  %v3264 = vpop.f32.mrf.mxu0
  %v3265 = vadd.f32 %v1471, %v3264
  %v3266 = vpop.f32.mrf.mxu0
  %3267 = vdwg.mxu0
  %3268 = vmatpush.bf16.msra.mxu0 %v2636
  %3269 = vmatpush.bf16.msra.mxu0 %v2631
  %3270 = vmatpush.bf16.msra.mxu0 %v2626
  %3271 = vmatpush.bf16.msra.mxu0 %v2621
  %3272 = vmatpush.bf16.msra.mxu0 %v2616
  %3273 = vmatpush.bf16.msra.mxu0 %v2611
  %3274 = vmatpush.bf16.msra.mxu0 %v2606
  %3275 = vmatpush.bf16.msra.mxu0 %v2601
  %3276 = vmatmul.bf16.gmra.mxu0 %v1056
  %v3277 = vpop.f32.mrf.mxu0
  %v3278 = vadd.f32 %v3265, %v3277
  %v3279 = vpop.f32.mrf.mxu0
  %3280 = vdwg.mxu0
  %3281 = vmatpush.bf16.msra.mxu0 %v2676
  %3282 = vmatpush.bf16.msra.mxu0 %v2671
  %3283 = vmatpush.bf16.msra.mxu0 %v2666
  %3284 = vmatpush.bf16.msra.mxu0 %v2661
  %3285 = vmatpush.bf16.msra.mxu0 %v2656
  %3286 = vmatpush.bf16.msra.mxu0 %v2651
  %3287 = vmatpush.bf16.msra.mxu0 %v2646
  %3288 = vmatpush.bf16.msra.mxu0 %v2641
  %3289 = vmatmul.bf16.gmra.mxu0 %v1057
  %v3290 = vpop.f32.mrf.mxu0
  %v3291 = vadd.f32 %v3278, %v3290
  %v3292 = vpop.f32.mrf.mxu0
  %3293 = vdwg.mxu0
  %3294 = vmatpush.bf16.msra.mxu0 %v2716
  %3295 = vmatpush.bf16.msra.mxu0 %v2711
  %3296 = vmatpush.bf16.msra.mxu0 %v2706
  %3297 = vmatpush.bf16.msra.mxu0 %v2701
  %3298 = vmatpush.bf16.msra.mxu0 %v2696
  %3299 = vmatpush.bf16.msra.mxu0 %v2691
  %3300 = vmatpush.bf16.msra.mxu0 %v2686
  %3301 = vmatpush.bf16.msra.mxu0 %v2681
  %3302 = vmatmul.bf16.gmra.mxu0 %v1058
  %v3303 = vpop.f32.mrf.mxu0
  %v3304 = vadd.f32 %v3291, %v3303
  %v3305 = vpop.f32.mrf.mxu0
  %3306 = vdwg.mxu0
  %3307 = vmatpush.bf16.msra.mxu0 %v2756
  %3308 = vmatpush.bf16.msra.mxu0 %v2751
  %3309 = vmatpush.bf16.msra.mxu0 %v2746
  %3310 = vmatpush.bf16.msra.mxu0 %v2741
  %3311 = vmatpush.bf16.msra.mxu0 %v2736
  %3312 = vmatpush.bf16.msra.mxu0 %v2731
  %3313 = vmatpush.bf16.msra.mxu0 %v2726
  %3314 = vmatpush.bf16.msra.mxu0 %v2721
  %3315 = vmatmul.bf16.gmra.mxu0 %v1059
  %v3316 = vpop.f32.mrf.mxu0
  %v3317 = vadd.f32 %v3304, %v3316
  %v3318 = vpop.f32.mrf.mxu0
  %3319 = vdwg.mxu0
  %3320 = vmatpush.bf16.msra.mxu0 %v2796
  %3321 = vmatpush.bf16.msra.mxu0 %v2791
  %3322 = vmatpush.bf16.msra.mxu0 %v2786
  %3323 = vmatpush.bf16.msra.mxu0 %v2781
  %3324 = vmatpush.bf16.msra.mxu0 %v2776
  %3325 = vmatpush.bf16.msra.mxu0 %v2771
  %3326 = vmatpush.bf16.msra.mxu0 %v2766
  %3327 = vmatpush.bf16.msra.mxu0 %v2761
  %3328 = vmatmul.bf16.gmra.mxu0 %v1060
  %v3329 = vpop.f32.mrf.mxu0
  %v3330 = vadd.f32 %v3317, %v3329
  %v3331 = vpop.f32.mrf.mxu0
  %3332 = vdwg.mxu0
  %3333 = vmatpush.bf16.msra.mxu0 %v2836
  %3334 = vmatpush.bf16.msra.mxu0 %v2831
  %3335 = vmatpush.bf16.msra.mxu0 %v2826
  %3336 = vmatpush.bf16.msra.mxu0 %v2821
  %3337 = vmatpush.bf16.msra.mxu0 %v2816
  %3338 = vmatpush.bf16.msra.mxu0 %v2811
  %3339 = vmatpush.bf16.msra.mxu0 %v2806
  %3340 = vmatpush.bf16.msra.mxu0 %v2801
  %3341 = vmatmul.bf16.gmra.mxu0 %v1061
  %v3342 = vpop.f32.mrf.mxu0
  %v3343 = vadd.f32 %v3330, %v3342
  %v3344 = vpop.f32.mrf.mxu0
  %3345 = vdwg.mxu0
  %3346 = vmatpush.bf16.msra.mxu0 %v2876
  %3347 = vmatpush.bf16.msra.mxu0 %v2871
  %3348 = vmatpush.bf16.msra.mxu0 %v2866
  %3349 = vmatpush.bf16.msra.mxu0 %v2861
  %3350 = vmatpush.bf16.msra.mxu0 %v2856
  %3351 = vmatpush.bf16.msra.mxu0 %v2851
  %3352 = vmatpush.bf16.msra.mxu0 %v2846
  %3353 = vmatpush.bf16.msra.mxu0 %v2841
  %3354 = vmatmul.bf16.gmra.mxu0 %v1062
  %v3355 = vpop.f32.mrf.mxu0
  %v3356 = vadd.f32 %v3343, %v3355
  %v3357 = vpop.f32.mrf.mxu0
  %3358 = vdwg.mxu0
  %3359 = vmatpush.bf16.msra.mxu0 0
  %3360 = vmatpush.bf16.msra.mxu0 0
  %3361 = vmatpush.bf16.msra.mxu0 0
  %3362 = vmatpush.bf16.msra.mxu0 0
  %3363 = vmatpush.bf16.msra.mxu0 %v3241
  %3364 = vmatpush.bf16.msra.mxu0 %v2891
  %3365 = vmatpush.bf16.msra.mxu0 %v2886
  %3366 = vmatpush.bf16.msra.mxu0 %v2881
  %3367 = vmatmul.bf16.gmra.mxu0 %v3238
  %v3368 = vpop.f32.mrf.mxu0
  %v3369 = vadd.f32 %v3356, %v3368
  %v3370 = vpop.f32.mrf.mxu0
  %3371 = vdwg.mxu0
  %3372 = vmatpush.bf16.msra.mxu0 %v2597
  %3373 = vmatpush.bf16.msra.mxu0 %v2592
  %3374 = vmatpush.bf16.msra.mxu0 %v2587
  %3375 = vmatpush.bf16.msra.mxu0 %v2582
  %3376 = vmatpush.bf16.msra.mxu0 %v2577
  %3377 = vmatpush.bf16.msra.mxu0 %v2572
  %3378 = vmatpush.bf16.msra.mxu0 %v2567
  %3379 = vmatpush.bf16.msra.mxu0 %v2562
  %3380 = vmatmul.bf16.gmra.mxu0 %v1055
  %v3381 = vpop.f32.mrf.mxu0
  %v3382 = vadd.f32 %v1472, %v3381
  %v3383 = vpop.f32.mrf.mxu0
  %3384 = vdwg.mxu0
  %3385 = vmatpush.bf16.msra.mxu0 %v2637
  %3386 = vmatpush.bf16.msra.mxu0 %v2632
  %3387 = vmatpush.bf16.msra.mxu0 %v2627
  %3388 = vmatpush.bf16.msra.mxu0 %v2622
  %3389 = vmatpush.bf16.msra.mxu0 %v2617
  %3390 = vmatpush.bf16.msra.mxu0 %v2612
  %3391 = vmatpush.bf16.msra.mxu0 %v2607
  %3392 = vmatpush.bf16.msra.mxu0 %v2602
  %3393 = vmatmul.bf16.gmra.mxu0 %v1056
  %v3394 = vpop.f32.mrf.mxu0
  %v3395 = vadd.f32 %v3382, %v3394
  %v3396 = vpop.f32.mrf.mxu0
  %3397 = vdwg.mxu0
  %3398 = vmatpush.bf16.msra.mxu0 %v2677
  %3399 = vmatpush.bf16.msra.mxu0 %v2672
  %3400 = vmatpush.bf16.msra.mxu0 %v2667
  %3401 = vmatpush.bf16.msra.mxu0 %v2662
  %3402 = vmatpush.bf16.msra.mxu0 %v2657
  %3403 = vmatpush.bf16.msra.mxu0 %v2652
  %3404 = vmatpush.bf16.msra.mxu0 %v2647
  %3405 = vmatpush.bf16.msra.mxu0 %v2642
  %3406 = vmatmul.bf16.gmra.mxu0 %v1057
  %v3407 = vpop.f32.mrf.mxu0
  %v3408 = vadd.f32 %v3395, %v3407
  %v3409 = vpop.f32.mrf.mxu0
  %3410 = vdwg.mxu0
  %3411 = vmatpush.bf16.msra.mxu0 %v2717
  %3412 = vmatpush.bf16.msra.mxu0 %v2712
  %3413 = vmatpush.bf16.msra.mxu0 %v2707
  %3414 = vmatpush.bf16.msra.mxu0 %v2702
  %3415 = vmatpush.bf16.msra.mxu0 %v2697
  %3416 = vmatpush.bf16.msra.mxu0 %v2692
  %3417 = vmatpush.bf16.msra.mxu0 %v2687
  %3418 = vmatpush.bf16.msra.mxu0 %v2682
  %3419 = vmatmul.bf16.gmra.mxu0 %v1058
  %v3420 = vpop.f32.mrf.mxu0
  %v3421 = vadd.f32 %v3408, %v3420
  %v3422 = vpop.f32.mrf.mxu0
  %3423 = vdwg.mxu0
  %3424 = vmatpush.bf16.msra.mxu0 %v2757
  %3425 = vmatpush.bf16.msra.mxu0 %v2752
  %3426 = vmatpush.bf16.msra.mxu0 %v2747
  %3427 = vmatpush.bf16.msra.mxu0 %v2742
  %3428 = vmatpush.bf16.msra.mxu0 %v2737
  %3429 = vmatpush.bf16.msra.mxu0 %v2732
  %3430 = vmatpush.bf16.msra.mxu0 %v2727
  %3431 = vmatpush.bf16.msra.mxu0 %v2722
  %3432 = vmatmul.bf16.gmra.mxu0 %v1059
  %v3433 = vpop.f32.mrf.mxu0
  %v3434 = vadd.f32 %v3421, %v3433
  %v3435 = vpop.f32.mrf.mxu0
  %3436 = vdwg.mxu0
  %3437 = vmatpush.bf16.msra.mxu0 %v2797
  %3438 = vmatpush.bf16.msra.mxu0 %v2792
  %3439 = vmatpush.bf16.msra.mxu0 %v2787
  %3440 = vmatpush.bf16.msra.mxu0 %v2782
  %3441 = vmatpush.bf16.msra.mxu0 %v2777
  %3442 = vmatpush.bf16.msra.mxu0 %v2772
  %3443 = vmatpush.bf16.msra.mxu0 %v2767
  %3444 = vmatpush.bf16.msra.mxu0 %v2762
  %3445 = vmatmul.bf16.gmra.mxu0 %v1060
  %v3446 = vpop.f32.mrf.mxu0
  %v3447 = vadd.f32 %v3434, %v3446
  %v3448 = vpop.f32.mrf.mxu0
  %3449 = vdwg.mxu0
  %3450 = vmatpush.bf16.msra.mxu0 %v2837
  %3451 = vmatpush.bf16.msra.mxu0 %v2832
  %3452 = vmatpush.bf16.msra.mxu0 %v2827
  %3453 = vmatpush.bf16.msra.mxu0 %v2822
  %3454 = vmatpush.bf16.msra.mxu0 %v2817
  %3455 = vmatpush.bf16.msra.mxu0 %v2812
  %3456 = vmatpush.bf16.msra.mxu0 %v2807
  %3457 = vmatpush.bf16.msra.mxu0 %v2802
  %3458 = vmatmul.bf16.gmra.mxu0 %v1061
  %v3459 = vpop.f32.mrf.mxu0
  %v3460 = vadd.f32 %v3447, %v3459
  %v3461 = vpop.f32.mrf.mxu0
  %3462 = vdwg.mxu0
  %3463 = vmatpush.bf16.msra.mxu0 %v2877
  %3464 = vmatpush.bf16.msra.mxu0 %v2872
  %3465 = vmatpush.bf16.msra.mxu0 %v2867
  %3466 = vmatpush.bf16.msra.mxu0 %v2862
  %3467 = vmatpush.bf16.msra.mxu0 %v2857
  %3468 = vmatpush.bf16.msra.mxu0 %v2852
  %3469 = vmatpush.bf16.msra.mxu0 %v2847
  %3470 = vmatpush.bf16.msra.mxu0 %v2842
  %3471 = vmatmul.bf16.gmra.mxu0 %v1062
  %v3472 = vpop.f32.mrf.mxu0
  %v3473 = vadd.f32 %v3460, %v3472
  %v3474 = vpop.f32.mrf.mxu0
  %3475 = vdwg.mxu0
  %3476 = vmatpush.bf16.msra.mxu0 0
  %3477 = vmatpush.bf16.msra.mxu0 0
  %3478 = vmatpush.bf16.msra.mxu0 0
  %3479 = vmatpush.bf16.msra.mxu0 0
  %3480 = vmatpush.bf16.msra.mxu0 %v3244
  %3481 = vmatpush.bf16.msra.mxu0 %v2892
  %3482 = vmatpush.bf16.msra.mxu0 %v2887
  %3483 = vmatpush.bf16.msra.mxu0 %v2882
  %3484 = vmatmul.bf16.gmra.mxu0 %v3238
  %v3485 = vpop.f32.mrf.mxu0
  %v3486 = vadd.f32 %v3473, %v3485
  %v3487 = vpop.f32.mrf.mxu0
  %3488 = vdwg.mxu0
  %3489 = vmatpush.bf16.msra.mxu0 %v2598
  %3490 = vmatpush.bf16.msra.mxu0 %v2593
  %3491 = vmatpush.bf16.msra.mxu0 %v2588
  %3492 = vmatpush.bf16.msra.mxu0 %v2583
  %3493 = vmatpush.bf16.msra.mxu0 %v2578
  %3494 = vmatpush.bf16.msra.mxu0 %v2573
  %3495 = vmatpush.bf16.msra.mxu0 %v2568
  %3496 = vmatpush.bf16.msra.mxu0 %v2563
  %3497 = vmatmul.bf16.gmra.mxu0 %v1055
  %v3498 = vpop.f32.mrf.mxu0
  %v3499 = vadd.f32 %v1473, %v3498
  %v3500 = vpop.f32.mrf.mxu0
  %3501 = vdwg.mxu0
  %3502 = vmatpush.bf16.msra.mxu0 %v2638
  %3503 = vmatpush.bf16.msra.mxu0 %v2633
  %3504 = vmatpush.bf16.msra.mxu0 %v2628
  %3505 = vmatpush.bf16.msra.mxu0 %v2623
  %3506 = vmatpush.bf16.msra.mxu0 %v2618
  %3507 = vmatpush.bf16.msra.mxu0 %v2613
  %3508 = vmatpush.bf16.msra.mxu0 %v2608
  %3509 = vmatpush.bf16.msra.mxu0 %v2603
  %3510 = vmatmul.bf16.gmra.mxu0 %v1056
  %v3511 = vpop.f32.mrf.mxu0
  %v3512 = vadd.f32 %v3499, %v3511
  %v3513 = vpop.f32.mrf.mxu0
  %3514 = vdwg.mxu0
  %3515 = vmatpush.bf16.msra.mxu0 %v2678
  %3516 = vmatpush.bf16.msra.mxu0 %v2673
  %3517 = vmatpush.bf16.msra.mxu0 %v2668
  %3518 = vmatpush.bf16.msra.mxu0 %v2663
  %3519 = vmatpush.bf16.msra.mxu0 %v2658
  %3520 = vmatpush.bf16.msra.mxu0 %v2653
  %3521 = vmatpush.bf16.msra.mxu0 %v2648
  %3522 = vmatpush.bf16.msra.mxu0 %v2643
  %3523 = vmatmul.bf16.gmra.mxu0 %v1057
  %v3524 = vpop.f32.mrf.mxu0
  %v3525 = vadd.f32 %v3512, %v3524
  %v3526 = vpop.f32.mrf.mxu0
  %3527 = vdwg.mxu0
  %3528 = vmatpush.bf16.msra.mxu0 %v2718
  %3529 = vmatpush.bf16.msra.mxu0 %v2713
  %3530 = vmatpush.bf16.msra.mxu0 %v2708
  %3531 = vmatpush.bf16.msra.mxu0 %v2703
  %3532 = vmatpush.bf16.msra.mxu0 %v2698
  %3533 = vmatpush.bf16.msra.mxu0 %v2693
  %3534 = vmatpush.bf16.msra.mxu0 %v2688
  %3535 = vmatpush.bf16.msra.mxu0 %v2683
  %3536 = vmatmul.bf16.gmra.mxu0 %v1058
  %v3537 = vpop.f32.mrf.mxu0
  %v3538 = vadd.f32 %v3525, %v3537
  %v3539 = vpop.f32.mrf.mxu0
  %3540 = vdwg.mxu0
  %3541 = vmatpush.bf16.msra.mxu0 %v2758
  %3542 = vmatpush.bf16.msra.mxu0 %v2753
  %3543 = vmatpush.bf16.msra.mxu0 %v2748
  %3544 = vmatpush.bf16.msra.mxu0 %v2743
  %3545 = vmatpush.bf16.msra.mxu0 %v2738
  %3546 = vmatpush.bf16.msra.mxu0 %v2733
  %3547 = vmatpush.bf16.msra.mxu0 %v2728
  %3548 = vmatpush.bf16.msra.mxu0 %v2723
  %3549 = vmatmul.bf16.gmra.mxu0 %v1059
  %v3550 = vpop.f32.mrf.mxu0
  %v3551 = vadd.f32 %v3538, %v3550
  %v3552 = vpop.f32.mrf.mxu0
  %3553 = vdwg.mxu0
  %3554 = vmatpush.bf16.msra.mxu0 %v2798
  %3555 = vmatpush.bf16.msra.mxu0 %v2793
  %3556 = vmatpush.bf16.msra.mxu0 %v2788
  %3557 = vmatpush.bf16.msra.mxu0 %v2783
  %3558 = vmatpush.bf16.msra.mxu0 %v2778
  %3559 = vmatpush.bf16.msra.mxu0 %v2773
  %3560 = vmatpush.bf16.msra.mxu0 %v2768
  %3561 = vmatpush.bf16.msra.mxu0 %v2763
  %3562 = vmatmul.bf16.gmra.mxu0 %v1060
  %v3563 = vpop.f32.mrf.mxu0
  %v3564 = vadd.f32 %v3551, %v3563
  %v3565 = vpop.f32.mrf.mxu0
  %3566 = vdwg.mxu0
  %3567 = vmatpush.bf16.msra.mxu0 %v2838
  %3568 = vmatpush.bf16.msra.mxu0 %v2833
  %3569 = vmatpush.bf16.msra.mxu0 %v2828
  %3570 = vmatpush.bf16.msra.mxu0 %v2823
  %3571 = vmatpush.bf16.msra.mxu0 %v2818
  %3572 = vmatpush.bf16.msra.mxu0 %v2813
  %3573 = vmatpush.bf16.msra.mxu0 %v2808
  %3574 = vmatpush.bf16.msra.mxu0 %v2803
  %3575 = vmatmul.bf16.gmra.mxu0 %v1061
  %v3576 = vpop.f32.mrf.mxu0
  %v3577 = vadd.f32 %v3564, %v3576
  %v3578 = vpop.f32.mrf.mxu0
  %3579 = vdwg.mxu0
  %3580 = vmatpush.bf16.msra.mxu0 %v2878
  %3581 = vmatpush.bf16.msra.mxu0 %v2873
  %3582 = vmatpush.bf16.msra.mxu0 %v2868
  %3583 = vmatpush.bf16.msra.mxu0 %v2863
  %3584 = vmatpush.bf16.msra.mxu0 %v2858
  %3585 = vmatpush.bf16.msra.mxu0 %v2853
  %3586 = vmatpush.bf16.msra.mxu0 %v2848
  %3587 = vmatpush.bf16.msra.mxu0 %v2843
  %3588 = vmatmul.bf16.gmra.mxu0 %v1062
  %v3589 = vpop.f32.mrf.mxu0
  %v3590 = vadd.f32 %v3577, %v3589
  %v3591 = vpop.f32.mrf.mxu0
  %3592 = vdwg.mxu0
  %3593 = vmatpush.bf16.msra.mxu0 0
  %3594 = vmatpush.bf16.msra.mxu0 0
  %3595 = vmatpush.bf16.msra.mxu0 0
  %3596 = vmatpush.bf16.msra.mxu0 0
  %3597 = vmatpush.bf16.msra.mxu0 %v3247
  %3598 = vmatpush.bf16.msra.mxu0 %v2893
  %3599 = vmatpush.bf16.msra.mxu0 %v2888
  %3600 = vmatpush.bf16.msra.mxu0 %v2883
  %3601 = vmatmul.bf16.gmra.mxu0 %v3238
  %v3602 = vpop.f32.mrf.mxu0
  %v3603 = vadd.f32 %v3590, %v3602
  %v3604 = vpop.f32.mrf.mxu0
  %3605 = vdwg.mxu0
  %3606 = vmatpush.bf16.msra.mxu0 %v2599
  %3607 = vmatpush.bf16.msra.mxu0 %v2594
  %3608 = vmatpush.bf16.msra.mxu0 %v2589
  %3609 = vmatpush.bf16.msra.mxu0 %v2584
  %3610 = vmatpush.bf16.msra.mxu0 %v2579
  %3611 = vmatpush.bf16.msra.mxu0 %v2574
  %3612 = vmatpush.bf16.msra.mxu0 %v2569
  %3613 = vmatpush.bf16.msra.mxu0 %v2564
  %3614 = vmatmul.bf16.gmra.mxu0 %v1055
  %v3615 = vpop.f32.mrf.mxu0
  %v3616 = vadd.f32 %v1474, %v3615
  %v3617 = vpop.f32.mrf.mxu0
  %3618 = vdwg.mxu0
  %3619 = vmatpush.bf16.msra.mxu0 %v2639
  %3620 = vmatpush.bf16.msra.mxu0 %v2634
  %3621 = vmatpush.bf16.msra.mxu0 %v2629
  %3622 = vmatpush.bf16.msra.mxu0 %v2624
  %3623 = vmatpush.bf16.msra.mxu0 %v2619
  %3624 = vmatpush.bf16.msra.mxu0 %v2614
  %3625 = vmatpush.bf16.msra.mxu0 %v2609
  %3626 = vmatpush.bf16.msra.mxu0 %v2604
  %3627 = vmatmul.bf16.gmra.mxu0 %v1056
  %v3628 = vpop.f32.mrf.mxu0
  %v3629 = vadd.f32 %v3616, %v3628
  %v3630 = vpop.f32.mrf.mxu0
  %3631 = vdwg.mxu0
  %3632 = vmatpush.bf16.msra.mxu0 %v2679
  %3633 = vmatpush.bf16.msra.mxu0 %v2674
  %3634 = vmatpush.bf16.msra.mxu0 %v2669
  %3635 = vmatpush.bf16.msra.mxu0 %v2664
  %3636 = vmatpush.bf16.msra.mxu0 %v2659
  %3637 = vmatpush.bf16.msra.mxu0 %v2654
  %3638 = vmatpush.bf16.msra.mxu0 %v2649
  %3639 = vmatpush.bf16.msra.mxu0 %v2644
  %3640 = vmatmul.bf16.gmra.mxu0 %v1057
  %v3641 = vpop.f32.mrf.mxu0
  %v3642 = vadd.f32 %v3629, %v3641
  %v3643 = vpop.f32.mrf.mxu0
  %3644 = vdwg.mxu0
  %3645 = vmatpush.bf16.msra.mxu0 %v2719
  %3646 = vmatpush.bf16.msra.mxu0 %v2714
  %3647 = vmatpush.bf16.msra.mxu0 %v2709
  %3648 = vmatpush.bf16.msra.mxu0 %v2704
  %3649 = vmatpush.bf16.msra.mxu0 %v2699
  %3650 = vmatpush.bf16.msra.mxu0 %v2694
  %3651 = vmatpush.bf16.msra.mxu0 %v2689
  %3652 = vmatpush.bf16.msra.mxu0 %v2684
  %3653 = vmatmul.bf16.gmra.mxu0 %v1058
  %v3654 = vpop.f32.mrf.mxu0
  %v3655 = vadd.f32 %v3642, %v3654
  %v3656 = vpop.f32.mrf.mxu0
  %3657 = vdwg.mxu0
  %3658 = vmatpush.bf16.msra.mxu0 %v2759
  %3659 = vmatpush.bf16.msra.mxu0 %v2754
  %3660 = vmatpush.bf16.msra.mxu0 %v2749
  %3661 = vmatpush.bf16.msra.mxu0 %v2744
  %3662 = vmatpush.bf16.msra.mxu0 %v2739
  %3663 = vmatpush.bf16.msra.mxu0 %v2734
  %3664 = vmatpush.bf16.msra.mxu0 %v2729
  %3665 = vmatpush.bf16.msra.mxu0 %v2724
  %3666 = vmatmul.bf16.gmra.mxu0 %v1059
  %v3667 = vpop.f32.mrf.mxu0
  %v3668 = vadd.f32 %v3655, %v3667
  %v3669 = vpop.f32.mrf.mxu0
  %3670 = vdwg.mxu0
  %3671 = vmatpush.bf16.msra.mxu0 %v2799
  %3672 = vmatpush.bf16.msra.mxu0 %v2794
  %3673 = vmatpush.bf16.msra.mxu0 %v2789
  %3674 = vmatpush.bf16.msra.mxu0 %v2784
  %3675 = vmatpush.bf16.msra.mxu0 %v2779
  %3676 = vmatpush.bf16.msra.mxu0 %v2774
  %3677 = vmatpush.bf16.msra.mxu0 %v2769
  %3678 = vmatpush.bf16.msra.mxu0 %v2764
  %3679 = vmatmul.bf16.gmra.mxu0 %v1060
  %v3680 = vpop.f32.mrf.mxu0
  %v3681 = vadd.f32 %v3668, %v3680
  %v3682 = vpop.f32.mrf.mxu0
  %3683 = vdwg.mxu0
  %3684 = vmatpush.bf16.msra.mxu0 %v2839
  %3685 = vmatpush.bf16.msra.mxu0 %v2834
  %3686 = vmatpush.bf16.msra.mxu0 %v2829
  %3687 = vmatpush.bf16.msra.mxu0 %v2824
  %3688 = vmatpush.bf16.msra.mxu0 %v2819
  %3689 = vmatpush.bf16.msra.mxu0 %v2814
  %3690 = vmatpush.bf16.msra.mxu0 %v2809
  %3691 = vmatpush.bf16.msra.mxu0 %v2804
  %3692 = vmatmul.bf16.gmra.mxu0 %v1061
  %v3693 = vpop.f32.mrf.mxu0
  %v3694 = vadd.f32 %v3681, %v3693
  %v3695 = vpop.f32.mrf.mxu0
  %3696 = vdwg.mxu0
  %3697 = vmatpush.bf16.msra.mxu0 %v2879
  %3698 = vmatpush.bf16.msra.mxu0 %v2874
  %3699 = vmatpush.bf16.msra.mxu0 %v2869
  %3700 = vmatpush.bf16.msra.mxu0 %v2864
  %3701 = vmatpush.bf16.msra.mxu0 %v2859
  %3702 = vmatpush.bf16.msra.mxu0 %v2854
  %3703 = vmatpush.bf16.msra.mxu0 %v2849
  %3704 = vmatpush.bf16.msra.mxu0 %v2844
  %3705 = vmatmul.bf16.gmra.mxu0 %v1062
  %v3706 = vpop.f32.mrf.mxu0
  %v3707 = vadd.f32 %v3694, %v3706
  %v3708 = vpop.f32.mrf.mxu0
  %3709 = vdwg.mxu0
  %3710 = vmatpush.bf16.msra.mxu0 0
  %3711 = vmatpush.bf16.msra.mxu0 0
  %3712 = vmatpush.bf16.msra.mxu0 0
  %3713 = vmatpush.bf16.msra.mxu0 0
  %3714 = vmatpush.bf16.msra.mxu0 %v3250
  %3715 = vmatpush.bf16.msra.mxu0 %v2894
  %3716 = vmatpush.bf16.msra.mxu0 %v2889
  %3717 = vmatpush.bf16.msra.mxu0 %v2884
  %3718 = vmatmul.bf16.gmra.mxu0 %v3238
  %v3719 = vpop.f32.mrf.mxu0
  %v3720 = vadd.f32 %v3707, %v3719
  %v3721 = vpop.f32.mrf.mxu0
  %3722 = vdwg.mxu0
  %3723 = vmatpush.bf16.msra.mxu0 %v2600
  %3724 = vmatpush.bf16.msra.mxu0 %v2595
  %3725 = vmatpush.bf16.msra.mxu0 %v2590
  %3726 = vmatpush.bf16.msra.mxu0 %v2585
  %3727 = vmatpush.bf16.msra.mxu0 %v2580
  %3728 = vmatpush.bf16.msra.mxu0 %v2575
  %3729 = vmatpush.bf16.msra.mxu0 %v2570
  %3730 = vmatpush.bf16.msra.mxu0 %v2565
  %3731 = vmatmul.bf16.gmra.mxu0 %v1055
  %v3732 = vpop.f32.mrf.mxu0
  %v3733 = vadd.f32 %v1475, %v3732
  %v3734 = vpop.f32.mrf.mxu0
  %3735 = vdwg.mxu0
  %3736 = vmatpush.bf16.msra.mxu0 %v2640
  %3737 = vmatpush.bf16.msra.mxu0 %v2635
  %3738 = vmatpush.bf16.msra.mxu0 %v2630
  %3739 = vmatpush.bf16.msra.mxu0 %v2625
  %3740 = vmatpush.bf16.msra.mxu0 %v2620
  %3741 = vmatpush.bf16.msra.mxu0 %v2615
  %3742 = vmatpush.bf16.msra.mxu0 %v2610
  %3743 = vmatpush.bf16.msra.mxu0 %v2605
  %3744 = vmatmul.bf16.gmra.mxu0 %v1056
  %v3745 = vpop.f32.mrf.mxu0
  %v3746 = vadd.f32 %v3733, %v3745
  %v3747 = vpop.f32.mrf.mxu0
  %3748 = vdwg.mxu0
  %3749 = vmatpush.bf16.msra.mxu0 %v2680
  %3750 = vmatpush.bf16.msra.mxu0 %v2675
  %3751 = vmatpush.bf16.msra.mxu0 %v2670
  %3752 = vmatpush.bf16.msra.mxu0 %v2665
  %3753 = vmatpush.bf16.msra.mxu0 %v2660
  %3754 = vmatpush.bf16.msra.mxu0 %v2655
  %3755 = vmatpush.bf16.msra.mxu0 %v2650
  %3756 = vmatpush.bf16.msra.mxu0 %v2645
  %3757 = vmatmul.bf16.gmra.mxu0 %v1057
  %v3758 = vpop.f32.mrf.mxu0
  %v3759 = vadd.f32 %v3746, %v3758
  %v3760 = vpop.f32.mrf.mxu0
  %3761 = vdwg.mxu0
  %3762 = vmatpush.bf16.msra.mxu0 %v2720
  %3763 = vmatpush.bf16.msra.mxu0 %v2715
  %3764 = vmatpush.bf16.msra.mxu0 %v2710
  %3765 = vmatpush.bf16.msra.mxu0 %v2705
  %3766 = vmatpush.bf16.msra.mxu0 %v2700
  %3767 = vmatpush.bf16.msra.mxu0 %v2695
  %3768 = vmatpush.bf16.msra.mxu0 %v2690
  %3769 = vmatpush.bf16.msra.mxu0 %v2685
  %3770 = vmatmul.bf16.gmra.mxu0 %v1058
  %v3771 = vpop.f32.mrf.mxu0
  %v3772 = vadd.f32 %v3759, %v3771
  %v3773 = vpop.f32.mrf.mxu0
  %3774 = vdwg.mxu0
  %3775 = vmatpush.bf16.msra.mxu0 %v2760
  %3776 = vmatpush.bf16.msra.mxu0 %v2755
  %3777 = vmatpush.bf16.msra.mxu0 %v2750
  %3778 = vmatpush.bf16.msra.mxu0 %v2745
  %3779 = vmatpush.bf16.msra.mxu0 %v2740
  %3780 = vmatpush.bf16.msra.mxu0 %v2735
  %3781 = vmatpush.bf16.msra.mxu0 %v2730
  %3782 = vmatpush.bf16.msra.mxu0 %v2725
  %3783 = vmatmul.bf16.gmra.mxu0 %v1059
  %v3784 = vpop.f32.mrf.mxu0
  %v3785 = vadd.f32 %v3772, %v3784
  %v3786 = vpop.f32.mrf.mxu0
  %3787 = vdwg.mxu0
  %3788 = vmatpush.bf16.msra.mxu0 %v2800
  %3789 = vmatpush.bf16.msra.mxu0 %v2795
  %3790 = vmatpush.bf16.msra.mxu0 %v2790
  %3791 = vmatpush.bf16.msra.mxu0 %v2785
  %3792 = vmatpush.bf16.msra.mxu0 %v2780
  %3793 = vmatpush.bf16.msra.mxu0 %v2775
  %3794 = vmatpush.bf16.msra.mxu0 %v2770
  %3795 = vmatpush.bf16.msra.mxu0 %v2765
  %3796 = vmatmul.bf16.gmra.mxu0 %v1060
  %v3797 = vpop.f32.mrf.mxu0
  %v3798 = vadd.f32 %v3785, %v3797
  %v3799 = vpop.f32.mrf.mxu0
  %3800 = vdwg.mxu0
  %3801 = vmatpush.bf16.msra.mxu0 %v2840
  %3802 = vmatpush.bf16.msra.mxu0 %v2835
  %3803 = vmatpush.bf16.msra.mxu0 %v2830
  %3804 = vmatpush.bf16.msra.mxu0 %v2825
  %3805 = vmatpush.bf16.msra.mxu0 %v2820
  %3806 = vmatpush.bf16.msra.mxu0 %v2815
  %3807 = vmatpush.bf16.msra.mxu0 %v2810
  %3808 = vmatpush.bf16.msra.mxu0 %v2805
  %3809 = vmatmul.bf16.gmra.mxu0 %v1061
  %v3810 = vpop.f32.mrf.mxu0
  %v3811 = vadd.f32 %v3798, %v3810
  %v3812 = vpop.f32.mrf.mxu0
  %3813 = vdwg.mxu0
  %3814 = vmatpush.bf16.msra.mxu0 %v2880
  %3815 = vmatpush.bf16.msra.mxu0 %v2875
  %3816 = vmatpush.bf16.msra.mxu0 %v2870
  %3817 = vmatpush.bf16.msra.mxu0 %v2865
  %3818 = vmatpush.bf16.msra.mxu0 %v2860
  %3819 = vmatpush.bf16.msra.mxu0 %v2855
  %3820 = vmatpush.bf16.msra.mxu0 %v2850
  %3821 = vmatpush.bf16.msra.mxu0 %v2845
  %3822 = vmatmul.bf16.gmra.mxu0 %v1062
  %v3823 = vpop.f32.mrf.mxu0
  %v3824 = vadd.f32 %v3811, %v3823
  %v3825 = vpop.f32.mrf.mxu0
  %3826 = vdwg.mxu0
  %3827 = vmatpush.bf16.msra.mxu0 0
  %3828 = vmatpush.bf16.msra.mxu0 0
  %3829 = vmatpush.bf16.msra.mxu0 0
  %3830 = vmatpush.bf16.msra.mxu0 0
  %3831 = vmatpush.bf16.msra.mxu0 %v3253
  %3832 = vmatpush.bf16.msra.mxu0 %v2895
  %3833 = vmatpush.bf16.msra.mxu0 %v2890
  %3834 = vmatpush.bf16.msra.mxu0 %v2885
  %3835 = vmatmul.bf16.gmra.mxu0 %v3238
  %v3836 = vpop.f32.mrf.mxu0
  %v3837 = vadd.f32 %v3824, %v3836
  %v3838 = vpop.f32.mrf.mxu0
  %3839 = vdwg.mxu0
  %v3840 = vpack.c.bf16 %v3369, %v3369
  %v3841 = vpack.c.bf16 %v3486, %v3486
  %v3842 = vpack.c.bf16 %v3603, %v3603
  %v3843 = vpack.c.bf16 %v3720, %v3720
  %v3844 = vpack.c.bf16 %v3837, %v3837
  %v3845 = vld [vmem:[%s5] sm:$0xf]
  %v3846 = vld [vmem:[%s5 + $0x4] sm:$0xf]
  %v3847 = vld [vmem:[%s5 + $0x8] sm:$0xf]
  %v3848 = vld [vmem:[%s5 + $0xc] sm:$0xf]
  %v3849 = vld [vmem:[%s5 + $0x10] sm:$0xf]
  %v3850 = vld [vmem:[%s5 + $0x14] sm:$0xf]
  %v3851 = vld [vmem:[%s5 + $0x18] sm:$0xf]
  %v3852 = vld [vmem:[%s5 + $0x1c] sm:$0xf]
  %v3853 = vld [vmem:[%s5 + $0x20] sm:$0xf]
  %v3854 = vld [vmem:[%s5 + $0x24] sm:$0xf]
  %v3855 = vld [vmem:[%s5 + $0x28] sm:$0xf]
  %v3856 = vld [vmem:[%s5 + $0x2c] sm:$0xf]
  %v3857 = vld [vmem:[%s5 + $0x30] sm:$0xf]
  %v3858 = vld [vmem:[%s5 + $0x34] sm:$0xf]
  %v3859 = vld [vmem:[%s5 + $0x38] sm:$0xf]
  %v3860 = vld [vmem:[%s5 + $0x3c] sm:$0xf]
  %v3861 = vld [vmem:[%s5 + $0x40] sm:$0xf]
  %v3862 = vld [vmem:[%s5 + $0x44] sm:$0xf]
  %v3863 = vld [vmem:[%s5 + $0x48] sm:$0xf]
  %v3864 = vld [vmem:[%s5 + $0x4c] sm:$0xf]
  %v3865 = vld [vmem:[%s5 + $0x50] sm:$0xf]
  %v3866 = vld [vmem:[%s5 + $0x54] sm:$0xf]
  %v3867 = vld [vmem:[%s5 + $0x58] sm:$0xf]
  %v3868 = vld [vmem:[%s5 + $0x5c] sm:$0xf]
  %v3869 = vld [vmem:[%s5 + $0x60] sm:$0xf]
  %v3870 = vld [vmem:[%s5 + $0x64] sm:$0xf]
  %v3871 = vld [vmem:[%s5 + $0x68] sm:$0xf]
  %v3872 = vld [vmem:[%s5 + $0x6c] sm:$0xf]
  %v3873 = vld [vmem:[%s5 + $0x70] sm:$0xf]
  %v3874 = vld [vmem:[%s5 + $0x74] sm:$0xf]
  %v3875 = vld [vmem:[%s5 + $0x78] sm:$0xf]
  %v3876 = vld [vmem:[%s5 + $0x7c] sm:$0xf]
  %v3877 = vld [vmem:[%s5 + $0x80] sm:$0xf]
  %v3878 = vld [vmem:[%s5 + $0x84] sm:$0xf]
  %v3879 = vld [vmem:[%s5 + $0x88] sm:$0xf]
  %v3880 = vld [vmem:[%s5 + $0x8c] sm:$0xf]
  %v3881 = vld [vmem:[%s5 + $0x90] sm:$0xf]
  %v3882 = vld [vmem:[%s5 + $0x94] sm:$0xf]
  %v3883 = vld [vmem:[%s5 + $0x98] sm:$0xf]
  %v3884 = vld [vmem:[%s5 + $0x9c] sm:$0xf]
  %v3885 = vld [vmem:[%s5 + $0xa0] sm:$0xf]
  %v3886 = vld [vmem:[%s5 + $0xa4] sm:$0xf]
  %v3887 = vld [vmem:[%s5 + $0xa8] sm:$0xf]
  %v3888 = vld [vmem:[%s5 + $0xac] sm:$0xf]
  %v3889 = vld [vmem:[%s5 + $0xb0] sm:$0xf]
  %v3890 = vld [vmem:[%s5 + $0xb4] sm:$0xf]
  %v3891 = vld [vmem:[%s5 + $0xb8] sm:$0xf]
  %v3892 = vld [vmem:[%s5 + $0xbc] sm:$0xf]
  %v3893 = vld [vmem:[%s5 + $0xc0] sm:$0xf]
  %v3894 = vld [vmem:[%s5 + $0xc4] sm:$0xf]
  %v3895 = vld [vmem:[%s5 + $0xc8] sm:$0xf]
  %v3896 = vld [vmem:[%s5 + $0xcc] sm:$0xf]
  %v3897 = vld [vmem:[%s5 + $0xd0] sm:$0xf]
  %v3898 = vld [vmem:[%s5 + $0xd4] sm:$0xf]
  %v3899 = vld [vmem:[%s5 + $0xd8] sm:$0xf]
  %v3900 = vld [vmem:[%s5 + $0xdc] sm:$0xf]
  %v3901 = vld [vmem:[%s5 + $0xe0] sm:$0xf]
  %v3902 = vld [vmem:[%s5 + $0xe4] sm:$0xf]
  %v3903 = vld [vmem:[%s5 + $0xe8] sm:$0xf]
  %v3904 = vld [vmem:[%s5 + $0xec] sm:$0xf]
  %v3905 = vld [vmem:[%s5 + $0xf0] sm:$0xf]
  %v3906 = vld [vmem:[%s5 + $0xf4] sm:$0xf]
  %v3907 = vld [vmem:[%s5 + $0xf8] sm:$0xf]
  %v3908 = vld [vmem:[%s5 + $0xfc] sm:$0xf]
  %v3909 = vld [vmem:[%s5 + $0x100] sm:$0xf]
  %v3910 = vld [vmem:[%s5 + $0x104] sm:$0xf]
  %v3911 = vld [vmem:[%s5 + $0x108] sm:$0xf]
  %v3912 = vld [vmem:[%s5 + $0x10c] sm:$0x3]
  %v3913 = vld [vmem:[%s6] sm:$0x1]
  %v3915 = vperm.slane %v3913, 0
  %v3985 = vunpack.c.l.b16 %v3845
  %v3986 = vunpack.c.l.b16 %v3846
  %v3987 = vunpack.c.l.b16 %v3847
  %v3988 = vunpack.c.l.b16 %v3848
  %v3989 = vunpack.c.l.b16 %v3849
  %v3990 = vunpack.c.l.b16 %v3850
  %v3991 = vunpack.c.l.b16 %v3851
  %v3992 = vunpack.c.l.b16 %v3852
  %v3993 = vunpack.c.l.b16 %v3853
  %v3994 = vunpack.c.l.b16 %v3854
  %v3995 = vunpack.c.l.b16 %v3855
  %v3996 = vunpack.c.l.b16 %v3856
  %v3997 = vunpack.c.l.b16 %v3857
  %v3998 = vunpack.c.l.b16 %v3858
  %v3999 = vunpack.c.l.b16 %v3859
  %v4000 = vunpack.c.l.b16 %v3860
  %v4001 = vunpack.c.l.b16 %v3861
  %v4002 = vunpack.c.l.b16 %v3862
  %v4003 = vunpack.c.l.b16 %v3863
  %v4004 = vunpack.c.l.b16 %v3864
  %v4005 = vunpack.c.l.b16 %v3865
  %v4006 = vunpack.c.l.b16 %v3866
  %v4007 = vunpack.c.l.b16 %v3867
  %v4008 = vunpack.c.l.b16 %v3868
  %v4009 = vunpack.c.l.b16 %v3869
  %v4010 = vunpack.c.l.b16 %v3870
  %v4011 = vunpack.c.l.b16 %v3871
  %v4012 = vunpack.c.l.b16 %v3872
  %v4013 = vunpack.c.l.b16 %v3873
  %v4014 = vunpack.c.l.b16 %v3874
  %v4015 = vunpack.c.l.b16 %v3875
  %v4016 = vunpack.c.l.b16 %v3876
  %v4017 = vunpack.c.l.b16 %v3877
  %v4018 = vunpack.c.l.b16 %v3878
  %v4019 = vunpack.c.l.b16 %v3879
  %v4020 = vunpack.c.l.b16 %v3880
  %v4021 = vunpack.c.l.b16 %v3881
  %v4022 = vunpack.c.l.b16 %v3882
  %v4023 = vunpack.c.l.b16 %v3883
  %v4024 = vunpack.c.l.b16 %v3884
  %v4025 = vunpack.c.l.b16 %v3885
  %v4026 = vunpack.c.l.b16 %v3886
  %v4027 = vunpack.c.l.b16 %v3887
  %v4028 = vunpack.c.l.b16 %v3888
  %v4029 = vunpack.c.l.b16 %v3889
  %v4030 = vunpack.c.l.b16 %v3890
  %v4031 = vunpack.c.l.b16 %v3891
  %v4032 = vunpack.c.l.b16 %v3892
  %v4033 = vunpack.c.l.b16 %v3893
  %v4034 = vunpack.c.l.b16 %v3894
  %v4035 = vunpack.c.l.b16 %v3895
  %v4036 = vunpack.c.l.b16 %v3896
  %v4037 = vunpack.c.l.b16 %v3897
  %v4038 = vunpack.c.l.b16 %v3898
  %v4039 = vunpack.c.l.b16 %v3899
  %v4040 = vunpack.c.l.b16 %v3900
  %v4041 = vunpack.c.l.b16 %v3901
  %v4042 = vunpack.c.l.b16 %v3902
  %v4043 = vunpack.c.l.b16 %v3903
  %v4044 = vunpack.c.l.b16 %v3904
  %v4045 = vunpack.c.l.b16 %v3905
  %v4046 = vunpack.c.l.b16 %v3906
  %v4047 = vunpack.c.l.b16 %v3907
  %v4048 = vunpack.c.l.b16 %v3908
  %v4049 = vunpack.c.l.b16 %v3909
  %v4050 = vunpack.c.l.b16 %v3910
  %v4051 = vunpack.c.l.b16 %v3911
  %v4052 = vunpack.c.l.b16 %v3912
  %v4053 = vpack.c.b16 %v3986, %v3985
  %v4054 = vpack.c.b16 %v3988, %v3987
  %v4055 = vpack.c.b16 %v3990, %v3989
  %v4056 = vpack.c.b16 %v3992, %v3991
  %v4057 = vpack.c.b16 %v3994, %v3993
  %v4058 = vpack.c.b16 %v3996, %v3995
  %v4059 = vpack.c.b16 %v3998, %v3997
  %v4060 = vpack.c.b16 %v4000, %v3999
  %v4061 = vpack.c.b16 %v4002, %v4001
  %v4062 = vpack.c.b16 %v4004, %v4003
  %v4063 = vpack.c.b16 %v4006, %v4005
  %v4064 = vpack.c.b16 %v4008, %v4007
  %v4065 = vpack.c.b16 %v4010, %v4009
  %v4066 = vpack.c.b16 %v4012, %v4011
  %v4067 = vpack.c.b16 %v4014, %v4013
  %v4068 = vpack.c.b16 %v4016, %v4015
  %v4069 = vpack.c.b16 %v4018, %v4017
  %v4070 = vpack.c.b16 %v4020, %v4019
  %v4071 = vpack.c.b16 %v4022, %v4021
  %v4072 = vpack.c.b16 %v4024, %v4023
  %v4073 = vpack.c.b16 %v4026, %v4025
  %v4074 = vpack.c.b16 %v4028, %v4027
  %v4075 = vpack.c.b16 %v4030, %v4029
  %v4076 = vpack.c.b16 %v4032, %v4031
  %v4077 = vpack.c.b16 %v4034, %v4033
  %v4078 = vpack.c.b16 %v4036, %v4035
  %v4079 = vpack.c.b16 %v4038, %v4037
  %v4080 = vpack.c.b16 %v4040, %v4039
  %v4081 = vpack.c.b16 %v4042, %v4041
  %v4082 = vpack.c.b16 %v4044, %v4043
  %v4083 = vpack.c.b16 %v4046, %v4045
  %v4084 = vpack.c.b16 %v4048, %v4047
  %v4085 = vpack.c.b16 %v4050, %v4049
  %v4086 = vpack.c.b16 %v4052, %v4051
  %vm4120 = vcmask 228352
  %v4122 = vsel %vm4120, %v3844, 0
  %vm4124 = vcmask 1045504
  %v4126 = vsel %vm4124, %v4086, 0
  %4128 = vmatpush.bf16.msra.mxu0 %v4060
  %4129 = vmatpush.bf16.msra.mxu0 %v4059
  %4130 = vmatpush.bf16.msra.mxu0 %v4058
  %4131 = vmatpush.bf16.msra.mxu0 %v4057
  %4132 = vmatpush.bf16.msra.mxu0 %v4056
  %4133 = vmatpush.bf16.msra.mxu0 %v4055
  %4134 = vmatpush.bf16.msra.mxu0 %v4054
  %4135 = vmatpush.bf16.msra.mxu0 %v4053
  %4136 = vmatmul.bf16.gmra.mxu0 %v3840
  %v4137 = vpop.f32.mrf.mxu0
  %v4138 = vadd.f32 %v3915, %v4137
  %v4139 = vpop.f32.mrf.mxu0
  %4140 = vdwg.mxu0
  %4141 = vmatpush.bf16.msra.mxu0 %v4068
  %4142 = vmatpush.bf16.msra.mxu0 %v4067
  %4143 = vmatpush.bf16.msra.mxu0 %v4066
  %4144 = vmatpush.bf16.msra.mxu0 %v4065
  %4145 = vmatpush.bf16.msra.mxu0 %v4064
  %4146 = vmatpush.bf16.msra.mxu0 %v4063
  %4147 = vmatpush.bf16.msra.mxu0 %v4062
  %4148 = vmatpush.bf16.msra.mxu0 %v4061
  %4149 = vmatmul.bf16.gmra.mxu0 %v3841
  %v4150 = vpop.f32.mrf.mxu0
  %v4151 = vadd.f32 %v4138, %v4150
  %v4152 = vpop.f32.mrf.mxu0
  %4153 = vdwg.mxu0
  %4154 = vmatpush.bf16.msra.mxu0 %v4076
  %4155 = vmatpush.bf16.msra.mxu0 %v4075
  %4156 = vmatpush.bf16.msra.mxu0 %v4074
  %4157 = vmatpush.bf16.msra.mxu0 %v4073
  %4158 = vmatpush.bf16.msra.mxu0 %v4072
  %4159 = vmatpush.bf16.msra.mxu0 %v4071
  %4160 = vmatpush.bf16.msra.mxu0 %v4070
  %4161 = vmatpush.bf16.msra.mxu0 %v4069
  %4162 = vmatmul.bf16.gmra.mxu0 %v3842
  %v4163 = vpop.f32.mrf.mxu0
  %v4164 = vadd.f32 %v4151, %v4163
  %v4165 = vpop.f32.mrf.mxu0
  %4166 = vdwg.mxu0
  %4167 = vmatpush.bf16.msra.mxu0 %v4084
  %4168 = vmatpush.bf16.msra.mxu0 %v4083
  %4169 = vmatpush.bf16.msra.mxu0 %v4082
  %4170 = vmatpush.bf16.msra.mxu0 %v4081
  %4171 = vmatpush.bf16.msra.mxu0 %v4080
  %4172 = vmatpush.bf16.msra.mxu0 %v4079
  %4173 = vmatpush.bf16.msra.mxu0 %v4078
  %4174 = vmatpush.bf16.msra.mxu0 %v4077
  %4175 = vmatmul.bf16.gmra.mxu0 %v3843
  %v4176 = vpop.f32.mrf.mxu0
  %v4177 = vadd.f32 %v4164, %v4176
  %v4178 = vpop.f32.mrf.mxu0
  %4179 = vdwg.mxu0
  %4180 = vmatpush.bf16.msra.mxu0 0
  %4181 = vmatpush.bf16.msra.mxu0 0
  %4182 = vmatpush.bf16.msra.mxu0 0
  %4183 = vmatpush.bf16.msra.mxu0 0
  %4184 = vmatpush.bf16.msra.mxu0 0
  %4185 = vmatpush.bf16.msra.mxu0 0
  %4186 = vmatpush.bf16.msra.mxu0 %v4126
  %4187 = vmatpush.bf16.msra.mxu0 %v4085
  %4188 = vmatmul.bf16.gmra.mxu0 %v4122
  %v4189 = vpop.f32.mrf.mxu0
  %v4190 = vadd.f32 %v4177, %v4189
  %v4191 = vpop.f32.mrf.mxu0
  %4192 = vdwg.mxu0
  %v4193 = vmax.f32 %v4190, 0.0
  %v4194 = vpack.c.bf16 %v4193, %v4193
  %v4195 = vld [vmem:[%s7] sm:$0xf]
  %v4196 = vld [vmem:[%s7 + $0x4] sm:$0xf]
  %v4197 = vld [vmem:[%s7 + $0x8] sm:$0xf]
  %v4198 = vld [vmem:[%s7 + $0xc] sm:$0xf]
  %v4199 = vld [vmem:[%s7 + $0x10] sm:$0xf]
  %v4200 = vld [vmem:[%s7 + $0x14] sm:$0xf]
  %v4201 = vld [vmem:[%s7 + $0x18] sm:$0xf]
  %v4202 = vld [vmem:[%s7 + $0x1c] sm:$0xf]
  %v4203 = vld [vmem:[%s7 + $0x20] sm:$0xf]
  %v4204 = vld [vmem:[%s7 + $0x24] sm:$0xf]
  %v4205 = vld [vmem:[%s7 + $0x28] sm:$0xf]
  %v4206 = vld [vmem:[%s7 + $0x2c] sm:$0xf]
  %v4207 = vld [vmem:[%s7 + $0x30] sm:$0xf]
  %v4208 = vld [vmem:[%s7 + $0x34] sm:$0x1]
  %v4209 = vld [vmem:[%s8] sm:$0x1]
  %v4211 = vperm.slane %v4209, 0
  %v4227 = vunpack.c.l.b16 %v4195
  %v4228 = vunpack.c.l.b16 %v4196
  %v4229 = vunpack.c.l.b16 %v4197
  %v4230 = vunpack.c.l.b16 %v4198
  %v4231 = vunpack.c.l.b16 %v4199
  %v4232 = vunpack.c.l.b16 %v4200
  %v4233 = vunpack.c.l.b16 %v4201
  %v4234 = vunpack.c.l.b16 %v4202
  %v4235 = vunpack.c.l.b16 %v4203
  %v4236 = vunpack.c.l.b16 %v4204
  %v4237 = vunpack.c.l.b16 %v4205
  %v4238 = vunpack.c.l.b16 %v4206
  %v4239 = vunpack.c.l.b16 %v4207
  %v4240 = vunpack.c.l.b16 %v4208
  %v4241 = vpack.c.b16 %v4228, %v4227
  %v4242 = vpack.c.b16 %v4230, %v4229
  %v4243 = vpack.c.b16 %v4232, %v4231
  %v4244 = vpack.c.b16 %v4234, %v4233
  %v4245 = vpack.c.b16 %v4236, %v4235
  %v4246 = vpack.c.b16 %v4238, %v4237
  %v4247 = vpack.c.b16 %v4240, %v4239
  %vm4254 = vcmask 859136
  %v4256 = vsel %vm4254, %v4194, 0
  %vm4258 = vcmask 1044480
  %v4259 = vsel %vm784, 4294967295, 65535
  %v4260 = vsel %vm4258, %v4259, 0
  %v4262 = vand.u32 %v4247, %v4260
  %4264 = vmatpush.bf16.msra.mxu0 0
  %4265 = vmatpush.bf16.msra.mxu0 %v4262
  %4266 = vmatpush.bf16.msra.mxu0 %v4246
  %4267 = vmatpush.bf16.msra.mxu0 %v4245
  %4268 = vmatpush.bf16.msra.mxu0 %v4244
  %4269 = vmatpush.bf16.msra.mxu0 %v4243
  %4270 = vmatpush.bf16.msra.mxu0 %v4242
  %4271 = vmatpush.bf16.msra.mxu0 %v4241
  %4272 = vmatmul.bf16.gmra.mxu0 %v4256
  %v4273 = vpop.f32.mrf.mxu0
  %v4274 = vadd.f32 %v4211, %v4273
  %v4275 = vpop.f32.mrf.mxu0
  %4276 = vdwg.mxu0
  %v4277 = vpack.c.bf16 %v4274, %v4274
  %v4278 = vld [vmem:[%s9] sm:$0xf]
  %v4279 = vld [vmem:[%s9 + $0x4] sm:$0xf]
  %v4280 = vld [vmem:[%s9 + $0x8] sm:$0xf]
  %v4281 = vld [vmem:[%s9 + $0xc] sm:$0xf]
  %v4282 = vld [vmem:[%s9 + $0x10] sm:$0xf]
  %v4283 = vld [vmem:[%s9 + $0x14] sm:$0xf]
  %v4284 = vld [vmem:[%s9 + $0x18] sm:$0xf]
  %v4285 = vld [vmem:[%s9 + $0x1c] sm:$0xf]
  %v4286 = vld [vmem:[%s9 + $0x20] sm:$0x7]
  %v4287 = vld [vmem:[%s10] sm:$0x1]
  %v4289 = vperm.slane %v4287, 0
  %v4300 = vunpack.c.l.b16 %v4278
  %v4301 = vunpack.c.l.b16 %v4279
  %v4302 = vunpack.c.l.b16 %v4280
  %v4303 = vunpack.c.l.b16 %v4281
  %v4304 = vunpack.c.l.b16 %v4282
  %v4305 = vunpack.c.l.b16 %v4283
  %v4306 = vunpack.c.l.b16 %v4284
  %v4307 = vunpack.c.l.b16 %v4285
  %v4308 = vunpack.c.l.b16 %v4286
  %v4309 = vpack.c.b16 %v4301, %v4300
  %v4310 = vpack.c.b16 %v4303, %v4302
  %v4311 = vpack.c.b16 %v4305, %v4304
  %v4312 = vpack.c.b16 %v4307, %v4306
  %v4313 = vpack.c.b16 %v4308, %v4308
  %vm4318 = vcmask 572416
  %v4320 = vsel %vm4318, %v4277, 0
  %vm4322 = vcmask 1042432
  %v4324 = vsel %vm4322, %v4313, 0
  %4326 = vmatpush.bf16.msra.mxu0 0
  %4327 = vmatpush.bf16.msra.mxu0 0
  %4328 = vmatpush.bf16.msra.mxu0 0
  %4329 = vmatpush.bf16.msra.mxu0 %v4324
  %4330 = vmatpush.bf16.msra.mxu0 %v4312
  %4331 = vmatpush.bf16.msra.mxu0 %v4311
  %4332 = vmatpush.bf16.msra.mxu0 %v4310
  %4333 = vmatpush.bf16.msra.mxu0 %v4309
  %4334 = vmatmul.bf16.gmra.mxu0 %v4320
  %v4335 = vpop.f32.mrf.mxu0
  %v4336 = vadd.f32 %v4289, %v4335
  %v4337 = vpop.f32.mrf.mxu0
  %4338 = vdwg.mxu0
  %v4339 = vmax.f32 %v4336, 0.0
  %v4340 = vpack.c.bf16 %v4339, %v4339
  %v4341 = vld [vmem:[%s11] sm:$0xf]
  %v4342 = vld [vmem:[%s11 + $0x4] sm:$0xf]
  %v4343 = vld [vmem:[%s11 + $0x8] sm:$0xf]
  %v4344 = vld [vmem:[%s11 + $0xc] sm:$0xf]
  %v4345 = vld [vmem:[%s11 + $0x10] sm:$0xf]
  %v4346 = vld [vmem:[%s11 + $0x14] sm:$0xf]
  %v4347 = vld [vmem:[%s11 + $0x18] sm:$0xf]
  %v4348 = vld [vmem:[%s11 + $0x1c] sm:$0xf]
  %v4349 = vld [vmem:[%s11 + $0x20] sm:$0x7]
  %v4350 = vld [vmem:[%s12] sm:$0x1]
  %v4352 = vperm.slane %v4350, 0
  %v4363 = vunpack.c.l.b16 %v4341
  %v4364 = vunpack.c.l.b16 %v4342
  %v4365 = vunpack.c.l.b16 %v4343
  %v4366 = vunpack.c.l.b16 %v4344
  %v4367 = vunpack.c.l.b16 %v4345
  %v4368 = vunpack.c.l.b16 %v4346
  %v4369 = vunpack.c.l.b16 %v4347
  %v4370 = vunpack.c.l.b16 %v4348
  %v4371 = vunpack.c.l.b16 %v4349
  %v4372 = vpack.c.b16 %v4364, %v4363
  %v4373 = vpack.c.b16 %v4366, %v4365
  %v4374 = vpack.c.b16 %v4368, %v4367
  %v4375 = vpack.c.b16 %v4370, %v4369
  %v4376 = vpack.c.b16 %v4371, %v4371
  %v4382 = vsel %vm4318, %v4340, 0
  %v4385 = vsel %vm4322, %v4376, 0
  %4387 = vmatpush.bf16.msra.mxu0 0
  %4388 = vmatpush.bf16.msra.mxu0 0
  %4389 = vmatpush.bf16.msra.mxu0 0
  %4390 = vmatpush.bf16.msra.mxu0 %v4385
  %4391 = vmatpush.bf16.msra.mxu0 %v4375
  %4392 = vmatpush.bf16.msra.mxu0 %v4374
  %4393 = vmatpush.bf16.msra.mxu0 %v4373
  %4394 = vmatpush.bf16.msra.mxu0 %v4372
  %4395 = vmatmul.bf16.gmra.mxu0 %v4382
  %v4396 = vpop.f32.mrf.mxu0
  %v4397 = vadd.f32 %v4352, %v4396
  %v4398 = vpop.f32.mrf.mxu0
  %4399 = vdwg.mxu0
  %v4400 = vmax.f32 %v4397, 0.0
  %v4401 = vpack.c.bf16 %v4400, %v4400
  %v4402 = vld [vmem:[%s13] sm:$0xf]
  %v4403 = vld [vmem:[%s13 + $0x4] sm:$0xf]
  %v4404 = vld [vmem:[%s13 + $0x8] sm:$0xf]
  %v4405 = vld [vmem:[%s13 + $0xc] sm:$0xf]
  %v4406 = vld [vmem:[%s13 + $0x10] sm:$0xf]
  %v4407 = vld [vmem:[%s13 + $0x14] sm:$0xf]
  %v4408 = vld [vmem:[%s13 + $0x18] sm:$0xf]
  %v4409 = vld [vmem:[%s13 + $0x1c] sm:$0xf]
  %v4410 = vld [vmem:[%s13 + $0x20] sm:$0x7]
  %v4411 = vld [vmem:[%s14] sm:$0x1]
  %v4413 = vperm.slane %v4411, 0
  %v4424 = vunpack.c.l.b16 %v4402
  %v4425 = vunpack.c.l.b16 %v4403
  %v4426 = vunpack.c.l.b16 %v4404
  %v4427 = vunpack.c.l.b16 %v4405
  %v4428 = vunpack.c.l.b16 %v4406
  %v4429 = vunpack.c.l.b16 %v4407
  %v4430 = vunpack.c.l.b16 %v4408
  %v4431 = vunpack.c.l.b16 %v4409
  %v4432 = vunpack.c.l.b16 %v4410
  %v4433 = vpack.c.b16 %v4425, %v4424
  %v4434 = vpack.c.b16 %v4427, %v4426
  %v4435 = vpack.c.b16 %v4429, %v4428
  %v4436 = vpack.c.b16 %v4431, %v4430
  %v4437 = vpack.c.b16 %v4432, %v4432
  %v4443 = vsel %vm4318, %v4401, 0
  %v4446 = vsel %vm4322, %v4437, 0
  %4448 = vmatpush.bf16.msra.mxu0 0
  %4449 = vmatpush.bf16.msra.mxu0 0
  %4450 = vmatpush.bf16.msra.mxu0 0
  %4451 = vmatpush.bf16.msra.mxu0 %v4446
  %4452 = vmatpush.bf16.msra.mxu0 %v4436
  %4453 = vmatpush.bf16.msra.mxu0 %v4435
  %4454 = vmatpush.bf16.msra.mxu0 %v4434
  %4455 = vmatpush.bf16.msra.mxu0 %v4433
  %4456 = vmatmul.bf16.gmra.mxu0 %v4443
  %v4457 = vpop.f32.mrf.mxu0
  %v4458 = vadd.f32 %v4413, %v4457
  %v4459 = vpop.f32.mrf.mxu0
  %4460 = vdwg.mxu0
  %4461 = vst [vmem:[%s15] sm:$0xff] %v4458
  // Predicated region
  $region62: #{hamida_forward.1} parent=0 // pred_check
    _
  $region63: #{hamida_forward.1} parent=0 // pred_check_branch
    %4463 = sbr.rel (0) target = $region65
  $region64: #{hamida_forward.1} parent=0 // pred_region
    _
  $region65: #{hamida_forward.1} parent=0 // pred_fallthru
    _
  // Predicated region
  $region66: #{hamida_forward.1} parent=0 // pred_check
    _
  $region67: #{hamida_forward.1} parent=0 // pred_check_branch
    %4465 = sbr.rel (0) target = $region69
  $region68: #{hamida_forward.1} parent=0 // pred_region
    _
  $region69: #{hamida_forward.1} parent=0 // pred_fallthru
    _

</llo_original>
